<compile_context>
chip_gen: v7x
topology: tpu7x:2x2x1
jax: 0.10.0
libtpu: 0.0.40
codegen_flags: <defaults>
</compile_context>

<pallas_src>
import functools

import jax
import jax.numpy as jnp
from jax.experimental import pallas as pl
from jax.experimental.pallas import tpu as pltpu


def _round_up(a, b):
    return (a + b - 1) // b * b


def _choose_tile_l(lout, cin, cout, k, stride, in_bytes, budget):
    """Largest Lout tile whose pipeline working set stays under `budget`."""

    def vmem_use(tile):
        lout_pad = _round_up(lout, tile)
        lp = (lout_pad - 1) * stride + k          # padded x row length
        return (2 * lp * cin * in_bytes           # x window (double-buffered)
                + k * cin * cout * in_bytes       # weight taps
                + 2 * tile * cout * 4             # output block (double-buffered)
                + 4 * tile * cout * 4             # f32 accumulator + temporaries
                + 2 * tile * cin * in_bytes       # tap slices
                + 64 * cout * 4)                  # stats / scale-shift blocks

    tile = min(_round_up(lout, 8), 2048)
    while tile > 8 and vmem_use(tile) > budget:
        tile = max(tile // 2, 8)
        tile = tile // 256 * 256 if tile >= 256 else _round_up(tile, 8)
    # TODO(synk): very long sequences with wide Cin can exceed the budget even
    # at tile==8 because the whole padded row stays resident; tile the L
    # window with a halo carry if that regime ever matters.
    return max(tile, 8)


def _load_window(x_ref, start, tile_l, k, stride):
    """Aligned dynamic-start load of the x rows needed by this output tile."""
    window = (tile_l - 1) * stride + k
    return x_ref[pl.ds(start, window), :]


def _conv_taps(xw, w_ref, tile_l, k, stride, precision):
    """In-kernel im2col: K static shifted taps, K accumulated MXU matmuls."""
    cout = w_ref.shape[-1]
    acc = jnp.zeros((tile_l, cout), jnp.float32)
    for j in range(k):                                  # static unroll
        if stride == 1:
            xs = xw[j:j + tile_l, :]
        else:
            xs = xw[j:j + (tile_l - 1) * stride + 1:stride, :]
        acc = acc + jnp.dot(xs, w_ref[j],
                            preferred_element_type=jnp.float32,
                            precision=precision)
    return acc


def _conv_stats_kernel(x_ref, w_ref, stats_ref, *, k, tile_l, stride, lout,
                       need_mask, precision):
    """Pass 1: per-tile partial sum / sum-of-squares of the conv output.

    Both grid axes are 'parallel' (no carried accumulator), so megacore /
    2-TC parts run both batch and L tiles concurrently; the tiny cross-tile
    reduction happens in XLA afterwards.
    """
    t = pl.program_id(1)
    start = pl.multiple_of(t * (tile_l * stride), 8)
    xw = _load_window(x_ref, start, tile_l, k, stride)
    acc = _conv_taps(xw, w_ref, tile_l, k, stride, precision)
    if need_mask:
        # Mask rows past Lout in the ragged last tile (they read real data
        # from the right halo, so they are not automatically zero).
        row = t * tile_l + jax.lax.broadcasted_iota(jnp.int32, (tile_l, 1), 0)
        acc = jnp.where(row < lout, acc, 0.0)
    stats_ref[0:1, :] = jnp.sum(acc, axis=0, keepdims=True)
    stats_ref[1:2, :] = jnp.sum(acc * acc, axis=0, keepdims=True)


def _conv_norm_act_kernel(x_ref, w_ref, ss_ref, o_ref, *, k, tile_l, stride,
                          padding, residual, precision):
    """Pass 2: recompute conv, out = relu(y*scale + shift (+ residual))."""
    t = pl.program_id(1)
    start = pl.multiple_of(t * (tile_l * stride), 8)
    xw = _load_window(x_ref, start, tile_l, k, stride)
    acc = _conv_taps(xw, w_ref, tile_l, k, stride, precision)
    out = acc * ss_ref[0:1, :] + ss_ref[1:2, :]
    if residual:
        # Residual taps the same VMEM-resident window (offset by `padding`
        # skips the conv's left zero pad) -- no extra HBM traffic.
        out = out + xw[padding:padding + tile_l, :].astype(jnp.float32)
    o_ref[...] = jnp.maximum(out, 0.0).astype(o_ref.dtype)


def conv1d_bn_relu(x, weight, bias, gamma, beta, *, stride=1, padding=1,
                   residual=False, eps=1e-5, compute_dtype=jnp.float32,
                   tile_l=None):
    """Fused Conv1d + BatchNorm1d(train) + optional residual + ReLU.

    x: (N, Cin, L); weight: (Cout, Cin, K); returns (N, Cout, Lout) float32.
    """
    del bias  # cancels exactly under training-mode BatchNorm (review item)
    n, cin, length = x.shape
    cout, cin_w, k = weight.shape
    assert cin == cin_w
    lout = (length + 2 * padding - k) // stride + 1
    m = n * lout
    in_bytes = jnp.dtype(compute_dtype).itemsize

    if residual:
        assert cin == cout and lout == length and stride == 1, \
            "residual requires cin == cout and unchanged length"

    # ---- generation-aware VMEM sizing ----
    try:
        vmem_cap = getattr(pltpu.get_tpu_info(), "vmem_capacity_bytes",
                           64 * 2**20)
    except Exception:
        vmem_cap = 64 * 2**20
    if vmem_cap >= 96 * 2**20:          # v5e / v6e: 128 MiB physical VMEM
        vmem_limit, budget = 64 * 2**20, 48 * 2**20
    else:                               # v7x: 64 MiB per TensorCore
        vmem_limit, budget = 32 * 2**20, 24 * 2**20

    if tile_l is None:
        tile_l = _choose_tile_l(lout, cin, cout, k, stride, in_bytes, budget)
    tile_l = max(_round_up(min(tile_l, _round_up(lout, 8)), 8), 8)
    num_t = (lout + tile_l - 1) // tile_l
    lout_pad = num_t * tile_l

    # ---- layout glue: channels-last x, zero-padded so every tap read of
    #      every (including ragged-tail) tile stays in bounds ----
    lp_pad = max(length + 2 * padding, (lout_pad - 1) * stride + k)
    xt = jnp.transpose(x, (0, 2, 1))                       # (N, L, Cin)
    xt = jnp.pad(xt, ((0, 0), (padding, lp_pad - length - padding), (0, 0)))
    xt = xt.astype(compute_dtype)
    w_taps = jnp.transpose(weight, (2, 1, 0)).astype(compute_dtype)  # (K,Cin,Cout)

    precision = (jax.lax.Precision.HIGHEST
                 if jnp.dtype(compute_dtype) == jnp.dtype(jnp.float32)
                 else jax.lax.Precision.DEFAULT)
    cparams = pltpu.CompilerParams(
        dimension_semantics=("parallel", "parallel"),
        vmem_limit_bytes=vmem_limit)
    grid = (n, num_t)

    def run(single_buffer_invariants):
        def inv_spec(shape, index_map):
            # Grid-invariant blocks do not need double buffering.
            if single_buffer_invariants:
                return pl.BlockSpec(shape, index_map,
                                    pipeline_mode=pl.Buffered(1))
            return pl.BlockSpec(shape, index_map)

        # ---- pass 1: conv on the MXU + per-tile partial BN statistics ----
        partial = pl.pallas_call(
            functools.partial(_conv_stats_kernel, k=k, tile_l=tile_l,
                              stride=stride, lout=lout,
                              need_mask=(lout_pad != lout),
                              precision=precision),
            out_shape=jax.ShapeDtypeStruct((n, num_t, 2, cout), jnp.float32),
            grid=grid,
            in_specs=[
                pl.BlockSpec((None, lp_pad, cin), lambda b, t: (b, 0, 0)),
                inv_spec((k, cin, cout), lambda b, t: (0, 0, 0)),
            ],
            out_specs=pl.BlockSpec((None, None, 2, cout),
                                   lambda b, t: (b, t, 0, 0)),
            compiler_params=cparams,
        )(xt, w_taps)

        # ---- finalize BN scale/shift (tiny, XLA) ----
        sums = jnp.sum(partial, axis=(0, 1))               # (2, Cout) f32
        mean = sums[0] / m
        # One-pass E[x^2]-E[x]^2 in f32; clamp guards tiny negative residue.
        var = jnp.maximum(sums[1] / m - mean * mean, 0.0)
        scale = gamma * jax.lax.rsqrt(var + eps)
        shift = beta - mean * scale
        scale_shift = jnp.stack([scale, shift], axis=0)     # (2, Cout)

        # ---- pass 2: recompute conv + scale/shift (+ residual) + ReLU ----
        return pl.pallas_call(
            functools.partial(_conv_norm_act_kernel, k=k, tile_l=tile_l,
                              stride=stride, padding=padding,
                              residual=residual, precision=precision),
            out_shape=jax.ShapeDtypeStruct((n, lout_pad, cout), jnp.float32),
            grid=grid,
            in_specs=[
                pl.BlockSpec((None, lp_pad, cin), lambda b, t: (b, 0, 0)),
                inv_spec((k, cin, cout), lambda b, t: (0, 0, 0)),
                inv_spec((2, cout), lambda b, t: (0, 0)),
            ],
            out_specs=pl.BlockSpec((None, tile_l, cout), lambda b, t: (b, t, 0)),
            compiler_params=cparams,
        )(xt, w_taps, scale_shift)

    try:
        out_pad = run(True)
    except Exception:
        # TODO(synk): drop this fallback once pl.Buffered(1) single-buffering
        # of invariant operands is confirmed on all target JAX versions.
        out_pad = run(False)

    # (N, Lout, Cout) -> (N, Cout, Lout)
    return jnp.transpose(out_pad[:, :lout, :], (0, 2, 1))


def _reference(x, weight, bias, gamma, beta, *, stride, padding, residual,
               eps=1e-5):
    y = jax.lax.conv_general_dilated(
        x, weight, (stride,), [(padding, padding)],
        dimension_numbers=("NCH", "OIH", "NCH"),
        precision=jax.lax.Precision.HIGHEST)
    y = y + bias[None, :, None]
    mean = jnp.mean(y, axis=(0, 2), keepdims=True)
    var = jnp.var(y, axis=(0, 2), keepdims=True)
    y = (y - mean) * jax.lax.rsqrt(var + eps)
    y = y * gamma[None, :, None] + beta[None, :, None]
    if residual:
        y = y + x
    return jnp.maximum(y, 0.0)


if __name__ == "__main__":
    key = jax.random.PRNGKey(0)

    # ---------- case 1: cin != cout, ragged L tiling ----------
    # tile_l=8 with Lout=18 -> 3 L-tiles per batch (last one ragged), so the
    # partial-stat path, the tail mask, and the parallel 2-axis grid are all
    # exercised.
    n, cin, cout, length, k, stride, padding = 2, 4, 8, 18, 3, 1, 1
    k1, k2, k3 = jax.random.split(key, 3)
    x = jax.random.normal(k1, (n, cin, length), jnp.float32)
    w = jax.random.normal(k2, (cout, cin, k), jnp.float32) / (cin * k) ** 0.5
    b = jax.random.normal(k3, (cout,), jnp.float32) * 0.1
    gamma = jnp.ones((cout,), jnp.float32)   # PyTorch BatchNorm1d default init
    beta = jnp.zeros((cout,), jnp.float32)

    out = conv1d_bn_relu(x, w, b, gamma, beta, stride=stride, padding=padding,
                         residual=False, tile_l=8)
    jax.block_until_ready(out)
    ref = _reference(x, w, b, gamma, beta, stride=stride, padding=padding,
                     residual=False)
    assert out.shape == (n, cout, length)
    assert jnp.allclose(out, ref, atol=1e-4, rtol=1e-4), \
        float(jnp.max(jnp.abs(out - ref)))

    # ---------- case 2: cin == cout, residual=True ----------
    cin2 = cout2 = 8
    length2 = 16
    k4, k5, k6 = jax.random.split(jax.random.PRNGKey(1), 3)
    x2 = jax.random.normal(k4, (n, cin2, length2), jnp.float32)
    w2 = jax.random.normal(k5, (cout2, cin2, k), jnp.float32) / (cin2 * k) ** 0.5
    b2 = jax.random.normal(k6, (cout2,), jnp.float32) * 0.1
    gamma2 = jnp.ones((cout2,), jnp.float32)
    beta2 = jnp.zeros((cout2,), jnp.float32)

    out2 = conv1d_bn_relu(x2, w2, b2, gamma2, beta2, stride=stride,
                          padding=padding, residual=True, tile_l=8)
    jax.block_until_ready(out2)
    ref2 = _reference(x2, w2, b2, gamma2, beta2, stride=stride,
                      padding=padding, residual=True)
    assert jnp.allclose(out2, ref2, atol=1e-4, rtol=1e-4), \
        float(jnp.max(jnp.abs(out2 - ref2)))

    # ---------- case 3: bf16 MXU inputs, f32 BN statistics ----------
    out3 = conv1d_bn_relu(x, w, b, gamma, beta, stride=stride, padding=padding,
                          residual=False, tile_l=8,
                          compute_dtype=jnp.bfloat16)
    jax.block_until_ready(out3)
    assert jnp.allclose(out3, ref, atol=5e-2, rtol=5e-2)

    print("KERNEL_OK")
</pallas_src>

<mosaic_0001>
module attributes {stable_mosaic.version = 11 : i64} {
  func.func @_conv_stats_kernel(%arg0: i32, %arg1: i32, %arg2: memref<1x26x4xf32, #tpu.memory_space<vmem>>, %arg3: memref<3x4x8xf32, #tpu.memory_space<vmem>>, %arg4: memref<1x1x2x8xf32, #tpu.memory_space<vmem>>) attributes {dimension_semantics = [#tpu.dimension_semantics<parallel>, #tpu.dimension_semantics<parallel>], iteration_bounds = array<i64: 2, 3>, scalar_prefetch = 0 : i64, scratch_operands = 0 : i64, tpu.core_type = #tpu.core_type<tc>, window_params = [{transform_indices = @transform_0, window_bounds = array<i64: 1, 26, 4>}, {pipeline_mode = #tpu.pipeline_mode<synchronous>, transform_indices = @transform_1, window_bounds = array<i64: 3, 4, 8>}, {transform_indices = @transform_2, window_bounds = array<i64: 1, 1, 2, 8>}]} {
    %c8_i32 = arith.constant 8 : i32
    %0 = arith.muli %arg1, %c8_i32 : i32
    %1 = tpu.assume_multiple %0, 8 : i32
    %c0 = arith.constant 0 : index
    %2 = arith.index_cast %1 : i32 to index
    %c0_0 = arith.constant 0 : index
    %3 = vector.load %arg2[%c0, %2, %c0_0] : memref<1x26x4xf32, #tpu.memory_space<vmem>>, vector<1x10x4xf32>
    %4 = vector.shape_cast %3 : vector<1x10x4xf32> to vector<10x4xf32>
    %cst = arith.constant 0.000000e+00 : f32
    %5 = vector.broadcast %cst : f32 to vector<8x8xf32>
    %6 = vector.extract_strided_slice %4 {offsets = [0, 0], sizes = [8, 4], strides = [1, 1]} : vector<10x4xf32> to vector<8x4xf32>
    %c0_1 = arith.constant 0 : index
    %c0_2 = arith.constant 0 : index
    %c0_3 = arith.constant 0 : index
    %7 = vector.load %arg3[%c0_1, %c0_2, %c0_3] : memref<3x4x8xf32, #tpu.memory_space<vmem>>, vector<1x4x8xf32>
    %8 = vector.shape_cast %7 : vector<1x4x8xf32> to vector<4x8xf32>
    %cst_4 = arith.constant dense<0.000000e+00> : vector<8x8xf32>
    %9 = tpu.matmul %6, %8, %cst_4 {dimension_numbers = #tpu.dot_dimension_numbers<[1], [0], [0], [1], [0, 0, 1, 1], [], []>, precision = #tpu.contract_precision<fp32>} : vector<8x4xf32>, vector<4x8xf32>, vector<8x8xf32> -> vector<8x8xf32>
    %10 = arith.addf %5, %9 : vector<8x8xf32>
    %11 = vector.extract_strided_slice %4 {offsets = [1, 0], sizes = [8, 4], strides = [1, 1]} : vector<10x4xf32> to vector<8x4xf32>
    %c1 = arith.constant 1 : index
    %c0_5 = arith.constant 0 : index
    %c0_6 = arith.constant 0 : index
    %12 = vector.load %arg3[%c1, %c0_5, %c0_6] : memref<3x4x8xf32, #tpu.memory_space<vmem>>, vector<1x4x8xf32>
    %13 = vector.shape_cast %12 : vector<1x4x8xf32> to vector<4x8xf32>
    %cst_7 = arith.constant dense<0.000000e+00> : vector<8x8xf32>
    %14 = tpu.matmul %11, %13, %cst_7 {dimension_numbers = #tpu.dot_dimension_numbers<[1], [0], [0], [1], [0, 0, 1, 1], [], []>, precision = #tpu.contract_precision<fp32>} : vector<8x4xf32>, vector<4x8xf32>, vector<8x8xf32> -> vector<8x8xf32>
    %15 = arith.addf %10, %14 : vector<8x8xf32>
    %16 = vector.extract_strided_slice %4 {offsets = [2, 0], sizes = [8, 4], strides = [1, 1]} : vector<10x4xf32> to vector<8x4xf32>
    %c2 = arith.constant 2 : index
    %c0_8 = arith.constant 0 : index
    %c0_9 = arith.constant 0 : index
    %17 = vector.load %arg3[%c2, %c0_8, %c0_9] : memref<3x4x8xf32, #tpu.memory_space<vmem>>, vector<1x4x8xf32>
    %18 = vector.shape_cast %17 : vector<1x4x8xf32> to vector<4x8xf32>
    %cst_10 = arith.constant dense<0.000000e+00> : vector<8x8xf32>
    %19 = tpu.matmul %16, %18, %cst_10 {dimension_numbers = #tpu.dot_dimension_numbers<[1], [0], [0], [1], [0, 0, 1, 1], [], []>, precision = #tpu.contract_precision<fp32>} : vector<8x4xf32>, vector<4x8xf32>, vector<8x8xf32> -> vector<8x8xf32>
    %20 = arith.addf %15, %19 : vector<8x8xf32>
    %c8_i32_11 = arith.constant 8 : i32
    %21 = arith.muli %arg1, %c8_i32_11 : i32
    %22 = tpu.iota {dimensions = array<i32: 0>} : vector<8x1xi32>
    %23 = vector.broadcast %21 : i32 to vector<8x1xi32>
    %24 = arith.addi %23, %22 : vector<8x1xi32>
    %c18_i32 = arith.constant 18 : i32
    %25 = vector.broadcast %c18_i32 : i32 to vector<8x1xi32>
    %26 = arith.cmpi slt, %24, %25 : vector<8x1xi32>
    %cst_12 = arith.constant 0.000000e+00 : f32
    %27 = vector.shape_cast %26 : vector<8x1xi1> to vector<8x1xi1>
    %28 = vector.broadcast %27 : vector<8x1xi1> to vector<8x8xi1>
    %29 = vector.broadcast %cst_12 : f32 to vector<8x8xf32>
    %30 = arith.select %28, %20, %29 : vector<8x8xi1>, vector<8x8xf32>
    %cst_13 = arith.constant dense<0.000000e+00> : vector<8xf32>
    %31 = vector.multi_reduction <add>, %30, %cst_13 [0] : vector<8x8xf32> to vector<8xf32>
    %32 = vector.shape_cast %31 : vector<8xf32> to vector<1x8xf32>
    %c0_14 = arith.constant 0 : index
    %c0_15 = arith.constant 0 : index
    %c0_16 = arith.constant 0 : index
    %c0_17 = arith.constant 0 : index
    %33 = vector.load %arg4[%c0_14, %c0_15, %c0_16, %c0_17] : memref<1x1x2x8xf32, #tpu.memory_space<vmem>>, vector<1x1x1x8xf32>
    %34 = vector.shape_cast %33 : vector<1x1x1x8xf32> to vector<1x8xf32>
    %35 = vector.shape_cast %32 : vector<1x8xf32> to vector<1x1x1x8xf32>
    tpu.vector_store %arg4[%c0_14, %c0_15, %c0_16, %c0_17], %35 {strides = array<i32>} : memref<1x1x2x8xf32, #tpu.memory_space<vmem>>, vector<1x1x1x8xf32>,
    %36 = arith.mulf %30, %30 : vector<8x8xf32>
    %cst_18 = arith.constant dense<0.000000e+00> : vector<8xf32>
    %37 = vector.multi_reduction <add>, %36, %cst_18 [0] : vector<8x8xf32> to vector<8xf32>
    %38 = vector.shape_cast %37 : vector<8xf32> to vector<1x8xf32>
    %c0_19 = arith.constant 0 : index
    %c0_20 = arith.constant 0 : index
    %c1_21 = arith.constant 1 : index
    %c0_22 = arith.constant 0 : index
    %39 = vector.load %arg4[%c0_19, %c0_20, %c1_21, %c0_22] : memref<1x1x2x8xf32, #tpu.memory_space<vmem>>, vector<1x1x1x8xf32>
    %40 = vector.shape_cast %39 : vector<1x1x1x8xf32> to vector<1x8xf32>
    %41 = vector.shape_cast %38 : vector<1x8xf32> to vector<1x1x1x8xf32>
    tpu.vector_store %arg4[%c0_19, %c0_20, %c1_21, %c0_22], %41 {strides = array<i32>} : memref<1x1x2x8xf32, #tpu.memory_space<vmem>>, vector<1x1x1x8xf32>,
    return
  }
  func.func @transform_0(%arg0: i32, %arg1: i32) -> (i32, i32, i32) {
    %c0_i32 = arith.constant 0 : i32
    %c0_i32_0 = arith.constant 0 : i32
    %c0_i32_1 = arith.constant 0 : i32
    return %arg0, %c0_i32, %c0_i32_0 : i32, i32, i32
  }
  func.func @transform_1(%arg0: i32, %arg1: i32) -> (i32, i32, i32) {
    %c0_i32 = arith.constant 0 : i32
    %c0_i32_0 = arith.constant 0 : i32
    %c0_i32_1 = arith.constant 0 : i32
    %c0_i32_2 = arith.constant 0 : i32
    return %c0_i32, %c0_i32_0, %c0_i32_1 : i32, i32, i32
  }
  func.func @transform_2(%arg0: i32, %arg1: i32) -> (i32, i32, i32, i32) {
    %c0_i32 = arith.constant 0 : i32
    %c0_i32_0 = arith.constant 0 : i32
    %c0_i32_1 = arith.constant 0 : i32
    return %arg0, %arg1, %c0_i32, %c0_i32_0 : i32, i32, i32, i32
  }
}

module attributes {stable_mosaic.version = 11 : i64} {
  func.func @_conv_stats_kernel(%arg0: i32, %arg1: i32, %arg2: memref<1x26x4xf32, #tpu.memory_space<vmem>>, %arg3: memref<3x4x8xf32, #tpu.memory_space<vmem>>, %arg4: memref<1x1x2x8xf32, #tpu.memory_space<vmem>>) attributes {dimension_semantics = [#tpu.dimension_semantics<parallel>, #tpu.dimension_semantics<parallel>], iteration_bounds = array<i64: 2, 3>, scalar_prefetch = 0 : i64, scratch_operands = 0 : i64, tpu.core_type = #tpu.core_type<tc>, window_params = [{transform_indices = @transform_0, window_bounds = array<i64: 1, 26, 4>}, {pipeline_mode = #tpu.pipeline_mode<synchronous>, transform_indices = @transform_1, window_bounds = array<i64: 3, 4, 8>}, {transform_indices = @transform_2, window_bounds = array<i64: 1, 1, 2, 8>}]} {
    %c8_i32 = arith.constant 8 : i32
    %0 = arith.muli %arg1, %c8_i32 : i32
    %1 = tpu.assume_multiple %0, 8 : i32
    %c0 = arith.constant 0 : index
    %2 = arith.index_cast %1 : i32 to index
    %c0_0 = arith.constant 0 : index
    %3 = vector.load %arg2[%c0, %2, %c0_0] : memref<1x26x4xf32, #tpu.memory_space<vmem>>, vector<1x10x4xf32>
    %4 = vector.shape_cast %3 : vector<1x10x4xf32> to vector<10x4xf32>
    %cst = arith.constant 0.000000e+00 : f32
    %5 = vector.broadcast %cst : f32 to vector<8x8xf32>
    %6 = vector.extract_strided_slice %4 {offsets = [0, 0], sizes = [8, 4], strides = [1, 1]} : vector<10x4xf32> to vector<8x4xf32>
    %c0_1 = arith.constant 0 : index
    %c0_2 = arith.constant 0 : index
    %c0_3 = arith.constant 0 : index
    %7 = vector.load %arg3[%c0_1, %c0_2, %c0_3] : memref<3x4x8xf32, #tpu.memory_space<vmem>>, vector<1x4x8xf32>
    %8 = vector.shape_cast %7 : vector<1x4x8xf32> to vector<4x8xf32>
    %cst_4 = arith.constant dense<0.000000e+00> : vector<8x8xf32>
    %9 = tpu.matmul %6, %8, %cst_4 {dimension_numbers = #tpu.dot_dimension_numbers<[1], [0], [0], [1], [0, 0, 1, 1], [], []>, precision = #tpu.contract_precision<fp32>} : vector<8x4xf32>, vector<4x8xf32>, vector<8x8xf32> -> vector<8x8xf32>
    %10 = arith.addf %5, %9 : vector<8x8xf32>
    %11 = vector.extract_strided_slice %4 {offsets = [1, 0], sizes = [8, 4], strides = [1, 1]} : vector<10x4xf32> to vector<8x4xf32>
    %c1 = arith.constant 1 : index
    %c0_5 = arith.constant 0 : index
    %c0_6 = arith.constant 0 : index
    %12 = vector.load %arg3[%c1, %c0_5, %c0_6] : memref<3x4x8xf32, #tpu.memory_space<vmem>>, vector<1x4x8xf32>
    %13 = vector.shape_cast %12 : vector<1x4x8xf32> to vector<4x8xf32>
    %cst_7 = arith.constant dense<0.000000e+00> : vector<8x8xf32>
    %14 = tpu.matmul %11, %13, %cst_7 {dimension_numbers = #tpu.dot_dimension_numbers<[1], [0], [0], [1], [0, 0, 1, 1], [], []>, precision = #tpu.contract_precision<fp32>} : vector<8x4xf32>, vector<4x8xf32>, vector<8x8xf32> -> vector<8x8xf32>
    %15 = arith.addf %10, %14 : vector<8x8xf32>
    %16 = vector.extract_strided_slice %4 {offsets = [2, 0], sizes = [8, 4], strides = [1, 1]} : vector<10x4xf32> to vector<8x4xf32>
    %c2 = arith.constant 2 : index
    %c0_8 = arith.constant 0 : index
    %c0_9 = arith.constant 0 : index
    %17 = vector.load %arg3[%c2, %c0_8, %c0_9] : memref<3x4x8xf32, #tpu.memory_space<vmem>>, vector<1x4x8xf32>
    %18 = vector.shape_cast %17 : vector<1x4x8xf32> to vector<4x8xf32>
    %cst_10 = arith.constant dense<0.000000e+00> : vector<8x8xf32>
    %19 = tpu.matmul %16, %18, %cst_10 {dimension_numbers = #tpu.dot_dimension_numbers<[1], [0], [0], [1], [0, 0, 1, 1], [], []>, precision = #tpu.contract_precision<fp32>} : vector<8x4xf32>, vector<4x8xf32>, vector<8x8xf32> -> vector<8x8xf32>
    %20 = arith.addf %15, %19 : vector<8x8xf32>
    %c8_i32_11 = arith.constant 8 : i32
    %21 = arith.muli %arg1, %c8_i32_11 : i32
    %22 = tpu.iota {dimensions = array<i32: 0>} : vector<8x1xi32>
    %23 = vector.broadcast %21 : i32 to vector<8x1xi32>
    %24 = arith.addi %23, %22 : vector<8x1xi32>
    %c18_i32 = arith.constant 18 : i32
    %25 = vector.broadcast %c18_i32 : i32 to vector<8x1xi32>
    %26 = arith.cmpi slt, %24, %25 : vector<8x1xi32>
    %cst_12 = arith.constant 0.000000e+00 : f32
    %27 = vector.shape_cast %26 : vector<8x1xi1> to vector<8x1xi1>
    %28 = vector.broadcast %27 : vector<8x1xi1> to vector<8x8xi1>
    %29 = vector.broadcast %cst_12 : f32 to vector<8x8xf32>
    %30 = arith.select %28, %20, %29 : vector<8x8xi1>, vector<8x8xf32>
    %cst_13 = arith.constant dense<0.000000e+00> : vector<8xf32>
    %31 = vector.multi_reduction <add>, %30, %cst_13 [0] : vector<8x8xf32> to vector<8xf32>
    %32 = vector.shape_cast %31 : vector<8xf32> to vector<1x8xf32>
    %c0_14 = arith.constant 0 : index
    %c0_15 = arith.constant 0 : index
    %c0_16 = arith.constant 0 : index
    %c0_17 = arith.constant 0 : index
    %33 = vector.load %arg4[%c0_14, %c0_15, %c0_16, %c0_17] : memref<1x1x2x8xf32, #tpu.memory_space<vmem>>, vector<1x1x1x8xf32>
    %34 = vector.shape_cast %33 : vector<1x1x1x8xf32> to vector<1x8xf32>
    %35 = vector.shape_cast %32 : vector<1x8xf32> to vector<1x1x1x8xf32>
    tpu.vector_store %arg4[%c0_14, %c0_15, %c0_16, %c0_17], %35 {strides = array<i32>} : memref<1x1x2x8xf32, #tpu.memory_space<vmem>>, vector<1x1x1x8xf32>,
    %36 = arith.mulf %30, %30 : vector<8x8xf32>
    %cst_18 = arith.constant dense<0.000000e+00> : vector<8xf32>
    %37 = vector.multi_reduction <add>, %36, %cst_18 [0] : vector<8x8xf32> to vector<8xf32>
    %38 = vector.shape_cast %37 : vector<8xf32> to vector<1x8xf32>
    %c0_19 = arith.constant 0 : index
    %c0_20 = arith.constant 0 : index
    %c1_21 = arith.constant 1 : index
    %c0_22 = arith.constant 0 : index
    %39 = vector.load %arg4[%c0_19, %c0_20, %c1_21, %c0_22] : memref<1x1x2x8xf32, #tpu.memory_space<vmem>>, vector<1x1x1x8xf32>
    %40 = vector.shape_cast %39 : vector<1x1x1x8xf32> to vector<1x8xf32>
    %41 = vector.shape_cast %38 : vector<1x8xf32> to vector<1x1x1x8xf32>
    tpu.vector_store %arg4[%c0_19, %c0_20, %c1_21, %c0_22], %41 {strides = array<i32>} : memref<1x1x2x8xf32, #tpu.memory_space<vmem>>, vector<1x1x1x8xf32>,
    return
  }
  func.func @transform_0(%arg0: i32, %arg1: i32) -> (i32, i32, i32) {
    %c0_i32 = arith.constant 0 : i32
    %c0_i32_0 = arith.constant 0 : i32
    %c0_i32_1 = arith.constant 0 : i32
    return %arg0, %c0_i32, %c0_i32_0 : i32, i32, i32
  }
  func.func @transform_1(%arg0: i32, %arg1: i32) -> (i32, i32, i32) {
    %c0_i32 = arith.constant 0 : i32
    %c0_i32_0 = arith.constant 0 : i32
    %c0_i32_1 = arith.constant 0 : i32
    %c0_i32_2 = arith.constant 0 : i32
    return %c0_i32, %c0_i32_0, %c0_i32_1 : i32, i32, i32
  }
  func.func @transform_2(%arg0: i32, %arg1: i32) -> (i32, i32, i32, i32) {
    %c0_i32 = arith.constant 0 : i32
    %c0_i32_0 = arith.constant 0 : i32
    %c0_i32_1 = arith.constant 0 : i32
    return %arg0, %arg1, %c0_i32, %c0_i32_0 : i32, i32, i32, i32
  }
}

</mosaic_0001>

<llo_original>
// kernel: tpu_custom_call.1
$region0: #{tpu_custom_call.1}
  #allocation0 [shape = 'u32[]', space=smem, size = 0x4, offset = 0x4, fixed_abs, tag = 'smem constant byte address 0x4 - core index']
  #allocation1 [shape = 'u32[144,128]{1,0:T(1,128)}', space=vmem, size = 0x12000, scoped, tag = 'internal scratch']
  %s0 = inlined_call_operand.vmem [shape: f32[2,26,4], index: 0, kind: input, shape index: {}]
  %s1 = inlined_call_operand.vmem [shape: f32[3,4,8], index: 1, kind: input, shape index: {}]
  %s2 = inlined_call_operand.hbm [shape: f32[2,3,2,8], index: 2, kind: output, shape index: {}]
  %s3 = sld [smem:[#allocation0]]
  $region41: #{tpu_custom_call.1} parent=0
    _
  %s5 = ssub.s32 1, %s3
  %s6 = scalar_select 0, %s5, %s3
  $region1: #{tpu_custom_call.1} parent=0
    #allocation2 [shape = 'u8[2048]{0}', space=vmem, size = 0x800, scoped, tag = 'output window, operand 0']
    #allocation3 [shape = 's32[2]{0}', space=sflag, size = 0x8, scoped, tag = 'scoped memory for tpu_custom_call.1']
    %7 = vsyncpa [#allocation3], 0
    %s8 = scalar_lea.sflag [#allocation3], 1
    %9 = vsyncpa %s8, 0
    loop: start=0, step=1, limit=8
    $region2: #{tpu_custom_call.1} parent=1 // loop_pre_header
      _
    $region3: #{tpu_custom_call.1} parent=1 // loop_header
      %s11 = sphi 0, %s15
      %p12 = scmp.ge.s32.totalorder %s11, 8
      %s18 = sphi 0, %s30
      %s19 = sphi 0, %s26
      %s20 = sphi 0, %s18
      %s21 = sphi 0, %s19
      %s22 = sphi 0, %s20
      %s23 = sphi 0, %s21
      %s33 = sphi 0, %s35
      %s36 = sphi 0, %s33
      %s37 = sphi 0, %s36
      %s53 = sphi 0, %s37
      %s57 = sphi 0, %s57
      %s59 = sphi 0, %s57
      %s60 = sphi 0, %s59
      %s74 = sphi 0, %s60
      %s82 = sphi 0, %s84
      %s85 = sphi 0, %s82
      %s86 = sphi 0, %s85
      %s102 = sphi 0, %s86
    $region4: #{tpu_custom_call.1} parent=1 // loop_header_branch
      %14 = sbr.rel (%p12) target = $region8
    $region5: #{tpu_custom_call.1} parent=1 // loop_body
      %s16 = ssub.s32 %s11, 1
      %s17 = ssub.s32 %s11, 2
      %s24 = sadd.s32 1, %s19
      %p25 = scmp.ge.s32.totalorder %s24, 3
      %s26 = scalar_select %p25, 0, %s24
      %s27 = sadd.s32 1, %s18
      %s28 = scalar_select %p25, %s27, %s18
      %p29 = scmp.ge.s32.totalorder %s28, 2
      %s30 = scalar_select %p29, 0, %s28
      %s31 = ssub.s32 %s18, %s30
      %p32 = scmp.eq.s32.totalorder %s31, 0
      %s34 = sadd.s32 %s33, 1
      %s35 = scalar_select %p32, %s33, %s34
      %p38 = pneg %p32
      %p39 = scmp.eq.s32.totalorder %s11, 5
      %p40 = por %p38, %p39
      %p41 = scmp.ne.s32.totalorder %s33, %s36
      %p42 = scmp.eq.s32.totalorder %s11, 0
      %p43 = por %p41, %p42
      %p44 = scmp.ne.s32.totalorder %s33, %s36
      %p45 = scmp.eq.s32.totalorder %s16, 5
      %p46 = por %p44, %p45
      %p47 = scmp.ne.s32.totalorder %s36, %s37
      %p48 = scmp.eq.s32.totalorder %s16, 0
      %p49 = por %p47, %p48
      %p50 = scmp.ne.s32.totalorder %s36, %s37
      %p51 = scmp.eq.s32.totalorder %s17, 5
      %p52 = por %p50, %p51
      %p54 = scmp.ne.s32.totalorder %s37, %s53
      %p55 = scmp.eq.s32.totalorder %s17, 0
      %p56 = por %p54, %p55
      %s58 = sadd.s32 %s57, 1
      %p61 = scmp.eq.s32.totalorder %s11, 5
      %p62 = scmp.ne.s32.totalorder %s57, %s59
      %p63 = scmp.eq.s32.totalorder %s11, 0
      %p64 = por %p62, %p63
      %p65 = scmp.ne.s32.totalorder %s57, %s59
      %p66 = scmp.eq.s32.totalorder %s16, 5
      %p67 = por %p65, %p66
      %p68 = scmp.ne.s32.totalorder %s59, %s60
      %p69 = scmp.eq.s32.totalorder %s16, 0
      %p70 = por %p68, %p69
      %p71 = scmp.ne.s32.totalorder %s59, %s60
      %p72 = scmp.eq.s32.totalorder %s17, 5
      %p73 = por %p71, %p72
      %p75 = scmp.ne.s32.totalorder %s60, %s74
      %p76 = scmp.eq.s32.totalorder %s17, 0
      %p77 = por %p75, %p76
      %s78 = ssub.s32 %s18, %s30
      %s79 = ssub.s32 %s19, %s26
      %s80 = sor.u32 %s78, %s79
      %p81 = scmp.eq.s32.totalorder %s80, 0
      %s83 = sadd.s32 %s82, 1
      %s84 = scalar_select %p81, %s82, %s83
      %p87 = pneg %p81
      %p88 = scmp.eq.s32.totalorder %s11, 5
      %p89 = por %p87, %p88
      %p90 = scmp.ne.s32.totalorder %s82, %s85
      %p91 = scmp.eq.s32.totalorder %s11, 0
      %p92 = por %p90, %p91
      %p93 = scmp.ne.s32.totalorder %s82, %s85
      %p94 = scmp.eq.s32.totalorder %s16, 5
      %p95 = por %p93, %p94
      %p96 = scmp.ne.s32.totalorder %s85, %s86
      %p97 = scmp.eq.s32.totalorder %s16, 0
      %p98 = por %p96, %p97
      %p99 = scmp.ne.s32.totalorder %s85, %s86
      %p100 = scmp.eq.s32.totalorder %s17, 5
      %p101 = por %p99, %p100
      %p103 = scmp.ne.s32.totalorder %s86, %s102
      %p104 = scmp.eq.s32.totalorder %s17, 0
      %p105 = por %p103, %p104
      %p106 = scmp.le.s32.totalorder 1, %s11
      %p107 = scmp.lt.s32.totalorder %s11, 7
      %p108 = pnand %p106, %p107
      %p109 = pneg %p108
      // Predicated region
      $region9: #{tpu_custom_call.1} parent=5 // pred_check
        _
      $region10: #{tpu_custom_call.1} parent=5 // pred_check_branch
        %111 = sbr.rel (%p108) target = $region12
      $region11: #{tpu_custom_call.1} parent=5 // pred_region
        %s112 = ssub.s32 %s11, 1
        // Predicated region
        $region13: #{tpu_custom_call.1} parent=11 // pred_check
          %p113 = pneg %p70
        $region14: #{tpu_custom_call.1} parent=11 // pred_check_branch
          %115 = sbr.rel (%p113) target = $region16
        $region15: #{tpu_custom_call.1} parent=11 // pred_region
          _
        $region16: #{tpu_custom_call.1} parent=11 // pred_fallthru
          _
      $region12: #{tpu_custom_call.1} parent=5 // pred_fallthru
        _
      %p116 = scmp.lt.s32.totalorder %s11, 6
      // Predicated region
      $region17: #{tpu_custom_call.1} parent=5 // pred_check
        %p117 = pneg %p116
      $region18: #{tpu_custom_call.1} parent=5 // pred_check_branch
        %119 = sbr.rel (%p117) target = $region20
      $region19: #{tpu_custom_call.1} parent=5 // pred_region
        // Predicated region
        $region21: #{tpu_custom_call.1} parent=19 // pred_check
          %p120 = pneg %p43
        $region22: #{tpu_custom_call.1} parent=19 // pred_check_branch
          %122 = sbr.rel (%p120) target = $region24
        $region23: #{tpu_custom_call.1} parent=19 // pred_region
          %p123 = scmp.lt.s32.totalorder %s18, 1
          %s124 = scalar_select %p123, %s18, 1
          %s125 = smul.addr %s124, 4
          %s126 = smul.addr %s125, 8
          %s127 = scalar_lea.vmem %s0, %s126
        $region24: #{tpu_custom_call.1} parent=19 // pred_fallthru
          _
      $region20: #{tpu_custom_call.1} parent=5 // pred_fallthru
        _
      %p128 = scmp.le.s32.totalorder 1, %s11
      %p129 = scmp.lt.s32.totalorder %s11, 7
      %p130 = pnand %p128, %p129
      %p131 = pneg %p130
      // Predicated region
      $region25: #{tpu_custom_call.1} parent=5 // pred_check
        _
      $region26: #{tpu_custom_call.1} parent=5 // pred_check_branch
        %133 = sbr.rel (%p130) target = $region28
      $region27: #{tpu_custom_call.1} parent=5 // pred_region
        %s134 = ssub.s32 %s11, 1
        %p135 = scmp.lt.s32.totalorder %s20, 1
        %s136 = scalar_select %p135, %s20, 1
        %s137 = smul.addr %s136, 4
        %s138 = smul.addr %s137, 8
        %s139 = scalar_lea.vmem %s0, %s138
        %p140 = pneg %p49
        %p141 = pneg %p46
        %p142 = pneg %p70
        %p143 = pneg %p67
        %p144 = pneg %p98
        %p145 = pneg %p95
        %s146 = sand.u32 %s85, 1
        %s147 = scalar_lea.sflag [#allocation3], %s146
        %s148 = sand.u32 %s85, 1
        %s149 = smul.addr %s148, 2
        %s150 = scalar_lea.vmem [#allocation2], %s149
        %p151 = scmp.lt.s32.totalorder %s20, 1
        %s152 = scalar_select %p151, %s20, 1
        %s153 = smul.addr %s152, 4
        %s154 = smul.addr %s153, 8
        %s155 = scalar_lea.vmem %s0, %s154
        %s156 = smul.u32 %s21, 8
        %s157 = scalar_lea.vmem %s155, %s156
        %v158 = vld [vmem:[%s157] sm:$0xff]
        %v159 = vld [vmem:[%s157 + $0x8] sm:$0x3]
        %v160 = vld [vmem:[%s1] sm:$0xf]
        %s161 = scalar_lea.vmem %s1, 4
        %v162 = vld [vmem:[%s161] sm:$0xf]
        %vm165 = vcmask 1046528
        %v166 = vrot.slane %v158, 1
        %v167 = vrot.slane %v159, 1
        %v168 = vsel %vm165, %v166, %v167
        %vm169 = vcmask 31744
        %v170 = vsel %vm169, %v168, 0
        %vm172 = vcmask 1043456
        %v174 = vsel %vm172, %v162, 0
        %176 = vmatprep.subr.mxu0 0.0
        %v177 = vand.u32 %v174, 4294901760
        %178 = vmatpush1.msra.mxu0 %v177
        %179 = vmatprep.subr.mxu0 0.0
        %180 = vmatpush1.msra.mxu0 0.0
        %181 = vmatprep.subr.mxu0 0.0
        %182 = vmatpush1.msra.mxu0 0.0
        %183 = vmatprep.subr.mxu0 0.0
        %184 = vmatpush1.msra.mxu0 0.0
        %185 = vmatprep.subr.mxu0 0.0
        %186 = vmatpush1.msra.mxu0 0.0
        %187 = vmatprep.subr.mxu0 0.0
        %188 = vmatpush1.msra.mxu0 0.0
        %189 = vmatprep.subr.mxu0 0.0
        %190 = vmatpush1.msra.mxu0 0.0
        %191 = vmatprep.subr.mxu0 0.0
        %192 = vmatpush1.msra.mxu0 0.0
        %193 = vmatprep.subr.mxu0 0.0
        %194 = vmatpush1.msra.mxu0 0.0
        %195 = vmatprep.subr.mxu0 0.0
        %196 = vmatpush1.msra.mxu0 0.0
        %197 = vmatprep.subr.mxu0 0.0
        %198 = vmatpush1.msra.mxu0 0.0
        %199 = vmatprep.subr.mxu0 0.0
        %200 = vmatpush1.msra.mxu0 0.0
        %201 = vmatprep.subr.mxu0 0.0
        %202 = vmatpush1.msra.mxu0 0.0
        %203 = vmatprep.subr.mxu0 0.0
        %204 = vmatpush1.msra.mxu0 0.0
        %205 = vmatprep.subr.mxu0 0.0
        %206 = vmatpush1.msra.mxu0 0.0
        %207 = vmatprep.subr.mxu0 0.0
        %208 = vmatpush1.msra.mxu0 0.0
        %209 = vmatprep.subr.mxu0 0.0
        %210 = vmatpush1.msra.mxu0 0.0
        %211 = vmatprep.subr.mxu0 0.0
        %212 = vmatpush1.msra.mxu0 0.0
        %213 = vmatprep.subr.mxu0 0.0
        %214 = vmatpush1.msra.mxu0 0.0
        %215 = vmatprep.subr.mxu0 0.0
        %216 = vmatpush1.msra.mxu0 0.0
        %217 = vmatprep.subr.mxu0 0.0
        %218 = vmatpush1.msra.mxu0 0.0
        %219 = vmatprep.subr.mxu0 0.0
        %220 = vmatpush1.msra.mxu0 0.0
        %221 = vmatprep.subr.mxu0 0.0
        %222 = vmatpush1.msra.mxu0 0.0
        %223 = vmatprep.subr.mxu0 0.0
        %224 = vmatpush1.msra.mxu0 0.0
        %225 = vmatprep.subr.mxu0 0.0
        %226 = vmatpush1.msra.mxu0 0.0
        %227 = vmatprep.subr.mxu0 0.0
        %228 = vmatpush1.msra.mxu0 0.0
        %229 = vmatprep.subr.mxu0 0.0
        %230 = vmatpush1.msra.mxu0 0.0
        %231 = vmatprep.subr.mxu0 0.0
        %232 = vmatpush1.msra.mxu0 0.0
        %233 = vmatprep.subr.mxu0 0.0
        %234 = vmatpush1.msra.mxu0 0.0
        %235 = vmatprep.subr.mxu0 0.0
        %236 = vmatpush1.msra.mxu0 0.0
        %237 = vmatprep.subr.mxu0 0.0
        %238 = vmatpush1.msra.mxu0 0.0
        %239 = vmatprep.subr.mxu0 0.0
        %240 = vmatpush1.msra.mxu0 0.0
        %241 = vmatprep.mubr.f32.mxu0 0.0
        %v242 = vand.u32 %v170, 4294901760
        %v243 = vsub.f32 %v170, %v242
        %v244 = vand.u32 %v243, 4294901760
        %v245 = vsub.f32 %v243, %v244
        %v246 = vand.u32 %v245, 4294901760
        %247 = vmatmul.mubr.f32.gmra.mrb[0].mxu0 %v246
        %v248 = vpop.f32.mrb[0].mxu0
        %v249 = vadd.f32 0.0, %v248
        %v250 = vpop.f32.mrb[0].mxu0
        %251 = vdwg.mxu0
        %252 = vmatprep.subr.mxu0 0.0
        %v253 = vand.u32 %v174, 4294901760
        %v254 = vsub.f32 %v174, %v253
        %v255 = vand.u32 %v254, 4294901760
        %v256 = vsub.f32 %v254, %v255
        %v257 = vand.u32 %v256, 4294901760
        %258 = vmatpush1.msra.mxu0 %v257
        %259 = vmatprep.subr.mxu0 0.0
        %260 = vmatpush1.msra.mxu0 0.0
        %261 = vmatprep.subr.mxu0 0.0
        %262 = vmatpush1.msra.mxu0 0.0
        %263 = vmatprep.subr.mxu0 0.0
        %264 = vmatpush1.msra.mxu0 0.0
        %265 = vmatprep.subr.mxu0 0.0
        %266 = vmatpush1.msra.mxu0 0.0
        %267 = vmatprep.subr.mxu0 0.0
        %268 = vmatpush1.msra.mxu0 0.0
        %269 = vmatprep.subr.mxu0 0.0
        %270 = vmatpush1.msra.mxu0 0.0
        %271 = vmatprep.subr.mxu0 0.0
        %272 = vmatpush1.msra.mxu0 0.0
        %273 = vmatprep.subr.mxu0 0.0
        %274 = vmatpush1.msra.mxu0 0.0
        %275 = vmatprep.subr.mxu0 0.0
        %276 = vmatpush1.msra.mxu0 0.0
        %277 = vmatprep.subr.mxu0 0.0
        %278 = vmatpush1.msra.mxu0 0.0
        %279 = vmatprep.subr.mxu0 0.0
        %280 = vmatpush1.msra.mxu0 0.0
        %281 = vmatprep.subr.mxu0 0.0
        %282 = vmatpush1.msra.mxu0 0.0
        %283 = vmatprep.subr.mxu0 0.0
        %284 = vmatpush1.msra.mxu0 0.0
        %285 = vmatprep.subr.mxu0 0.0
        %286 = vmatpush1.msra.mxu0 0.0
        %287 = vmatprep.subr.mxu0 0.0
        %288 = vmatpush1.msra.mxu0 0.0
        %289 = vmatprep.subr.mxu0 0.0
        %290 = vmatpush1.msra.mxu0 0.0
        %291 = vmatprep.subr.mxu0 0.0
        %292 = vmatpush1.msra.mxu0 0.0
        %293 = vmatprep.subr.mxu0 0.0
        %294 = vmatpush1.msra.mxu0 0.0
        %295 = vmatprep.subr.mxu0 0.0
        %296 = vmatpush1.msra.mxu0 0.0
        %297 = vmatprep.subr.mxu0 0.0
        %298 = vmatpush1.msra.mxu0 0.0
        %299 = vmatprep.subr.mxu0 0.0
        %300 = vmatpush1.msra.mxu0 0.0
        %301 = vmatprep.subr.mxu0 0.0
        %302 = vmatpush1.msra.mxu0 0.0
        %303 = vmatprep.subr.mxu0 0.0
        %304 = vmatpush1.msra.mxu0 0.0
        %305 = vmatprep.subr.mxu0 0.0
        %306 = vmatpush1.msra.mxu0 0.0
        %307 = vmatprep.subr.mxu0 0.0
        %308 = vmatpush1.msra.mxu0 0.0
        %309 = vmatprep.subr.mxu0 0.0
        %310 = vmatpush1.msra.mxu0 0.0
        %311 = vmatprep.subr.mxu0 0.0
        %312 = vmatpush1.msra.mxu0 0.0
        %313 = vmatprep.subr.mxu0 0.0
        %314 = vmatpush1.msra.mxu0 0.0
        %315 = vmatprep.subr.mxu0 0.0
        %316 = vmatpush1.msra.mxu0 0.0
        %317 = vmatprep.subr.mxu0 0.0
        %318 = vmatpush1.msra.mxu0 0.0
        %319 = vmatprep.subr.mxu0 0.0
        %320 = vmatpush1.msra.mxu0 0.0
        %321 = vmatprep.mubr.f32.mxu0 0.0
        %v322 = vand.u32 %v170, 4294901760
        %323 = vmatmul.mubr.f32.gmra.mrb[0].mxu0 %v322
        %v324 = vpop.f32.mrb[0].mxu0
        %v325 = vadd.f32 %v249, %v324
        %v326 = vpop.f32.mrb[0].mxu0
        %327 = vdwg.mxu0
        %328 = vmatprep.subr.mxu0 0.0
        %v329 = vand.u32 %v174, 4294901760
        %v330 = vsub.f32 %v174, %v329
        %331 = vmatpush1.msra.mxu0 %v330
        %332 = vmatprep.subr.mxu0 0.0
        %333 = vmatpush1.msra.mxu0 0.0
        %334 = vmatprep.subr.mxu0 0.0
        %335 = vmatpush1.msra.mxu0 0.0
        %336 = vmatprep.subr.mxu0 0.0
        %337 = vmatpush1.msra.mxu0 0.0
        %338 = vmatprep.subr.mxu0 0.0
        %339 = vmatpush1.msra.mxu0 0.0
        %340 = vmatprep.subr.mxu0 0.0
        %341 = vmatpush1.msra.mxu0 0.0
        %342 = vmatprep.subr.mxu0 0.0
        %343 = vmatpush1.msra.mxu0 0.0
        %344 = vmatprep.subr.mxu0 0.0
        %345 = vmatpush1.msra.mxu0 0.0
        %346 = vmatprep.subr.mxu0 0.0
        %347 = vmatpush1.msra.mxu0 0.0
        %348 = vmatprep.subr.mxu0 0.0
        %349 = vmatpush1.msra.mxu0 0.0
        %350 = vmatprep.subr.mxu0 0.0
        %351 = vmatpush1.msra.mxu0 0.0
        %352 = vmatprep.subr.mxu0 0.0
        %353 = vmatpush1.msra.mxu0 0.0
        %354 = vmatprep.subr.mxu0 0.0
        %355 = vmatpush1.msra.mxu0 0.0
        %356 = vmatprep.subr.mxu0 0.0
        %357 = vmatpush1.msra.mxu0 0.0
        %358 = vmatprep.subr.mxu0 0.0
        %359 = vmatpush1.msra.mxu0 0.0
        %360 = vmatprep.subr.mxu0 0.0
        %361 = vmatpush1.msra.mxu0 0.0
        %362 = vmatprep.subr.mxu0 0.0
        %363 = vmatpush1.msra.mxu0 0.0
        %364 = vmatprep.subr.mxu0 0.0
        %365 = vmatpush1.msra.mxu0 0.0
        %366 = vmatprep.subr.mxu0 0.0
        %367 = vmatpush1.msra.mxu0 0.0
        %368 = vmatprep.subr.mxu0 0.0
        %369 = vmatpush1.msra.mxu0 0.0
        %370 = vmatprep.subr.mxu0 0.0
        %371 = vmatpush1.msra.mxu0 0.0
        %372 = vmatprep.subr.mxu0 0.0
        %373 = vmatpush1.msra.mxu0 0.0
        %374 = vmatprep.subr.mxu0 0.0
        %375 = vmatpush1.msra.mxu0 0.0
        %376 = vmatprep.subr.mxu0 0.0
        %377 = vmatpush1.msra.mxu0 0.0
        %378 = vmatprep.subr.mxu0 0.0
        %379 = vmatpush1.msra.mxu0 0.0
        %380 = vmatprep.subr.mxu0 0.0
        %381 = vmatpush1.msra.mxu0 0.0
        %382 = vmatprep.subr.mxu0 0.0
        %383 = vmatpush1.msra.mxu0 0.0
        %384 = vmatprep.subr.mxu0 0.0
        %385 = vmatpush1.msra.mxu0 0.0
        %386 = vmatprep.subr.mxu0 0.0
        %387 = vmatpush1.msra.mxu0 0.0
        %388 = vmatprep.subr.mxu0 0.0
        %389 = vmatpush1.msra.mxu0 0.0
        %390 = vmatprep.subr.mxu0 0.0
        %391 = vmatpush1.msra.mxu0 0.0
        %392 = vmatprep.subr.mxu0 0.0
        %393 = vmatpush1.msra.mxu0 0.0
        %394 = vmatprep.mubr.f32.mxu0 0.0
        %v395 = vand.u32 %v170, 4294901760
        %v396 = vsub.f32 %v170, %v395
        %397 = vmatmul.mubr.f32.gmra.mrb[0].mxu0 %v396
        %v398 = vpop.f32.mrb[0].mxu0
        %v399 = vadd.f32 %v325, %v398
        %v400 = vpop.f32.mrb[0].mxu0
        %401 = vdwg.mxu0
        %402 = vmatprep.subr.mxu0 0.0
        %v403 = vand.u32 %v174, 4294901760
        %404 = vmatpush1.msra.mxu0 %v403
        %405 = vmatprep.subr.mxu0 0.0
        %406 = vmatpush1.msra.mxu0 0.0
        %407 = vmatprep.subr.mxu0 0.0
        %408 = vmatpush1.msra.mxu0 0.0
        %409 = vmatprep.subr.mxu0 0.0
        %410 = vmatpush1.msra.mxu0 0.0
        %411 = vmatprep.subr.mxu0 0.0
        %412 = vmatpush1.msra.mxu0 0.0
        %413 = vmatprep.subr.mxu0 0.0
        %414 = vmatpush1.msra.mxu0 0.0
        %415 = vmatprep.subr.mxu0 0.0
        %416 = vmatpush1.msra.mxu0 0.0
        %417 = vmatprep.subr.mxu0 0.0
        %418 = vmatpush1.msra.mxu0 0.0
        %419 = vmatprep.subr.mxu0 0.0
        %420 = vmatpush1.msra.mxu0 0.0
        %421 = vmatprep.subr.mxu0 0.0
        %422 = vmatpush1.msra.mxu0 0.0
        %423 = vmatprep.subr.mxu0 0.0
        %424 = vmatpush1.msra.mxu0 0.0
        %425 = vmatprep.subr.mxu0 0.0
        %426 = vmatpush1.msra.mxu0 0.0
        %427 = vmatprep.subr.mxu0 0.0
        %428 = vmatpush1.msra.mxu0 0.0
        %429 = vmatprep.subr.mxu0 0.0
        %430 = vmatpush1.msra.mxu0 0.0
        %431 = vmatprep.subr.mxu0 0.0
        %432 = vmatpush1.msra.mxu0 0.0
        %433 = vmatprep.subr.mxu0 0.0
        %434 = vmatpush1.msra.mxu0 0.0
        %435 = vmatprep.subr.mxu0 0.0
        %436 = vmatpush1.msra.mxu0 0.0
        %437 = vmatprep.subr.mxu0 0.0
        %438 = vmatpush1.msra.mxu0 0.0
        %439 = vmatprep.subr.mxu0 0.0
        %440 = vmatpush1.msra.mxu0 0.0
        %441 = vmatprep.subr.mxu0 0.0
        %442 = vmatpush1.msra.mxu0 0.0
        %443 = vmatprep.subr.mxu0 0.0
        %444 = vmatpush1.msra.mxu0 0.0
        %445 = vmatprep.subr.mxu0 0.0
        %446 = vmatpush1.msra.mxu0 0.0
        %447 = vmatprep.subr.mxu0 0.0
        %448 = vmatpush1.msra.mxu0 0.0
        %449 = vmatprep.subr.mxu0 0.0
        %450 = vmatpush1.msra.mxu0 0.0
        %451 = vmatprep.subr.mxu0 0.0
        %452 = vmatpush1.msra.mxu0 0.0
        %453 = vmatprep.subr.mxu0 0.0
        %454 = vmatpush1.msra.mxu0 0.0
        %455 = vmatprep.subr.mxu0 0.0
        %456 = vmatpush1.msra.mxu0 0.0
        %457 = vmatprep.subr.mxu0 0.0
        %458 = vmatpush1.msra.mxu0 0.0
        %459 = vmatprep.subr.mxu0 0.0
        %460 = vmatpush1.msra.mxu0 0.0
        %461 = vmatprep.subr.mxu0 0.0
        %462 = vmatpush1.msra.mxu0 0.0
        %463 = vmatprep.subr.mxu0 0.0
        %464 = vmatpush1.msra.mxu0 0.0
        %465 = vmatprep.subr.mxu0 0.0
        %466 = vmatpush1.msra.mxu0 0.0
        %467 = vmatprep.mubr.f32.mxu0 0.0
        %v468 = vand.u32 %v170, 4294901760
        %v469 = vsub.f32 %v170, %v468
        %v470 = vand.u32 %v469, 4294901760
        %471 = vmatmul.mubr.f32.gmra.mrb[0].mxu0 %v470
        %v472 = vpop.f32.mrb[0].mxu0
        %v473 = vadd.f32 %v399, %v472
        %v474 = vpop.f32.mrb[0].mxu0
        %475 = vdwg.mxu0
        %476 = vmatprep.subr.mxu0 0.0
        %v477 = vand.u32 %v174, 4294901760
        %v478 = vsub.f32 %v174, %v477
        %v479 = vand.u32 %v478, 4294901760
        %480 = vmatpush1.msra.mxu0 %v479
        %481 = vmatprep.subr.mxu0 0.0
        %482 = vmatpush1.msra.mxu0 0.0
        %483 = vmatprep.subr.mxu0 0.0
        %484 = vmatpush1.msra.mxu0 0.0
        %485 = vmatprep.subr.mxu0 0.0
        %486 = vmatpush1.msra.mxu0 0.0
        %487 = vmatprep.subr.mxu0 0.0
        %488 = vmatpush1.msra.mxu0 0.0
        %489 = vmatprep.subr.mxu0 0.0
        %490 = vmatpush1.msra.mxu0 0.0
        %491 = vmatprep.subr.mxu0 0.0
        %492 = vmatpush1.msra.mxu0 0.0
        %493 = vmatprep.subr.mxu0 0.0
        %494 = vmatpush1.msra.mxu0 0.0
        %495 = vmatprep.subr.mxu0 0.0
        %496 = vmatpush1.msra.mxu0 0.0
        %497 = vmatprep.subr.mxu0 0.0
        %498 = vmatpush1.msra.mxu0 0.0
        %499 = vmatprep.subr.mxu0 0.0
        %500 = vmatpush1.msra.mxu0 0.0
        %501 = vmatprep.subr.mxu0 0.0
        %502 = vmatpush1.msra.mxu0 0.0
        %503 = vmatprep.subr.mxu0 0.0
        %504 = vmatpush1.msra.mxu0 0.0
        %505 = vmatprep.subr.mxu0 0.0
        %506 = vmatpush1.msra.mxu0 0.0
        %507 = vmatprep.subr.mxu0 0.0
        %508 = vmatpush1.msra.mxu0 0.0
        %509 = vmatprep.subr.mxu0 0.0
        %510 = vmatpush1.msra.mxu0 0.0
        %511 = vmatprep.subr.mxu0 0.0
        %512 = vmatpush1.msra.mxu0 0.0
        %513 = vmatprep.subr.mxu0 0.0
        %514 = vmatpush1.msra.mxu0 0.0
        %515 = vmatprep.subr.mxu0 0.0
        %516 = vmatpush1.msra.mxu0 0.0
        %517 = vmatprep.subr.mxu0 0.0
        %518 = vmatpush1.msra.mxu0 0.0
        %519 = vmatprep.subr.mxu0 0.0
        %520 = vmatpush1.msra.mxu0 0.0
        %521 = vmatprep.subr.mxu0 0.0
        %522 = vmatpush1.msra.mxu0 0.0
        %523 = vmatprep.subr.mxu0 0.0
        %524 = vmatpush1.msra.mxu0 0.0
        %525 = vmatprep.subr.mxu0 0.0
        %526 = vmatpush1.msra.mxu0 0.0
        %527 = vmatprep.subr.mxu0 0.0
        %528 = vmatpush1.msra.mxu0 0.0
        %529 = vmatprep.subr.mxu0 0.0
        %530 = vmatpush1.msra.mxu0 0.0
        %531 = vmatprep.subr.mxu0 0.0
        %532 = vmatpush1.msra.mxu0 0.0
        %533 = vmatprep.subr.mxu0 0.0
        %534 = vmatpush1.msra.mxu0 0.0
        %535 = vmatprep.subr.mxu0 0.0
        %536 = vmatpush1.msra.mxu0 0.0
        %537 = vmatprep.subr.mxu0 0.0
        %538 = vmatpush1.msra.mxu0 0.0
        %539 = vmatprep.subr.mxu0 0.0
        %540 = vmatpush1.msra.mxu0 0.0
        %541 = vmatprep.subr.mxu0 0.0
        %542 = vmatpush1.msra.mxu0 0.0
        %543 = vmatprep.mubr.f32.mxu0 0.0
        %v544 = vand.u32 %v170, 4294901760
        %545 = vmatmul.mubr.f32.gmra.mrb[0].mxu0 %v544
        %v546 = vpop.f32.mrb[0].mxu0
        %v547 = vadd.f32 %v473, %v546
        %v548 = vpop.f32.mrb[0].mxu0
        %549 = vdwg.mxu0
        %550 = vmatprep.subr.mxu0 0.0
        %v551 = vand.u32 %v174, 4294901760
        %552 = vmatpush1.msra.mxu0 %v551
        %553 = vmatprep.subr.mxu0 0.0
        %554 = vmatpush1.msra.mxu0 0.0
        %555 = vmatprep.subr.mxu0 0.0
        %556 = vmatpush1.msra.mxu0 0.0
        %557 = vmatprep.subr.mxu0 0.0
        %558 = vmatpush1.msra.mxu0 0.0
        %559 = vmatprep.subr.mxu0 0.0
        %560 = vmatpush1.msra.mxu0 0.0
        %561 = vmatprep.subr.mxu0 0.0
        %562 = vmatpush1.msra.mxu0 0.0
        %563 = vmatprep.subr.mxu0 0.0
        %564 = vmatpush1.msra.mxu0 0.0
        %565 = vmatprep.subr.mxu0 0.0
        %566 = vmatpush1.msra.mxu0 0.0
        %567 = vmatprep.subr.mxu0 0.0
        %568 = vmatpush1.msra.mxu0 0.0
        %569 = vmatprep.subr.mxu0 0.0
        %570 = vmatpush1.msra.mxu0 0.0
        %571 = vmatprep.subr.mxu0 0.0
        %572 = vmatpush1.msra.mxu0 0.0
        %573 = vmatprep.subr.mxu0 0.0
        %574 = vmatpush1.msra.mxu0 0.0
        %575 = vmatprep.subr.mxu0 0.0
        %576 = vmatpush1.msra.mxu0 0.0
        %577 = vmatprep.subr.mxu0 0.0
        %578 = vmatpush1.msra.mxu0 0.0
        %579 = vmatprep.subr.mxu0 0.0
        %580 = vmatpush1.msra.mxu0 0.0
        %581 = vmatprep.subr.mxu0 0.0
        %582 = vmatpush1.msra.mxu0 0.0
        %583 = vmatprep.subr.mxu0 0.0
        %584 = vmatpush1.msra.mxu0 0.0
        %585 = vmatprep.subr.mxu0 0.0
        %586 = vmatpush1.msra.mxu0 0.0
        %587 = vmatprep.subr.mxu0 0.0
        %588 = vmatpush1.msra.mxu0 0.0
        %589 = vmatprep.subr.mxu0 0.0
        %590 = vmatpush1.msra.mxu0 0.0
        %591 = vmatprep.subr.mxu0 0.0
        %592 = vmatpush1.msra.mxu0 0.0
        %593 = vmatprep.subr.mxu0 0.0
        %594 = vmatpush1.msra.mxu0 0.0
        %595 = vmatprep.subr.mxu0 0.0
        %596 = vmatpush1.msra.mxu0 0.0
        %597 = vmatprep.subr.mxu0 0.0
        %598 = vmatpush1.msra.mxu0 0.0
        %599 = vmatprep.subr.mxu0 0.0
        %600 = vmatpush1.msra.mxu0 0.0
        %601 = vmatprep.subr.mxu0 0.0
        %602 = vmatpush1.msra.mxu0 0.0
        %603 = vmatprep.subr.mxu0 0.0
        %604 = vmatpush1.msra.mxu0 0.0
        %605 = vmatprep.subr.mxu0 0.0
        %606 = vmatpush1.msra.mxu0 0.0
        %607 = vmatprep.subr.mxu0 0.0
        %608 = vmatpush1.msra.mxu0 0.0
        %609 = vmatprep.subr.mxu0 0.0
        %610 = vmatpush1.msra.mxu0 0.0
        %611 = vmatprep.subr.mxu0 0.0
        %612 = vmatpush1.msra.mxu0 0.0
        %613 = vmatprep.subr.mxu0 0.0
        %614 = vmatpush1.msra.mxu0 0.0
        %615 = vmatprep.mubr.f32.mxu0 0.0
        %v616 = vand.u32 %v170, 4294901760
        %617 = vmatmul.mubr.f32.gmra.mrb[0].mxu0 %v616
        %v618 = vpop.f32.mrb[0].mxu0
        %v619 = vadd.f32 %v547, %v618
        %v620 = vpop.f32.mrb[0].mxu0
        %621 = vdwg.mxu0
        %v622 = vsel %vm169, %v158, 0
        %v625 = vsel %vm172, %v160, 0
        %627 = vmatprep.subr.mxu0 0.0
        %v628 = vand.u32 %v625, 4294901760
        %629 = vmatpush1.msra.mxu0 %v628
        %630 = vmatprep.subr.mxu0 0.0
        %631 = vmatpush1.msra.mxu0 0.0
        %632 = vmatprep.subr.mxu0 0.0
        %633 = vmatpush1.msra.mxu0 0.0
        %634 = vmatprep.subr.mxu0 0.0
        %635 = vmatpush1.msra.mxu0 0.0
        %636 = vmatprep.subr.mxu0 0.0
        %637 = vmatpush1.msra.mxu0 0.0
        %638 = vmatprep.subr.mxu0 0.0
        %639 = vmatpush1.msra.mxu0 0.0
        %640 = vmatprep.subr.mxu0 0.0
        %641 = vmatpush1.msra.mxu0 0.0
        %642 = vmatprep.subr.mxu0 0.0
        %643 = vmatpush1.msra.mxu0 0.0
        %644 = vmatprep.subr.mxu0 0.0
        %645 = vmatpush1.msra.mxu0 0.0
        %646 = vmatprep.subr.mxu0 0.0
        %647 = vmatpush1.msra.mxu0 0.0
        %648 = vmatprep.subr.mxu0 0.0
        %649 = vmatpush1.msra.mxu0 0.0
        %650 = vmatprep.subr.mxu0 0.0
        %651 = vmatpush1.msra.mxu0 0.0
        %652 = vmatprep.subr.mxu0 0.0
        %653 = vmatpush1.msra.mxu0 0.0
        %654 = vmatprep.subr.mxu0 0.0
        %655 = vmatpush1.msra.mxu0 0.0
        %656 = vmatprep.subr.mxu0 0.0
        %657 = vmatpush1.msra.mxu0 0.0
        %658 = vmatprep.subr.mxu0 0.0
        %659 = vmatpush1.msra.mxu0 0.0
        %660 = vmatprep.subr.mxu0 0.0
        %661 = vmatpush1.msra.mxu0 0.0
        %662 = vmatprep.subr.mxu0 0.0
        %663 = vmatpush1.msra.mxu0 0.0
        %664 = vmatprep.subr.mxu0 0.0
        %665 = vmatpush1.msra.mxu0 0.0
        %666 = vmatprep.subr.mxu0 0.0
        %667 = vmatpush1.msra.mxu0 0.0
        %668 = vmatprep.subr.mxu0 0.0
        %669 = vmatpush1.msra.mxu0 0.0
        %670 = vmatprep.subr.mxu0 0.0
        %671 = vmatpush1.msra.mxu0 0.0
        %672 = vmatprep.subr.mxu0 0.0
        %673 = vmatpush1.msra.mxu0 0.0
        %674 = vmatprep.subr.mxu0 0.0
        %675 = vmatpush1.msra.mxu0 0.0
        %676 = vmatprep.subr.mxu0 0.0
        %677 = vmatpush1.msra.mxu0 0.0
        %678 = vmatprep.subr.mxu0 0.0
        %679 = vmatpush1.msra.mxu0 0.0
        %680 = vmatprep.subr.mxu0 0.0
        %681 = vmatpush1.msra.mxu0 0.0
        %682 = vmatprep.subr.mxu0 0.0
        %683 = vmatpush1.msra.mxu0 0.0
        %684 = vmatprep.subr.mxu0 0.0
        %685 = vmatpush1.msra.mxu0 0.0
        %686 = vmatprep.subr.mxu0 0.0
        %687 = vmatpush1.msra.mxu0 0.0
        %688 = vmatprep.subr.mxu0 0.0
        %689 = vmatpush1.msra.mxu0 0.0
        %690 = vmatprep.subr.mxu0 0.0
        %691 = vmatpush1.msra.mxu0 0.0
        %692 = vmatprep.mubr.f32.mxu0 0.0
        %v693 = vand.u32 %v622, 4294901760
        %v694 = vsub.f32 %v622, %v693
        %v695 = vand.u32 %v694, 4294901760
        %v696 = vsub.f32 %v694, %v695
        %v697 = vand.u32 %v696, 4294901760
        %698 = vmatmul.mubr.f32.gmra.mrb[0].mxu0 %v697
        %v699 = vpop.f32.mrb[0].mxu0
        %v700 = vadd.f32 %v619, %v699
        %v701 = vpop.f32.mrb[0].mxu0
        %702 = vdwg.mxu0
        %703 = vmatprep.subr.mxu0 0.0
        %v704 = vand.u32 %v625, 4294901760
        %v705 = vsub.f32 %v625, %v704
        %v706 = vand.u32 %v705, 4294901760
        %v707 = vsub.f32 %v705, %v706
        %v708 = vand.u32 %v707, 4294901760
        %709 = vmatpush1.msra.mxu0 %v708
        %710 = vmatprep.subr.mxu0 0.0
        %711 = vmatpush1.msra.mxu0 0.0
        %712 = vmatprep.subr.mxu0 0.0
        %713 = vmatpush1.msra.mxu0 0.0
        %714 = vmatprep.subr.mxu0 0.0
        %715 = vmatpush1.msra.mxu0 0.0
        %716 = vmatprep.subr.mxu0 0.0
        %717 = vmatpush1.msra.mxu0 0.0
        %718 = vmatprep.subr.mxu0 0.0
        %719 = vmatpush1.msra.mxu0 0.0
        %720 = vmatprep.subr.mxu0 0.0
        %721 = vmatpush1.msra.mxu0 0.0
        %722 = vmatprep.subr.mxu0 0.0
        %723 = vmatpush1.msra.mxu0 0.0
        %724 = vmatprep.subr.mxu0 0.0
        %725 = vmatpush1.msra.mxu0 0.0
        %726 = vmatprep.subr.mxu0 0.0
        %727 = vmatpush1.msra.mxu0 0.0
        %728 = vmatprep.subr.mxu0 0.0
        %729 = vmatpush1.msra.mxu0 0.0
        %730 = vmatprep.subr.mxu0 0.0
        %731 = vmatpush1.msra.mxu0 0.0
        %732 = vmatprep.subr.mxu0 0.0
        %733 = vmatpush1.msra.mxu0 0.0
        %734 = vmatprep.subr.mxu0 0.0
        %735 = vmatpush1.msra.mxu0 0.0
        %736 = vmatprep.subr.mxu0 0.0
        %737 = vmatpush1.msra.mxu0 0.0
        %738 = vmatprep.subr.mxu0 0.0
        %739 = vmatpush1.msra.mxu0 0.0
        %740 = vmatprep.subr.mxu0 0.0
        %741 = vmatpush1.msra.mxu0 0.0
        %742 = vmatprep.subr.mxu0 0.0
        %743 = vmatpush1.msra.mxu0 0.0
        %744 = vmatprep.subr.mxu0 0.0
        %745 = vmatpush1.msra.mxu0 0.0
        %746 = vmatprep.subr.mxu0 0.0
        %747 = vmatpush1.msra.mxu0 0.0
        %748 = vmatprep.subr.mxu0 0.0
        %749 = vmatpush1.msra.mxu0 0.0
        %750 = vmatprep.subr.mxu0 0.0
        %751 = vmatpush1.msra.mxu0 0.0
        %752 = vmatprep.subr.mxu0 0.0
        %753 = vmatpush1.msra.mxu0 0.0
        %754 = vmatprep.subr.mxu0 0.0
        %755 = vmatpush1.msra.mxu0 0.0
        %756 = vmatprep.subr.mxu0 0.0
        %757 = vmatpush1.msra.mxu0 0.0
        %758 = vmatprep.subr.mxu0 0.0
        %759 = vmatpush1.msra.mxu0 0.0
        %760 = vmatprep.subr.mxu0 0.0
        %761 = vmatpush1.msra.mxu0 0.0
        %762 = vmatprep.subr.mxu0 0.0
        %763 = vmatpush1.msra.mxu0 0.0
        %764 = vmatprep.subr.mxu0 0.0
        %765 = vmatpush1.msra.mxu0 0.0
        %766 = vmatprep.subr.mxu0 0.0
        %767 = vmatpush1.msra.mxu0 0.0
        %768 = vmatprep.subr.mxu0 0.0
        %769 = vmatpush1.msra.mxu0 0.0
        %770 = vmatprep.subr.mxu0 0.0
        %771 = vmatpush1.msra.mxu0 0.0
        %772 = vmatprep.mubr.f32.mxu0 0.0
        %v773 = vand.u32 %v622, 4294901760
        %774 = vmatmul.mubr.f32.gmra.mrb[0].mxu0 %v773
        %v775 = vpop.f32.mrb[0].mxu0
        %v776 = vadd.f32 %v700, %v775
        %v777 = vpop.f32.mrb[0].mxu0
        %778 = vdwg.mxu0
        %779 = vmatprep.subr.mxu0 0.0
        %v780 = vand.u32 %v625, 4294901760
        %v781 = vsub.f32 %v625, %v780
        %782 = vmatpush1.msra.mxu0 %v781
        %783 = vmatprep.subr.mxu0 0.0
        %784 = vmatpush1.msra.mxu0 0.0
        %785 = vmatprep.subr.mxu0 0.0
        %786 = vmatpush1.msra.mxu0 0.0
        %787 = vmatprep.subr.mxu0 0.0
        %788 = vmatpush1.msra.mxu0 0.0
        %789 = vmatprep.subr.mxu0 0.0
        %790 = vmatpush1.msra.mxu0 0.0
        %791 = vmatprep.subr.mxu0 0.0
        %792 = vmatpush1.msra.mxu0 0.0
        %793 = vmatprep.subr.mxu0 0.0
        %794 = vmatpush1.msra.mxu0 0.0
        %795 = vmatprep.subr.mxu0 0.0
        %796 = vmatpush1.msra.mxu0 0.0
        %797 = vmatprep.subr.mxu0 0.0
        %798 = vmatpush1.msra.mxu0 0.0
        %799 = vmatprep.subr.mxu0 0.0
        %800 = vmatpush1.msra.mxu0 0.0
        %801 = vmatprep.subr.mxu0 0.0
        %802 = vmatpush1.msra.mxu0 0.0
        %803 = vmatprep.subr.mxu0 0.0
        %804 = vmatpush1.msra.mxu0 0.0
        %805 = vmatprep.subr.mxu0 0.0
        %806 = vmatpush1.msra.mxu0 0.0
        %807 = vmatprep.subr.mxu0 0.0
        %808 = vmatpush1.msra.mxu0 0.0
        %809 = vmatprep.subr.mxu0 0.0
        %810 = vmatpush1.msra.mxu0 0.0
        %811 = vmatprep.subr.mxu0 0.0
        %812 = vmatpush1.msra.mxu0 0.0
        %813 = vmatprep.subr.mxu0 0.0
        %814 = vmatpush1.msra.mxu0 0.0
        %815 = vmatprep.subr.mxu0 0.0
        %816 = vmatpush1.msra.mxu0 0.0
        %817 = vmatprep.subr.mxu0 0.0
        %818 = vmatpush1.msra.mxu0 0.0
        %819 = vmatprep.subr.mxu0 0.0
        %820 = vmatpush1.msra.mxu0 0.0
        %821 = vmatprep.subr.mxu0 0.0
        %822 = vmatpush1.msra.mxu0 0.0
        %823 = vmatprep.subr.mxu0 0.0
        %824 = vmatpush1.msra.mxu0 0.0
        %825 = vmatprep.subr.mxu0 0.0
        %826 = vmatpush1.msra.mxu0 0.0
        %827 = vmatprep.subr.mxu0 0.0
        %828 = vmatpush1.msra.mxu0 0.0
        %829 = vmatprep.subr.mxu0 0.0
        %830 = vmatpush1.msra.mxu0 0.0
        %831 = vmatprep.subr.mxu0 0.0
        %832 = vmatpush1.msra.mxu0 0.0
        %833 = vmatprep.subr.mxu0 0.0
        %834 = vmatpush1.msra.mxu0 0.0
        %835 = vmatprep.subr.mxu0 0.0
        %836 = vmatpush1.msra.mxu0 0.0
        %837 = vmatprep.subr.mxu0 0.0
        %838 = vmatpush1.msra.mxu0 0.0
        %839 = vmatprep.subr.mxu0 0.0
        %840 = vmatpush1.msra.mxu0 0.0
        %841 = vmatprep.subr.mxu0 0.0
        %842 = vmatpush1.msra.mxu0 0.0
        %843 = vmatprep.subr.mxu0 0.0
        %844 = vmatpush1.msra.mxu0 0.0
        %845 = vmatprep.mubr.f32.mxu0 0.0
        %v846 = vand.u32 %v622, 4294901760
        %v847 = vsub.f32 %v622, %v846
        %848 = vmatmul.mubr.f32.gmra.mrb[0].mxu0 %v847
        %v849 = vpop.f32.mrb[0].mxu0
        %v850 = vadd.f32 %v776, %v849
        %v851 = vpop.f32.mrb[0].mxu0
        %852 = vdwg.mxu0
        %853 = vmatprep.subr.mxu0 0.0
        %v854 = vand.u32 %v625, 4294901760
        %855 = vmatpush1.msra.mxu0 %v854
        %856 = vmatprep.subr.mxu0 0.0
        %857 = vmatpush1.msra.mxu0 0.0
        %858 = vmatprep.subr.mxu0 0.0
        %859 = vmatpush1.msra.mxu0 0.0
        %860 = vmatprep.subr.mxu0 0.0
        %861 = vmatpush1.msra.mxu0 0.0
        %862 = vmatprep.subr.mxu0 0.0
        %863 = vmatpush1.msra.mxu0 0.0
        %864 = vmatprep.subr.mxu0 0.0
        %865 = vmatpush1.msra.mxu0 0.0
        %866 = vmatprep.subr.mxu0 0.0
        %867 = vmatpush1.msra.mxu0 0.0
        %868 = vmatprep.subr.mxu0 0.0
        %869 = vmatpush1.msra.mxu0 0.0
        %870 = vmatprep.subr.mxu0 0.0
        %871 = vmatpush1.msra.mxu0 0.0
        %872 = vmatprep.subr.mxu0 0.0
        %873 = vmatpush1.msra.mxu0 0.0
        %874 = vmatprep.subr.mxu0 0.0
        %875 = vmatpush1.msra.mxu0 0.0
        %876 = vmatprep.subr.mxu0 0.0
        %877 = vmatpush1.msra.mxu0 0.0
        %878 = vmatprep.subr.mxu0 0.0
        %879 = vmatpush1.msra.mxu0 0.0
        %880 = vmatprep.subr.mxu0 0.0
        %881 = vmatpush1.msra.mxu0 0.0
        %882 = vmatprep.subr.mxu0 0.0
        %883 = vmatpush1.msra.mxu0 0.0
        %884 = vmatprep.subr.mxu0 0.0
        %885 = vmatpush1.msra.mxu0 0.0
        %886 = vmatprep.subr.mxu0 0.0
        %887 = vmatpush1.msra.mxu0 0.0
        %888 = vmatprep.subr.mxu0 0.0
        %889 = vmatpush1.msra.mxu0 0.0
        %890 = vmatprep.subr.mxu0 0.0
        %891 = vmatpush1.msra.mxu0 0.0
        %892 = vmatprep.subr.mxu0 0.0
        %893 = vmatpush1.msra.mxu0 0.0
        %894 = vmatprep.subr.mxu0 0.0
        %895 = vmatpush1.msra.mxu0 0.0
        %896 = vmatprep.subr.mxu0 0.0
        %897 = vmatpush1.msra.mxu0 0.0
        %898 = vmatprep.subr.mxu0 0.0
        %899 = vmatpush1.msra.mxu0 0.0
        %900 = vmatprep.subr.mxu0 0.0
        %901 = vmatpush1.msra.mxu0 0.0
        %902 = vmatprep.subr.mxu0 0.0
        %903 = vmatpush1.msra.mxu0 0.0
        %904 = vmatprep.subr.mxu0 0.0
        %905 = vmatpush1.msra.mxu0 0.0
        %906 = vmatprep.subr.mxu0 0.0
        %907 = vmatpush1.msra.mxu0 0.0
        %908 = vmatprep.subr.mxu0 0.0
        %909 = vmatpush1.msra.mxu0 0.0
        %910 = vmatprep.subr.mxu0 0.0
        %911 = vmatpush1.msra.mxu0 0.0
        %912 = vmatprep.subr.mxu0 0.0
        %913 = vmatpush1.msra.mxu0 0.0
        %914 = vmatprep.subr.mxu0 0.0
        %915 = vmatpush1.msra.mxu0 0.0
        %916 = vmatprep.subr.mxu0 0.0
        %917 = vmatpush1.msra.mxu0 0.0
        %918 = vmatprep.mubr.f32.mxu0 0.0
        %v919 = vand.u32 %v622, 4294901760
        %v920 = vsub.f32 %v622, %v919
        %v921 = vand.u32 %v920, 4294901760
        %922 = vmatmul.mubr.f32.gmra.mrb[0].mxu0 %v921
        %v923 = vpop.f32.mrb[0].mxu0
        %v924 = vadd.f32 %v850, %v923
        %v925 = vpop.f32.mrb[0].mxu0
        %926 = vdwg.mxu0
        %927 = vmatprep.subr.mxu0 0.0
        %v928 = vand.u32 %v625, 4294901760
        %v929 = vsub.f32 %v625, %v928
        %v930 = vand.u32 %v929, 4294901760
        %931 = vmatpush1.msra.mxu0 %v930
        %932 = vmatprep.subr.mxu0 0.0
        %933 = vmatpush1.msra.mxu0 0.0
        %934 = vmatprep.subr.mxu0 0.0
        %935 = vmatpush1.msra.mxu0 0.0
        %936 = vmatprep.subr.mxu0 0.0
        %937 = vmatpush1.msra.mxu0 0.0
        %938 = vmatprep.subr.mxu0 0.0
        %939 = vmatpush1.msra.mxu0 0.0
        %940 = vmatprep.subr.mxu0 0.0
        %941 = vmatpush1.msra.mxu0 0.0
        %942 = vmatprep.subr.mxu0 0.0
        %943 = vmatpush1.msra.mxu0 0.0
        %944 = vmatprep.subr.mxu0 0.0
        %945 = vmatpush1.msra.mxu0 0.0
        %946 = vmatprep.subr.mxu0 0.0
        %947 = vmatpush1.msra.mxu0 0.0
        %948 = vmatprep.subr.mxu0 0.0
        %949 = vmatpush1.msra.mxu0 0.0
        %950 = vmatprep.subr.mxu0 0.0
        %951 = vmatpush1.msra.mxu0 0.0
        %952 = vmatprep.subr.mxu0 0.0
        %953 = vmatpush1.msra.mxu0 0.0
        %954 = vmatprep.subr.mxu0 0.0
        %955 = vmatpush1.msra.mxu0 0.0
        %956 = vmatprep.subr.mxu0 0.0
        %957 = vmatpush1.msra.mxu0 0.0
        %958 = vmatprep.subr.mxu0 0.0
        %959 = vmatpush1.msra.mxu0 0.0
        %960 = vmatprep.subr.mxu0 0.0
        %961 = vmatpush1.msra.mxu0 0.0
        %962 = vmatprep.subr.mxu0 0.0
        %963 = vmatpush1.msra.mxu0 0.0
        %964 = vmatprep.subr.mxu0 0.0
        %965 = vmatpush1.msra.mxu0 0.0
        %966 = vmatprep.subr.mxu0 0.0
        %967 = vmatpush1.msra.mxu0 0.0
        %968 = vmatprep.subr.mxu0 0.0
        %969 = vmatpush1.msra.mxu0 0.0
        %970 = vmatprep.subr.mxu0 0.0
        %971 = vmatpush1.msra.mxu0 0.0
        %972 = vmatprep.subr.mxu0 0.0
        %973 = vmatpush1.msra.mxu0 0.0
        %974 = vmatprep.subr.mxu0 0.0
        %975 = vmatpush1.msra.mxu0 0.0
        %976 = vmatprep.subr.mxu0 0.0
        %977 = vmatpush1.msra.mxu0 0.0
        %978 = vmatprep.subr.mxu0 0.0
        %979 = vmatpush1.msra.mxu0 0.0
        %980 = vmatprep.subr.mxu0 0.0
        %981 = vmatpush1.msra.mxu0 0.0
        %982 = vmatprep.subr.mxu0 0.0
        %983 = vmatpush1.msra.mxu0 0.0
        %984 = vmatprep.subr.mxu0 0.0
        %985 = vmatpush1.msra.mxu0 0.0
        %986 = vmatprep.subr.mxu0 0.0
        %987 = vmatpush1.msra.mxu0 0.0
        %988 = vmatprep.subr.mxu0 0.0
        %989 = vmatpush1.msra.mxu0 0.0
        %990 = vmatprep.subr.mxu0 0.0
        %991 = vmatpush1.msra.mxu0 0.0
        %992 = vmatprep.subr.mxu0 0.0
        %993 = vmatpush1.msra.mxu0 0.0
        %994 = vmatprep.mubr.f32.mxu0 0.0
        %v995 = vand.u32 %v622, 4294901760
        %996 = vmatmul.mubr.f32.gmra.mrb[0].mxu0 %v995
        %v997 = vpop.f32.mrb[0].mxu0
        %v998 = vadd.f32 %v924, %v997
        %v999 = vpop.f32.mrb[0].mxu0
        %1000 = vdwg.mxu0
        %1001 = vmatprep.subr.mxu0 0.0
        %v1002 = vand.u32 %v625, 4294901760
        %1003 = vmatpush1.msra.mxu0 %v1002
        %1004 = vmatprep.subr.mxu0 0.0
        %1005 = vmatpush1.msra.mxu0 0.0
        %1006 = vmatprep.subr.mxu0 0.0
        %1007 = vmatpush1.msra.mxu0 0.0
        %1008 = vmatprep.subr.mxu0 0.0
        %1009 = vmatpush1.msra.mxu0 0.0
        %1010 = vmatprep.subr.mxu0 0.0
        %1011 = vmatpush1.msra.mxu0 0.0
        %1012 = vmatprep.subr.mxu0 0.0
        %1013 = vmatpush1.msra.mxu0 0.0
        %1014 = vmatprep.subr.mxu0 0.0
        %1015 = vmatpush1.msra.mxu0 0.0
        %1016 = vmatprep.subr.mxu0 0.0
        %1017 = vmatpush1.msra.mxu0 0.0
        %1018 = vmatprep.subr.mxu0 0.0
        %1019 = vmatpush1.msra.mxu0 0.0
        %1020 = vmatprep.subr.mxu0 0.0
        %1021 = vmatpush1.msra.mxu0 0.0
        %1022 = vmatprep.subr.mxu0 0.0
        %1023 = vmatpush1.msra.mxu0 0.0
        %1024 = vmatprep.subr.mxu0 0.0
        %1025 = vmatpush1.msra.mxu0 0.0
        %1026 = vmatprep.subr.mxu0 0.0
        %1027 = vmatpush1.msra.mxu0 0.0
        %1028 = vmatprep.subr.mxu0 0.0
        %1029 = vmatpush1.msra.mxu0 0.0
        %1030 = vmatprep.subr.mxu0 0.0
        %1031 = vmatpush1.msra.mxu0 0.0
        %1032 = vmatprep.subr.mxu0 0.0
        %1033 = vmatpush1.msra.mxu0 0.0
        %1034 = vmatprep.subr.mxu0 0.0
        %1035 = vmatpush1.msra.mxu0 0.0
        %1036 = vmatprep.subr.mxu0 0.0
        %1037 = vmatpush1.msra.mxu0 0.0
        %1038 = vmatprep.subr.mxu0 0.0
        %1039 = vmatpush1.msra.mxu0 0.0
        %1040 = vmatprep.subr.mxu0 0.0
        %1041 = vmatpush1.msra.mxu0 0.0
        %1042 = vmatprep.subr.mxu0 0.0
        %1043 = vmatpush1.msra.mxu0 0.0
        %1044 = vmatprep.subr.mxu0 0.0
        %1045 = vmatpush1.msra.mxu0 0.0
        %1046 = vmatprep.subr.mxu0 0.0
        %1047 = vmatpush1.msra.mxu0 0.0
        %1048 = vmatprep.subr.mxu0 0.0
        %1049 = vmatpush1.msra.mxu0 0.0
        %1050 = vmatprep.subr.mxu0 0.0
        %1051 = vmatpush1.msra.mxu0 0.0
        %1052 = vmatprep.subr.mxu0 0.0
        %1053 = vmatpush1.msra.mxu0 0.0
        %1054 = vmatprep.subr.mxu0 0.0
        %1055 = vmatpush1.msra.mxu0 0.0
        %1056 = vmatprep.subr.mxu0 0.0
        %1057 = vmatpush1.msra.mxu0 0.0
        %1058 = vmatprep.subr.mxu0 0.0
        %1059 = vmatpush1.msra.mxu0 0.0
        %1060 = vmatprep.subr.mxu0 0.0
        %1061 = vmatpush1.msra.mxu0 0.0
        %1062 = vmatprep.subr.mxu0 0.0
        %1063 = vmatpush1.msra.mxu0 0.0
        %1064 = vmatprep.subr.mxu0 0.0
        %1065 = vmatpush1.msra.mxu0 0.0
        %1066 = vmatprep.mubr.f32.mxu0 0.0
        %v1067 = vand.u32 %v622, 4294901760
        %1068 = vmatmul.mubr.f32.gmra.mrb[0].mxu0 %v1067
        %v1069 = vpop.f32.mrb[0].mxu0
        %v1070 = vadd.f32 %v998, %v1069
        %v1071 = vpop.f32.mrb[0].mxu0
        %1072 = vdwg.mxu0
        %s1073 = scalar_lea.vmem %s1, 8
        %v1074 = vld [vmem:[%s1073] sm:$0xf]
        %vm1075 = vcmask 1045504
        %v1076 = vrot.slane %v158, 2
        %v1077 = vrot.slane %v159, 2
        %v1078 = vsel %vm1075, %v1076, %v1077
        %v1079 = vsel %vm169, %v1078, 0
        %v1082 = vsel %vm172, %v1074, 0
        %1084 = vmatprep.subr.mxu0 0.0
        %v1085 = vand.u32 %v1082, 4294901760
        %1086 = vmatpush1.msra.mxu0 %v1085
        %1087 = vmatprep.subr.mxu0 0.0
        %1088 = vmatpush1.msra.mxu0 0.0
        %1089 = vmatprep.subr.mxu0 0.0
        %1090 = vmatpush1.msra.mxu0 0.0
        %1091 = vmatprep.subr.mxu0 0.0
        %1092 = vmatpush1.msra.mxu0 0.0
        %1093 = vmatprep.subr.mxu0 0.0
        %1094 = vmatpush1.msra.mxu0 0.0
        %1095 = vmatprep.subr.mxu0 0.0
        %1096 = vmatpush1.msra.mxu0 0.0
        %1097 = vmatprep.subr.mxu0 0.0
        %1098 = vmatpush1.msra.mxu0 0.0
        %1099 = vmatprep.subr.mxu0 0.0
        %1100 = vmatpush1.msra.mxu0 0.0
        %1101 = vmatprep.subr.mxu0 0.0
        %1102 = vmatpush1.msra.mxu0 0.0
        %1103 = vmatprep.subr.mxu0 0.0
        %1104 = vmatpush1.msra.mxu0 0.0
        %1105 = vmatprep.subr.mxu0 0.0
        %1106 = vmatpush1.msra.mxu0 0.0
        %1107 = vmatprep.subr.mxu0 0.0
        %1108 = vmatpush1.msra.mxu0 0.0
        %1109 = vmatprep.subr.mxu0 0.0
        %1110 = vmatpush1.msra.mxu0 0.0
        %1111 = vmatprep.subr.mxu0 0.0
        %1112 = vmatpush1.msra.mxu0 0.0
        %1113 = vmatprep.subr.mxu0 0.0
        %1114 = vmatpush1.msra.mxu0 0.0
        %1115 = vmatprep.subr.mxu0 0.0
        %1116 = vmatpush1.msra.mxu0 0.0
        %1117 = vmatprep.subr.mxu0 0.0
        %1118 = vmatpush1.msra.mxu0 0.0
        %1119 = vmatprep.subr.mxu0 0.0
        %1120 = vmatpush1.msra.mxu0 0.0
        %1121 = vmatprep.subr.mxu0 0.0
        %1122 = vmatpush1.msra.mxu0 0.0
        %1123 = vmatprep.subr.mxu0 0.0
        %1124 = vmatpush1.msra.mxu0 0.0
        %1125 = vmatprep.subr.mxu0 0.0
        %1126 = vmatpush1.msra.mxu0 0.0
        %1127 = vmatprep.subr.mxu0 0.0
        %1128 = vmatpush1.msra.mxu0 0.0
        %1129 = vmatprep.subr.mxu0 0.0
        %1130 = vmatpush1.msra.mxu0 0.0
        %1131 = vmatprep.subr.mxu0 0.0
        %1132 = vmatpush1.msra.mxu0 0.0
        %1133 = vmatprep.subr.mxu0 0.0
        %1134 = vmatpush1.msra.mxu0 0.0
        %1135 = vmatprep.subr.mxu0 0.0
        %1136 = vmatpush1.msra.mxu0 0.0
        %1137 = vmatprep.subr.mxu0 0.0
        %1138 = vmatpush1.msra.mxu0 0.0
        %1139 = vmatprep.subr.mxu0 0.0
        %1140 = vmatpush1.msra.mxu0 0.0
        %1141 = vmatprep.subr.mxu0 0.0
        %1142 = vmatpush1.msra.mxu0 0.0
        %1143 = vmatprep.subr.mxu0 0.0
        %1144 = vmatpush1.msra.mxu0 0.0
        %1145 = vmatprep.subr.mxu0 0.0
        %1146 = vmatpush1.msra.mxu0 0.0
        %1147 = vmatprep.subr.mxu0 0.0
        %1148 = vmatpush1.msra.mxu0 0.0
        %1149 = vmatprep.mubr.f32.mxu0 0.0
        %v1150 = vand.u32 %v1079, 4294901760
        %v1151 = vsub.f32 %v1079, %v1150
        %v1152 = vand.u32 %v1151, 4294901760
        %v1153 = vsub.f32 %v1151, %v1152
        %v1154 = vand.u32 %v1153, 4294901760
        %1155 = vmatmul.mubr.f32.gmra.mrb[0].mxu0 %v1154
        %v1156 = vpop.f32.mrb[0].mxu0
        %v1157 = vadd.f32 0.0, %v1156
        %v1158 = vpop.f32.mrb[0].mxu0
        %1159 = vdwg.mxu0
        %1160 = vmatprep.subr.mxu0 0.0
        %v1161 = vand.u32 %v1082, 4294901760
        %v1162 = vsub.f32 %v1082, %v1161
        %v1163 = vand.u32 %v1162, 4294901760
        %v1164 = vsub.f32 %v1162, %v1163
        %v1165 = vand.u32 %v1164, 4294901760
        %1166 = vmatpush1.msra.mxu0 %v1165
        %1167 = vmatprep.subr.mxu0 0.0
        %1168 = vmatpush1.msra.mxu0 0.0
        %1169 = vmatprep.subr.mxu0 0.0
        %1170 = vmatpush1.msra.mxu0 0.0
        %1171 = vmatprep.subr.mxu0 0.0
        %1172 = vmatpush1.msra.mxu0 0.0
        %1173 = vmatprep.subr.mxu0 0.0
        %1174 = vmatpush1.msra.mxu0 0.0
        %1175 = vmatprep.subr.mxu0 0.0
        %1176 = vmatpush1.msra.mxu0 0.0
        %1177 = vmatprep.subr.mxu0 0.0
        %1178 = vmatpush1.msra.mxu0 0.0
        %1179 = vmatprep.subr.mxu0 0.0
        %1180 = vmatpush1.msra.mxu0 0.0
        %1181 = vmatprep.subr.mxu0 0.0
        %1182 = vmatpush1.msra.mxu0 0.0
        %1183 = vmatprep.subr.mxu0 0.0
        %1184 = vmatpush1.msra.mxu0 0.0
        %1185 = vmatprep.subr.mxu0 0.0
        %1186 = vmatpush1.msra.mxu0 0.0
        %1187 = vmatprep.subr.mxu0 0.0
        %1188 = vmatpush1.msra.mxu0 0.0
        %1189 = vmatprep.subr.mxu0 0.0
        %1190 = vmatpush1.msra.mxu0 0.0
        %1191 = vmatprep.subr.mxu0 0.0
        %1192 = vmatpush1.msra.mxu0 0.0
        %1193 = vmatprep.subr.mxu0 0.0
        %1194 = vmatpush1.msra.mxu0 0.0
        %1195 = vmatprep.subr.mxu0 0.0
        %1196 = vmatpush1.msra.mxu0 0.0
        %1197 = vmatprep.subr.mxu0 0.0
        %1198 = vmatpush1.msra.mxu0 0.0
        %1199 = vmatprep.subr.mxu0 0.0
        %1200 = vmatpush1.msra.mxu0 0.0
        %1201 = vmatprep.subr.mxu0 0.0
        %1202 = vmatpush1.msra.mxu0 0.0
        %1203 = vmatprep.subr.mxu0 0.0
        %1204 = vmatpush1.msra.mxu0 0.0
        %1205 = vmatprep.subr.mxu0 0.0
        %1206 = vmatpush1.msra.mxu0 0.0
        %1207 = vmatprep.subr.mxu0 0.0
        %1208 = vmatpush1.msra.mxu0 0.0
        %1209 = vmatprep.subr.mxu0 0.0
        %1210 = vmatpush1.msra.mxu0 0.0
        %1211 = vmatprep.subr.mxu0 0.0
        %1212 = vmatpush1.msra.mxu0 0.0
        %1213 = vmatprep.subr.mxu0 0.0
        %1214 = vmatpush1.msra.mxu0 0.0
        %1215 = vmatprep.subr.mxu0 0.0
        %1216 = vmatpush1.msra.mxu0 0.0
        %1217 = vmatprep.subr.mxu0 0.0
        %1218 = vmatpush1.msra.mxu0 0.0
        %1219 = vmatprep.subr.mxu0 0.0
        %1220 = vmatpush1.msra.mxu0 0.0
        %1221 = vmatprep.subr.mxu0 0.0
        %1222 = vmatpush1.msra.mxu0 0.0
        %1223 = vmatprep.subr.mxu0 0.0
        %1224 = vmatpush1.msra.mxu0 0.0
        %1225 = vmatprep.subr.mxu0 0.0
        %1226 = vmatpush1.msra.mxu0 0.0
        %1227 = vmatprep.subr.mxu0 0.0
        %1228 = vmatpush1.msra.mxu0 0.0
        %1229 = vmatprep.mubr.f32.mxu0 0.0
        %v1230 = vand.u32 %v1079, 4294901760
        %1231 = vmatmul.mubr.f32.gmra.mrb[0].mxu0 %v1230
        %v1232 = vpop.f32.mrb[0].mxu0
        %v1233 = vadd.f32 %v1157, %v1232
        %v1234 = vpop.f32.mrb[0].mxu0
        %1235 = vdwg.mxu0
        %1236 = vmatprep.subr.mxu0 0.0
        %v1237 = vand.u32 %v1082, 4294901760
        %v1238 = vsub.f32 %v1082, %v1237
        %1239 = vmatpush1.msra.mxu0 %v1238
        %1240 = vmatprep.subr.mxu0 0.0
        %1241 = vmatpush1.msra.mxu0 0.0
        %1242 = vmatprep.subr.mxu0 0.0
        %1243 = vmatpush1.msra.mxu0 0.0
        %1244 = vmatprep.subr.mxu0 0.0
        %1245 = vmatpush1.msra.mxu0 0.0
        %1246 = vmatprep.subr.mxu0 0.0
        %1247 = vmatpush1.msra.mxu0 0.0
        %1248 = vmatprep.subr.mxu0 0.0
        %1249 = vmatpush1.msra.mxu0 0.0
        %1250 = vmatprep.subr.mxu0 0.0
        %1251 = vmatpush1.msra.mxu0 0.0
        %1252 = vmatprep.subr.mxu0 0.0
        %1253 = vmatpush1.msra.mxu0 0.0
        %1254 = vmatprep.subr.mxu0 0.0
        %1255 = vmatpush1.msra.mxu0 0.0
        %1256 = vmatprep.subr.mxu0 0.0
        %1257 = vmatpush1.msra.mxu0 0.0
        %1258 = vmatprep.subr.mxu0 0.0
        %1259 = vmatpush1.msra.mxu0 0.0
        %1260 = vmatprep.subr.mxu0 0.0
        %1261 = vmatpush1.msra.mxu0 0.0
        %1262 = vmatprep.subr.mxu0 0.0
        %1263 = vmatpush1.msra.mxu0 0.0
        %1264 = vmatprep.subr.mxu0 0.0
        %1265 = vmatpush1.msra.mxu0 0.0
        %1266 = vmatprep.subr.mxu0 0.0
        %1267 = vmatpush1.msra.mxu0 0.0
        %1268 = vmatprep.subr.mxu0 0.0
        %1269 = vmatpush1.msra.mxu0 0.0
        %1270 = vmatprep.subr.mxu0 0.0
        %1271 = vmatpush1.msra.mxu0 0.0
        %1272 = vmatprep.subr.mxu0 0.0
        %1273 = vmatpush1.msra.mxu0 0.0
        %1274 = vmatprep.subr.mxu0 0.0
        %1275 = vmatpush1.msra.mxu0 0.0
        %1276 = vmatprep.subr.mxu0 0.0
        %1277 = vmatpush1.msra.mxu0 0.0
        %1278 = vmatprep.subr.mxu0 0.0
        %1279 = vmatpush1.msra.mxu0 0.0
        %1280 = vmatprep.subr.mxu0 0.0
        %1281 = vmatpush1.msra.mxu0 0.0
        %1282 = vmatprep.subr.mxu0 0.0
        %1283 = vmatpush1.msra.mxu0 0.0
        %1284 = vmatprep.subr.mxu0 0.0
        %1285 = vmatpush1.msra.mxu0 0.0
        %1286 = vmatprep.subr.mxu0 0.0
        %1287 = vmatpush1.msra.mxu0 0.0
        %1288 = vmatprep.subr.mxu0 0.0
        %1289 = vmatpush1.msra.mxu0 0.0
        %1290 = vmatprep.subr.mxu0 0.0
        %1291 = vmatpush1.msra.mxu0 0.0
        %1292 = vmatprep.subr.mxu0 0.0
        %1293 = vmatpush1.msra.mxu0 0.0
        %1294 = vmatprep.subr.mxu0 0.0
        %1295 = vmatpush1.msra.mxu0 0.0
        %1296 = vmatprep.subr.mxu0 0.0
        %1297 = vmatpush1.msra.mxu0 0.0
        %1298 = vmatprep.subr.mxu0 0.0
        %1299 = vmatpush1.msra.mxu0 0.0
        %1300 = vmatprep.subr.mxu0 0.0
        %1301 = vmatpush1.msra.mxu0 0.0
        %1302 = vmatprep.mubr.f32.mxu0 0.0
        %v1303 = vand.u32 %v1079, 4294901760
        %v1304 = vsub.f32 %v1079, %v1303
        %1305 = vmatmul.mubr.f32.gmra.mrb[0].mxu0 %v1304
        %v1306 = vpop.f32.mrb[0].mxu0
        %v1307 = vadd.f32 %v1233, %v1306
        %v1308 = vpop.f32.mrb[0].mxu0
        %1309 = vdwg.mxu0
        %1310 = vmatprep.subr.mxu0 0.0
        %v1311 = vand.u32 %v1082, 4294901760
        %1312 = vmatpush1.msra.mxu0 %v1311
        %1313 = vmatprep.subr.mxu0 0.0
        %1314 = vmatpush1.msra.mxu0 0.0
        %1315 = vmatprep.subr.mxu0 0.0
        %1316 = vmatpush1.msra.mxu0 0.0
        %1317 = vmatprep.subr.mxu0 0.0
        %1318 = vmatpush1.msra.mxu0 0.0
        %1319 = vmatprep.subr.mxu0 0.0
        %1320 = vmatpush1.msra.mxu0 0.0
        %1321 = vmatprep.subr.mxu0 0.0
        %1322 = vmatpush1.msra.mxu0 0.0
        %1323 = vmatprep.subr.mxu0 0.0
        %1324 = vmatpush1.msra.mxu0 0.0
        %1325 = vmatprep.subr.mxu0 0.0
        %1326 = vmatpush1.msra.mxu0 0.0
        %1327 = vmatprep.subr.mxu0 0.0
        %1328 = vmatpush1.msra.mxu0 0.0
        %1329 = vmatprep.subr.mxu0 0.0
        %1330 = vmatpush1.msra.mxu0 0.0
        %1331 = vmatprep.subr.mxu0 0.0
        %1332 = vmatpush1.msra.mxu0 0.0
        %1333 = vmatprep.subr.mxu0 0.0
        %1334 = vmatpush1.msra.mxu0 0.0
        %1335 = vmatprep.subr.mxu0 0.0
        %1336 = vmatpush1.msra.mxu0 0.0
        %1337 = vmatprep.subr.mxu0 0.0
        %1338 = vmatpush1.msra.mxu0 0.0
        %1339 = vmatprep.subr.mxu0 0.0
        %1340 = vmatpush1.msra.mxu0 0.0
        %1341 = vmatprep.subr.mxu0 0.0
        %1342 = vmatpush1.msra.mxu0 0.0
        %1343 = vmatprep.subr.mxu0 0.0
        %1344 = vmatpush1.msra.mxu0 0.0
        %1345 = vmatprep.subr.mxu0 0.0
        %1346 = vmatpush1.msra.mxu0 0.0
        %1347 = vmatprep.subr.mxu0 0.0
        %1348 = vmatpush1.msra.mxu0 0.0
        %1349 = vmatprep.subr.mxu0 0.0
        %1350 = vmatpush1.msra.mxu0 0.0
        %1351 = vmatprep.subr.mxu0 0.0
        %1352 = vmatpush1.msra.mxu0 0.0
        %1353 = vmatprep.subr.mxu0 0.0
        %1354 = vmatpush1.msra.mxu0 0.0
        %1355 = vmatprep.subr.mxu0 0.0
        %1356 = vmatpush1.msra.mxu0 0.0
        %1357 = vmatprep.subr.mxu0 0.0
        %1358 = vmatpush1.msra.mxu0 0.0
        %1359 = vmatprep.subr.mxu0 0.0
        %1360 = vmatpush1.msra.mxu0 0.0
        %1361 = vmatprep.subr.mxu0 0.0
        %1362 = vmatpush1.msra.mxu0 0.0
        %1363 = vmatprep.subr.mxu0 0.0
        %1364 = vmatpush1.msra.mxu0 0.0
        %1365 = vmatprep.subr.mxu0 0.0
        %1366 = vmatpush1.msra.mxu0 0.0
        %1367 = vmatprep.subr.mxu0 0.0
        %1368 = vmatpush1.msra.mxu0 0.0
        %1369 = vmatprep.subr.mxu0 0.0
        %1370 = vmatpush1.msra.mxu0 0.0
        %1371 = vmatprep.subr.mxu0 0.0
        %1372 = vmatpush1.msra.mxu0 0.0
        %1373 = vmatprep.subr.mxu0 0.0
        %1374 = vmatpush1.msra.mxu0 0.0
        %1375 = vmatprep.mubr.f32.mxu0 0.0
        %v1376 = vand.u32 %v1079, 4294901760
        %v1377 = vsub.f32 %v1079, %v1376
        %v1378 = vand.u32 %v1377, 4294901760
        %1379 = vmatmul.mubr.f32.gmra.mrb[0].mxu0 %v1378
        %v1380 = vpop.f32.mrb[0].mxu0
        %v1381 = vadd.f32 %v1307, %v1380
        %v1382 = vpop.f32.mrb[0].mxu0
        %1383 = vdwg.mxu0
        %1384 = vmatprep.subr.mxu0 0.0
        %v1385 = vand.u32 %v1082, 4294901760
        %v1386 = vsub.f32 %v1082, %v1385
        %v1387 = vand.u32 %v1386, 4294901760
        %1388 = vmatpush1.msra.mxu0 %v1387
        %1389 = vmatprep.subr.mxu0 0.0
        %1390 = vmatpush1.msra.mxu0 0.0
        %1391 = vmatprep.subr.mxu0 0.0
        %1392 = vmatpush1.msra.mxu0 0.0
        %1393 = vmatprep.subr.mxu0 0.0
        %1394 = vmatpush1.msra.mxu0 0.0
        %1395 = vmatprep.subr.mxu0 0.0
        %1396 = vmatpush1.msra.mxu0 0.0
        %1397 = vmatprep.subr.mxu0 0.0
        %1398 = vmatpush1.msra.mxu0 0.0
        %1399 = vmatprep.subr.mxu0 0.0
        %1400 = vmatpush1.msra.mxu0 0.0
        %1401 = vmatprep.subr.mxu0 0.0
        %1402 = vmatpush1.msra.mxu0 0.0
        %1403 = vmatprep.subr.mxu0 0.0
        %1404 = vmatpush1.msra.mxu0 0.0
        %1405 = vmatprep.subr.mxu0 0.0
        %1406 = vmatpush1.msra.mxu0 0.0
        %1407 = vmatprep.subr.mxu0 0.0
        %1408 = vmatpush1.msra.mxu0 0.0
        %1409 = vmatprep.subr.mxu0 0.0
        %1410 = vmatpush1.msra.mxu0 0.0
        %1411 = vmatprep.subr.mxu0 0.0
        %1412 = vmatpush1.msra.mxu0 0.0
        %1413 = vmatprep.subr.mxu0 0.0
        %1414 = vmatpush1.msra.mxu0 0.0
        %1415 = vmatprep.subr.mxu0 0.0
        %1416 = vmatpush1.msra.mxu0 0.0
        %1417 = vmatprep.subr.mxu0 0.0
        %1418 = vmatpush1.msra.mxu0 0.0
        %1419 = vmatprep.subr.mxu0 0.0
        %1420 = vmatpush1.msra.mxu0 0.0
        %1421 = vmatprep.subr.mxu0 0.0
        %1422 = vmatpush1.msra.mxu0 0.0
        %1423 = vmatprep.subr.mxu0 0.0
        %1424 = vmatpush1.msra.mxu0 0.0
        %1425 = vmatprep.subr.mxu0 0.0
        %1426 = vmatpush1.msra.mxu0 0.0
        %1427 = vmatprep.subr.mxu0 0.0
        %1428 = vmatpush1.msra.mxu0 0.0
        %1429 = vmatprep.subr.mxu0 0.0
        %1430 = vmatpush1.msra.mxu0 0.0
        %1431 = vmatprep.subr.mxu0 0.0
        %1432 = vmatpush1.msra.mxu0 0.0
        %1433 = vmatprep.subr.mxu0 0.0
        %1434 = vmatpush1.msra.mxu0 0.0
        %1435 = vmatprep.subr.mxu0 0.0
        %1436 = vmatpush1.msra.mxu0 0.0
        %1437 = vmatprep.subr.mxu0 0.0
        %1438 = vmatpush1.msra.mxu0 0.0
        %1439 = vmatprep.subr.mxu0 0.0
        %1440 = vmatpush1.msra.mxu0 0.0
        %1441 = vmatprep.subr.mxu0 0.0
        %1442 = vmatpush1.msra.mxu0 0.0
        %1443 = vmatprep.subr.mxu0 0.0
        %1444 = vmatpush1.msra.mxu0 0.0
        %1445 = vmatprep.subr.mxu0 0.0
        %1446 = vmatpush1.msra.mxu0 0.0
        %1447 = vmatprep.subr.mxu0 0.0
        %1448 = vmatpush1.msra.mxu0 0.0
        %1449 = vmatprep.subr.mxu0 0.0
        %1450 = vmatpush1.msra.mxu0 0.0
        %1451 = vmatprep.mubr.f32.mxu0 0.0
        %v1452 = vand.u32 %v1079, 4294901760
        %1453 = vmatmul.mubr.f32.gmra.mrb[0].mxu0 %v1452
        %v1454 = vpop.f32.mrb[0].mxu0
        %v1455 = vadd.f32 %v1381, %v1454
        %v1456 = vpop.f32.mrb[0].mxu0
        %1457 = vdwg.mxu0
        %1458 = vmatprep.subr.mxu0 0.0
        %v1459 = vand.u32 %v1082, 4294901760
        %1460 = vmatpush1.msra.mxu0 %v1459
        %1461 = vmatprep.subr.mxu0 0.0
        %1462 = vmatpush1.msra.mxu0 0.0
        %1463 = vmatprep.subr.mxu0 0.0
        %1464 = vmatpush1.msra.mxu0 0.0
        %1465 = vmatprep.subr.mxu0 0.0
        %1466 = vmatpush1.msra.mxu0 0.0
        %1467 = vmatprep.subr.mxu0 0.0
        %1468 = vmatpush1.msra.mxu0 0.0
        %1469 = vmatprep.subr.mxu0 0.0
        %1470 = vmatpush1.msra.mxu0 0.0
        %1471 = vmatprep.subr.mxu0 0.0
        %1472 = vmatpush1.msra.mxu0 0.0
        %1473 = vmatprep.subr.mxu0 0.0
        %1474 = vmatpush1.msra.mxu0 0.0
        %1475 = vmatprep.subr.mxu0 0.0
        %1476 = vmatpush1.msra.mxu0 0.0
        %1477 = vmatprep.subr.mxu0 0.0
        %1478 = vmatpush1.msra.mxu0 0.0
        %1479 = vmatprep.subr.mxu0 0.0
        %1480 = vmatpush1.msra.mxu0 0.0
        %1481 = vmatprep.subr.mxu0 0.0
        %1482 = vmatpush1.msra.mxu0 0.0
        %1483 = vmatprep.subr.mxu0 0.0
        %1484 = vmatpush1.msra.mxu0 0.0
        %1485 = vmatprep.subr.mxu0 0.0
        %1486 = vmatpush1.msra.mxu0 0.0
        %1487 = vmatprep.subr.mxu0 0.0
        %1488 = vmatpush1.msra.mxu0 0.0
        %1489 = vmatprep.subr.mxu0 0.0
        %1490 = vmatpush1.msra.mxu0 0.0
        %1491 = vmatprep.subr.mxu0 0.0
        %1492 = vmatpush1.msra.mxu0 0.0
        %1493 = vmatprep.subr.mxu0 0.0
        %1494 = vmatpush1.msra.mxu0 0.0
        %1495 = vmatprep.subr.mxu0 0.0
        %1496 = vmatpush1.msra.mxu0 0.0
        %1497 = vmatprep.subr.mxu0 0.0
        %1498 = vmatpush1.msra.mxu0 0.0
        %1499 = vmatprep.subr.mxu0 0.0
        %1500 = vmatpush1.msra.mxu0 0.0
        %1501 = vmatprep.subr.mxu0 0.0
        %1502 = vmatpush1.msra.mxu0 0.0
        %1503 = vmatprep.subr.mxu0 0.0
        %1504 = vmatpush1.msra.mxu0 0.0
        %1505 = vmatprep.subr.mxu0 0.0
        %1506 = vmatpush1.msra.mxu0 0.0
        %1507 = vmatprep.subr.mxu0 0.0
        %1508 = vmatpush1.msra.mxu0 0.0
        %1509 = vmatprep.subr.mxu0 0.0
        %1510 = vmatpush1.msra.mxu0 0.0
        %1511 = vmatprep.subr.mxu0 0.0
        %1512 = vmatpush1.msra.mxu0 0.0
        %1513 = vmatprep.subr.mxu0 0.0
        %1514 = vmatpush1.msra.mxu0 0.0
        %1515 = vmatprep.subr.mxu0 0.0
        %1516 = vmatpush1.msra.mxu0 0.0
        %1517 = vmatprep.subr.mxu0 0.0
        %1518 = vmatpush1.msra.mxu0 0.0
        %1519 = vmatprep.subr.mxu0 0.0
        %1520 = vmatpush1.msra.mxu0 0.0
        %1521 = vmatprep.subr.mxu0 0.0
        %1522 = vmatpush1.msra.mxu0 0.0
        %1523 = vmatprep.mubr.f32.mxu0 0.0
        %v1524 = vand.u32 %v1079, 4294901760
        %1525 = vmatmul.mubr.f32.gmra.mrb[0].mxu0 %v1524
        %v1526 = vpop.f32.mrb[0].mxu0
        %v1527 = vadd.f32 %v1455, %v1526
        %v1528 = vpop.f32.mrb[0].mxu0
        %1529 = vdwg.mxu0
        %v1530 = vadd.f32 %v1070, %v1527
        %v1531 = vlaneseq
        %v1532 = vshrl.u32 %v1531, 7
        %v1533 = vstv %s156
        %v1534 = vadd.s32 %v1533, %v1532
        %vm1535 = vcmp.lt.s32.totalorder %v1534, 18
        %v1536 = vsel %vm1535, 1, 0
        %vm1537 = vcmp.eq.s32.totalorder %v1536, 1
        %v1538 = vsel %vm1537, %v1530, 0.0
        %vm1539 = vcmask 64512
        %v1540 = vsel %vm1539, %v1538, 0.0
        %v1541 = vrot.slane %v1540, 4
        %v1542 = vadd.f32 %v1540, %v1541
        %v1543 = vrot.slane %v1542, 2
        %v1544 = vadd.f32 %v1542, %v1543
        %v1545 = vrot.slane %v1544, 1
        %v1546 = vadd.f32 %v1544, %v1545
        %vm1547 = vcmask 57344
        %1548 = vst.msk [vmem:[%s150] sm:$0x1] %vm1547, %v1546
        %v1549 = vmul.f32 %v1538, %v1538
        %v1550 = vsel %vm1539, %v1549, 0.0
        %v1551 = vrot.slane %v1550, 4
        %v1552 = vadd.f32 %v1550, %v1551
        %v1553 = vrot.slane %v1552, 2
        %v1554 = vadd.f32 %v1552, %v1553
        %v1555 = vrot.slane %v1554, 1
        %v1556 = vadd.f32 %v1554, %v1555
        %1557 = vst.msk [vmem:[%s150 + $0x1] sm:$0x1] %vm1547, %v1556
        %s1558 = sand.u32 %s85, 1
        %s1559 = scalar_lea.sflag [#allocation3], %s1558
        %s1560 = sand.u32 %s85, 1
        %s1561 = smul.addr %s1560, 2
        %s1562 = scalar_lea.vmem [#allocation2], %s1561
        // Predicated region
        $region29: #{tpu_custom_call.1} parent=27 // pred_check
          %p1563 = pneg %p95
        $region30: #{tpu_custom_call.1} parent=27 // pred_check_branch
          %1565 = sbr.rel (%p1563) target = $region32
        $region31: #{tpu_custom_call.1} parent=27 // pred_region
          %s1567 = ssub.s32 32, 32
          %1568 = vsyncadd %s1559, %s1567
          %s1569 = smul.addr %s20, 3
          %s1570 = sadd.s32 %s21, %s1569
          %s1571 = smul.addr %s1570, 32
          %s1572 = scalar_lea.hbm %s2, %s1571
          %s1574 = sshll.u32 %s1562, 4
          %s1575 = int_to_ptr.vmem [resolvable:$true] %s1574
          %1577 = dma.vmem_to_hbm [thread:$0]  %s1575, 32, %s1572, %s1559
        $region32: #{tpu_custom_call.1} parent=27 // pred_fallthru
          _
      $region28: #{tpu_custom_call.1} parent=5 // pred_fallthru
        _
      %p1578 = scmp.le.s32.totalorder 2, %s11
      // Predicated region
      $region33: #{tpu_custom_call.1} parent=5 // pred_check
        %p1579 = pneg %p1578
      $region34: #{tpu_custom_call.1} parent=5 // pred_check_branch
        %1581 = sbr.rel (%p1579) target = $region36
      $region35: #{tpu_custom_call.1} parent=5 // pred_region
        %s1582 = ssub.s32 %s11, 2
        // Predicated region
        $region37: #{tpu_custom_call.1} parent=35 // pred_check
          %p1583 = pneg %p101
        $region38: #{tpu_custom_call.1} parent=35 // pred_check_branch
          %1585 = sbr.rel (%p1583) target = $region40
        $region39: #{tpu_custom_call.1} parent=35 // pred_region
          %s1586 = sand.u32 %s86, 1
          %s1587 = scalar_lea.sflag [#allocation3], %s1586
          %s1588 = sand.u32 %s86, 1
          %s1589 = smul.addr %s1588, 2
          %s1590 = scalar_lea.vmem [#allocation2], %s1589
          %1591 = dma.done %s1587, 32
        $region40: #{tpu_custom_call.1} parent=35 // pred_fallthru
          _
      $region36: #{tpu_custom_call.1} parent=5 // pred_fallthru
        _
    $region6: #{tpu_custom_call.1} parent=1 // loop_footer
      %s15 = sadd.s32 1, %s11
    $region7: #{tpu_custom_call.1} parent=1 // loop_footer_branch
      %10 = sbr.rel target = $region3
    $region8: #{tpu_custom_call.1} parent=1 // loop_exit
      _
    %1592 = vsyncpa [#allocation3], 1
    %s1593 = scalar_lea.sflag [#allocation3], 1
    %1594 = vsyncpa %s1593, 1

// kernel: tpu_custom_call.1
$region0: #{tpu_custom_call.1}
  #allocation0 [shape = 'u32[]', space=smem, size = 0x4, offset = 0x4, fixed_abs, tag = 'smem constant byte address 0x4 - core index']
  #allocation1 [shape = 'u32[144,128]{1,0:T(1,128)}', space=vmem, size = 0x12000, scoped, tag = 'internal scratch']
  %s0 = inlined_call_operand.vmem [shape: f32[2,26,4], index: 0, kind: input, shape index: {}]
  %s1 = inlined_call_operand.vmem [shape: f32[3,4,8], index: 1, kind: input, shape index: {}]
  %s2 = inlined_call_operand.hbm [shape: f32[2,3,2,8], index: 2, kind: output, shape index: {}]
  %s3 = sld [smem:[#allocation0]]
  $region41: #{tpu_custom_call.1} parent=0
    _
  %s5 = ssub.s32 1, %s3
  %s6 = scalar_select 0, %s5, %s3
  $region1: #{tpu_custom_call.1} parent=0
    #allocation2 [shape = 'u8[2048]{0}', space=vmem, size = 0x800, scoped, tag = 'output window, operand 0']
    #allocation3 [shape = 's32[2]{0}', space=sflag, size = 0x8, scoped, tag = 'scoped memory for tpu_custom_call.1']
    %7 = vsyncpa [#allocation3], 0
    %s8 = scalar_lea.sflag [#allocation3], 1
    %9 = vsyncpa %s8, 0
    loop: start=0, step=1, limit=8
    $region2: #{tpu_custom_call.1} parent=1 // loop_pre_header
      _
    $region3: #{tpu_custom_call.1} parent=1 // loop_header
      %s11 = sphi 0, %s15
      %p12 = scmp.ge.s32.totalorder %s11, 8
      %s18 = sphi 0, %s30
      %s19 = sphi 0, %s26
      %s20 = sphi 0, %s18
      %s21 = sphi 0, %s19
      %s22 = sphi 0, %s20
      %s23 = sphi 0, %s21
      %s33 = sphi 0, %s35
      %s36 = sphi 0, %s33
      %s37 = sphi 0, %s36
      %s53 = sphi 0, %s37
      %s57 = sphi 0, %s57
      %s59 = sphi 0, %s57
      %s60 = sphi 0, %s59
      %s74 = sphi 0, %s60
      %s82 = sphi 0, %s84
      %s85 = sphi 0, %s82
      %s86 = sphi 0, %s85
      %s102 = sphi 0, %s86
    $region4: #{tpu_custom_call.1} parent=1 // loop_header_branch
      %14 = sbr.rel (%p12) target = $region8
    $region5: #{tpu_custom_call.1} parent=1 // loop_body
      %s16 = ssub.s32 %s11, 1
      %s17 = ssub.s32 %s11, 2
      %s24 = sadd.s32 1, %s19
      %p25 = scmp.ge.s32.totalorder %s24, 3
      %s26 = scalar_select %p25, 0, %s24
      %s27 = sadd.s32 1, %s18
      %s28 = scalar_select %p25, %s27, %s18
      %p29 = scmp.ge.s32.totalorder %s28, 2
      %s30 = scalar_select %p29, 0, %s28
      %s31 = ssub.s32 %s18, %s30
      %p32 = scmp.eq.s32.totalorder %s31, 0
      %s34 = sadd.s32 %s33, 1
      %s35 = scalar_select %p32, %s33, %s34
      %p38 = pneg %p32
      %p39 = scmp.eq.s32.totalorder %s11, 5
      %p40 = por %p38, %p39
      %p41 = scmp.ne.s32.totalorder %s33, %s36
      %p42 = scmp.eq.s32.totalorder %s11, 0
      %p43 = por %p41, %p42
      %p44 = scmp.ne.s32.totalorder %s33, %s36
      %p45 = scmp.eq.s32.totalorder %s16, 5
      %p46 = por %p44, %p45
      %p47 = scmp.ne.s32.totalorder %s36, %s37
      %p48 = scmp.eq.s32.totalorder %s16, 0
      %p49 = por %p47, %p48
      %p50 = scmp.ne.s32.totalorder %s36, %s37
      %p51 = scmp.eq.s32.totalorder %s17, 5
      %p52 = por %p50, %p51
      %p54 = scmp.ne.s32.totalorder %s37, %s53
      %p55 = scmp.eq.s32.totalorder %s17, 0
      %p56 = por %p54, %p55
      %s58 = sadd.s32 %s57, 1
      %p61 = scmp.eq.s32.totalorder %s11, 5
      %p62 = scmp.ne.s32.totalorder %s57, %s59
      %p63 = scmp.eq.s32.totalorder %s11, 0
      %p64 = por %p62, %p63
      %p65 = scmp.ne.s32.totalorder %s57, %s59
      %p66 = scmp.eq.s32.totalorder %s16, 5
      %p67 = por %p65, %p66
      %p68 = scmp.ne.s32.totalorder %s59, %s60
      %p69 = scmp.eq.s32.totalorder %s16, 0
      %p70 = por %p68, %p69
      %p71 = scmp.ne.s32.totalorder %s59, %s60
      %p72 = scmp.eq.s32.totalorder %s17, 5
      %p73 = por %p71, %p72
      %p75 = scmp.ne.s32.totalorder %s60, %s74
      %p76 = scmp.eq.s32.totalorder %s17, 0
      %p77 = por %p75, %p76
      %s78 = ssub.s32 %s18, %s30
      %s79 = ssub.s32 %s19, %s26
      %s80 = sor.u32 %s78, %s79
      %p81 = scmp.eq.s32.totalorder %s80, 0
      %s83 = sadd.s32 %s82, 1
      %s84 = scalar_select %p81, %s82, %s83
      %p87 = pneg %p81
      %p88 = scmp.eq.s32.totalorder %s11, 5
      %p89 = por %p87, %p88
      %p90 = scmp.ne.s32.totalorder %s82, %s85
      %p91 = scmp.eq.s32.totalorder %s11, 0
      %p92 = por %p90, %p91
      %p93 = scmp.ne.s32.totalorder %s82, %s85
      %p94 = scmp.eq.s32.totalorder %s16, 5
      %p95 = por %p93, %p94
      %p96 = scmp.ne.s32.totalorder %s85, %s86
      %p97 = scmp.eq.s32.totalorder %s16, 0
      %p98 = por %p96, %p97
      %p99 = scmp.ne.s32.totalorder %s85, %s86
      %p100 = scmp.eq.s32.totalorder %s17, 5
      %p101 = por %p99, %p100
      %p103 = scmp.ne.s32.totalorder %s86, %s102
      %p104 = scmp.eq.s32.totalorder %s17, 0
      %p105 = por %p103, %p104
      %p106 = scmp.le.s32.totalorder 1, %s11
      %p107 = scmp.lt.s32.totalorder %s11, 7
      %p108 = pnand %p106, %p107
      %p109 = pneg %p108
      // Predicated region
      $region9: #{tpu_custom_call.1} parent=5 // pred_check
        _
      $region10: #{tpu_custom_call.1} parent=5 // pred_check_branch
        %111 = sbr.rel (%p108) target = $region12
      $region11: #{tpu_custom_call.1} parent=5 // pred_region
        %s112 = ssub.s32 %s11, 1
        // Predicated region
        $region13: #{tpu_custom_call.1} parent=11 // pred_check
          %p113 = pneg %p70
        $region14: #{tpu_custom_call.1} parent=11 // pred_check_branch
          %115 = sbr.rel (%p113) target = $region16
        $region15: #{tpu_custom_call.1} parent=11 // pred_region
          _
        $region16: #{tpu_custom_call.1} parent=11 // pred_fallthru
          _
      $region12: #{tpu_custom_call.1} parent=5 // pred_fallthru
        _
      %p116 = scmp.lt.s32.totalorder %s11, 6
      // Predicated region
      $region17: #{tpu_custom_call.1} parent=5 // pred_check
        %p117 = pneg %p116
      $region18: #{tpu_custom_call.1} parent=5 // pred_check_branch
        %119 = sbr.rel (%p117) target = $region20
      $region19: #{tpu_custom_call.1} parent=5 // pred_region
        // Predicated region
        $region21: #{tpu_custom_call.1} parent=19 // pred_check
          %p120 = pneg %p43
        $region22: #{tpu_custom_call.1} parent=19 // pred_check_branch
          %122 = sbr.rel (%p120) target = $region24
        $region23: #{tpu_custom_call.1} parent=19 // pred_region
          %p123 = scmp.lt.s32.totalorder %s18, 1
          %s124 = scalar_select %p123, %s18, 1
          %s125 = smul.addr %s124, 4
          %s126 = smul.addr %s125, 8
          %s127 = scalar_lea.vmem %s0, %s126
        $region24: #{tpu_custom_call.1} parent=19 // pred_fallthru
          _
      $region20: #{tpu_custom_call.1} parent=5 // pred_fallthru
        _
      %p128 = scmp.le.s32.totalorder 1, %s11
      %p129 = scmp.lt.s32.totalorder %s11, 7
      %p130 = pnand %p128, %p129
      %p131 = pneg %p130
      // Predicated region
      $region25: #{tpu_custom_call.1} parent=5 // pred_check
        _
      $region26: #{tpu_custom_call.1} parent=5 // pred_check_branch
        %133 = sbr.rel (%p130) target = $region28
      $region27: #{tpu_custom_call.1} parent=5 // pred_region
        %s134 = ssub.s32 %s11, 1
        %p135 = scmp.lt.s32.totalorder %s20, 1
        %s136 = scalar_select %p135, %s20, 1
        %s137 = smul.addr %s136, 4
        %s138 = smul.addr %s137, 8
        %s139 = scalar_lea.vmem %s0, %s138
        %p140 = pneg %p49
        %p141 = pneg %p46
        %p142 = pneg %p70
        %p143 = pneg %p67
        %p144 = pneg %p98
        %p145 = pneg %p95
        %s146 = sand.u32 %s85, 1
        %s147 = scalar_lea.sflag [#allocation3], %s146
        %s148 = sand.u32 %s85, 1
        %s149 = smul.addr %s148, 2
        %s150 = scalar_lea.vmem [#allocation2], %s149
        %p151 = scmp.lt.s32.totalorder %s20, 1
        %s152 = scalar_select %p151, %s20, 1
        %s153 = smul.addr %s152, 4
        %s154 = smul.addr %s153, 8
        %s155 = scalar_lea.vmem %s0, %s154
        %s156 = smul.u32 %s21, 8
        %s157 = scalar_lea.vmem %s155, %s156
        %v158 = vld [vmem:[%s157] sm:$0xff]
        %v159 = vld [vmem:[%s157 + $0x8] sm:$0x3]
        %v160 = vld [vmem:[%s1] sm:$0xf]
        %s161 = scalar_lea.vmem %s1, 4
        %v162 = vld [vmem:[%s161] sm:$0xf]
        %vm165 = vcmask 1046528
        %v166 = vrot.slane %v158, 1
        %v167 = vrot.slane %v159, 1
        %v168 = vsel %vm165, %v166, %v167
        %vm169 = vcmask 31744
        %v170 = vsel %vm169, %v168, 0
        %vm172 = vcmask 1043456
        %v174 = vsel %vm172, %v162, 0
        %176 = vmatprep.subr.mxu0 0.0
        %v177 = vand.u32 %v174, 4294901760
        %178 = vmatpush1.msra.mxu0 %v177
        %179 = vmatprep.subr.mxu0 0.0
        %180 = vmatpush1.msra.mxu0 0.0
        %181 = vmatprep.subr.mxu0 0.0
        %182 = vmatpush1.msra.mxu0 0.0
        %183 = vmatprep.subr.mxu0 0.0
        %184 = vmatpush1.msra.mxu0 0.0
        %185 = vmatprep.subr.mxu0 0.0
        %186 = vmatpush1.msra.mxu0 0.0
        %187 = vmatprep.subr.mxu0 0.0
        %188 = vmatpush1.msra.mxu0 0.0
        %189 = vmatprep.subr.mxu0 0.0
        %190 = vmatpush1.msra.mxu0 0.0
        %191 = vmatprep.subr.mxu0 0.0
        %192 = vmatpush1.msra.mxu0 0.0
        %193 = vmatprep.subr.mxu0 0.0
        %194 = vmatpush1.msra.mxu0 0.0
        %195 = vmatprep.subr.mxu0 0.0
        %196 = vmatpush1.msra.mxu0 0.0
        %197 = vmatprep.subr.mxu0 0.0
        %198 = vmatpush1.msra.mxu0 0.0
        %199 = vmatprep.subr.mxu0 0.0
        %200 = vmatpush1.msra.mxu0 0.0
        %201 = vmatprep.subr.mxu0 0.0
        %202 = vmatpush1.msra.mxu0 0.0
        %203 = vmatprep.subr.mxu0 0.0
        %204 = vmatpush1.msra.mxu0 0.0
        %205 = vmatprep.subr.mxu0 0.0
        %206 = vmatpush1.msra.mxu0 0.0
        %207 = vmatprep.subr.mxu0 0.0
        %208 = vmatpush1.msra.mxu0 0.0
        %209 = vmatprep.subr.mxu0 0.0
        %210 = vmatpush1.msra.mxu0 0.0
        %211 = vmatprep.subr.mxu0 0.0
        %212 = vmatpush1.msra.mxu0 0.0
        %213 = vmatprep.subr.mxu0 0.0
        %214 = vmatpush1.msra.mxu0 0.0
        %215 = vmatprep.subr.mxu0 0.0
        %216 = vmatpush1.msra.mxu0 0.0
        %217 = vmatprep.subr.mxu0 0.0
        %218 = vmatpush1.msra.mxu0 0.0
        %219 = vmatprep.subr.mxu0 0.0
        %220 = vmatpush1.msra.mxu0 0.0
        %221 = vmatprep.subr.mxu0 0.0
        %222 = vmatpush1.msra.mxu0 0.0
        %223 = vmatprep.subr.mxu0 0.0
        %224 = vmatpush1.msra.mxu0 0.0
        %225 = vmatprep.subr.mxu0 0.0
        %226 = vmatpush1.msra.mxu0 0.0
        %227 = vmatprep.subr.mxu0 0.0
        %228 = vmatpush1.msra.mxu0 0.0
        %229 = vmatprep.subr.mxu0 0.0
        %230 = vmatpush1.msra.mxu0 0.0
        %231 = vmatprep.subr.mxu0 0.0
        %232 = vmatpush1.msra.mxu0 0.0
        %233 = vmatprep.subr.mxu0 0.0
        %234 = vmatpush1.msra.mxu0 0.0
        %235 = vmatprep.subr.mxu0 0.0
        %236 = vmatpush1.msra.mxu0 0.0
        %237 = vmatprep.subr.mxu0 0.0
        %238 = vmatpush1.msra.mxu0 0.0
        %239 = vmatprep.subr.mxu0 0.0
        %240 = vmatpush1.msra.mxu0 0.0
        %241 = vmatprep.mubr.f32.mxu0 0.0
        %v242 = vand.u32 %v170, 4294901760
        %v243 = vsub.f32 %v170, %v242
        %v244 = vand.u32 %v243, 4294901760
        %v245 = vsub.f32 %v243, %v244
        %v246 = vand.u32 %v245, 4294901760
        %247 = vmatmul.mubr.f32.gmra.mrb[0].mxu0 %v246
        %v248 = vpop.f32.mrb[0].mxu0
        %v249 = vadd.f32 0.0, %v248
        %v250 = vpop.f32.mrb[0].mxu0
        %251 = vdwg.mxu0
        %252 = vmatprep.subr.mxu0 0.0
        %v253 = vand.u32 %v174, 4294901760
        %v254 = vsub.f32 %v174, %v253
        %v255 = vand.u32 %v254, 4294901760
        %v256 = vsub.f32 %v254, %v255
        %v257 = vand.u32 %v256, 4294901760
        %258 = vmatpush1.msra.mxu0 %v257
        %259 = vmatprep.subr.mxu0 0.0
        %260 = vmatpush1.msra.mxu0 0.0
        %261 = vmatprep.subr.mxu0 0.0
        %262 = vmatpush1.msra.mxu0 0.0
        %263 = vmatprep.subr.mxu0 0.0
        %264 = vmatpush1.msra.mxu0 0.0
        %265 = vmatprep.subr.mxu0 0.0
        %266 = vmatpush1.msra.mxu0 0.0
        %267 = vmatprep.subr.mxu0 0.0
        %268 = vmatpush1.msra.mxu0 0.0
        %269 = vmatprep.subr.mxu0 0.0
        %270 = vmatpush1.msra.mxu0 0.0
        %271 = vmatprep.subr.mxu0 0.0
        %272 = vmatpush1.msra.mxu0 0.0
        %273 = vmatprep.subr.mxu0 0.0
        %274 = vmatpush1.msra.mxu0 0.0
        %275 = vmatprep.subr.mxu0 0.0
        %276 = vmatpush1.msra.mxu0 0.0
        %277 = vmatprep.subr.mxu0 0.0
        %278 = vmatpush1.msra.mxu0 0.0
        %279 = vmatprep.subr.mxu0 0.0
        %280 = vmatpush1.msra.mxu0 0.0
        %281 = vmatprep.subr.mxu0 0.0
        %282 = vmatpush1.msra.mxu0 0.0
        %283 = vmatprep.subr.mxu0 0.0
        %284 = vmatpush1.msra.mxu0 0.0
        %285 = vmatprep.subr.mxu0 0.0
        %286 = vmatpush1.msra.mxu0 0.0
        %287 = vmatprep.subr.mxu0 0.0
        %288 = vmatpush1.msra.mxu0 0.0
        %289 = vmatprep.subr.mxu0 0.0
        %290 = vmatpush1.msra.mxu0 0.0
        %291 = vmatprep.subr.mxu0 0.0
        %292 = vmatpush1.msra.mxu0 0.0
        %293 = vmatprep.subr.mxu0 0.0
        %294 = vmatpush1.msra.mxu0 0.0
        %295 = vmatprep.subr.mxu0 0.0
        %296 = vmatpush1.msra.mxu0 0.0
        %297 = vmatprep.subr.mxu0 0.0
        %298 = vmatpush1.msra.mxu0 0.0
        %299 = vmatprep.subr.mxu0 0.0
        %300 = vmatpush1.msra.mxu0 0.0
        %301 = vmatprep.subr.mxu0 0.0
        %302 = vmatpush1.msra.mxu0 0.0
        %303 = vmatprep.subr.mxu0 0.0
        %304 = vmatpush1.msra.mxu0 0.0
        %305 = vmatprep.subr.mxu0 0.0
        %306 = vmatpush1.msra.mxu0 0.0
        %307 = vmatprep.subr.mxu0 0.0
        %308 = vmatpush1.msra.mxu0 0.0
        %309 = vmatprep.subr.mxu0 0.0
        %310 = vmatpush1.msra.mxu0 0.0
        %311 = vmatprep.subr.mxu0 0.0
        %312 = vmatpush1.msra.mxu0 0.0
        %313 = vmatprep.subr.mxu0 0.0
        %314 = vmatpush1.msra.mxu0 0.0
        %315 = vmatprep.subr.mxu0 0.0
        %316 = vmatpush1.msra.mxu0 0.0
        %317 = vmatprep.subr.mxu0 0.0
        %318 = vmatpush1.msra.mxu0 0.0
        %319 = vmatprep.subr.mxu0 0.0
        %320 = vmatpush1.msra.mxu0 0.0
        %321 = vmatprep.mubr.f32.mxu0 0.0
        %v322 = vand.u32 %v170, 4294901760
        %323 = vmatmul.mubr.f32.gmra.mrb[0].mxu0 %v322
        %v324 = vpop.f32.mrb[0].mxu0
        %v325 = vadd.f32 %v249, %v324
        %v326 = vpop.f32.mrb[0].mxu0
        %327 = vdwg.mxu0
        %328 = vmatprep.subr.mxu0 0.0
        %v329 = vand.u32 %v174, 4294901760
        %v330 = vsub.f32 %v174, %v329
        %331 = vmatpush1.msra.mxu0 %v330
        %332 = vmatprep.subr.mxu0 0.0
        %333 = vmatpush1.msra.mxu0 0.0
        %334 = vmatprep.subr.mxu0 0.0
        %335 = vmatpush1.msra.mxu0 0.0
        %336 = vmatprep.subr.mxu0 0.0
        %337 = vmatpush1.msra.mxu0 0.0
        %338 = vmatprep.subr.mxu0 0.0
        %339 = vmatpush1.msra.mxu0 0.0
        %340 = vmatprep.subr.mxu0 0.0
        %341 = vmatpush1.msra.mxu0 0.0
        %342 = vmatprep.subr.mxu0 0.0
        %343 = vmatpush1.msra.mxu0 0.0
        %344 = vmatprep.subr.mxu0 0.0
        %345 = vmatpush1.msra.mxu0 0.0
        %346 = vmatprep.subr.mxu0 0.0
        %347 = vmatpush1.msra.mxu0 0.0
        %348 = vmatprep.subr.mxu0 0.0
        %349 = vmatpush1.msra.mxu0 0.0
        %350 = vmatprep.subr.mxu0 0.0
        %351 = vmatpush1.msra.mxu0 0.0
        %352 = vmatprep.subr.mxu0 0.0
        %353 = vmatpush1.msra.mxu0 0.0
        %354 = vmatprep.subr.mxu0 0.0
        %355 = vmatpush1.msra.mxu0 0.0
        %356 = vmatprep.subr.mxu0 0.0
        %357 = vmatpush1.msra.mxu0 0.0
        %358 = vmatprep.subr.mxu0 0.0
        %359 = vmatpush1.msra.mxu0 0.0
        %360 = vmatprep.subr.mxu0 0.0
        %361 = vmatpush1.msra.mxu0 0.0
        %362 = vmatprep.subr.mxu0 0.0
        %363 = vmatpush1.msra.mxu0 0.0
        %364 = vmatprep.subr.mxu0 0.0
        %365 = vmatpush1.msra.mxu0 0.0
        %366 = vmatprep.subr.mxu0 0.0
        %367 = vmatpush1.msra.mxu0 0.0
        %368 = vmatprep.subr.mxu0 0.0
        %369 = vmatpush1.msra.mxu0 0.0
        %370 = vmatprep.subr.mxu0 0.0
        %371 = vmatpush1.msra.mxu0 0.0
        %372 = vmatprep.subr.mxu0 0.0
        %373 = vmatpush1.msra.mxu0 0.0
        %374 = vmatprep.subr.mxu0 0.0
        %375 = vmatpush1.msra.mxu0 0.0
        %376 = vmatprep.subr.mxu0 0.0
        %377 = vmatpush1.msra.mxu0 0.0
        %378 = vmatprep.subr.mxu0 0.0
        %379 = vmatpush1.msra.mxu0 0.0
        %380 = vmatprep.subr.mxu0 0.0
        %381 = vmatpush1.msra.mxu0 0.0
        %382 = vmatprep.subr.mxu0 0.0
        %383 = vmatpush1.msra.mxu0 0.0
        %384 = vmatprep.subr.mxu0 0.0
        %385 = vmatpush1.msra.mxu0 0.0
        %386 = vmatprep.subr.mxu0 0.0
        %387 = vmatpush1.msra.mxu0 0.0
        %388 = vmatprep.subr.mxu0 0.0
        %389 = vmatpush1.msra.mxu0 0.0
        %390 = vmatprep.subr.mxu0 0.0
        %391 = vmatpush1.msra.mxu0 0.0
        %392 = vmatprep.subr.mxu0 0.0
        %393 = vmatpush1.msra.mxu0 0.0
        %394 = vmatprep.mubr.f32.mxu0 0.0
        %v395 = vand.u32 %v170, 4294901760
        %v396 = vsub.f32 %v170, %v395
        %397 = vmatmul.mubr.f32.gmra.mrb[0].mxu0 %v396
        %v398 = vpop.f32.mrb[0].mxu0
        %v399 = vadd.f32 %v325, %v398
        %v400 = vpop.f32.mrb[0].mxu0
        %401 = vdwg.mxu0
        %402 = vmatprep.subr.mxu0 0.0
        %v403 = vand.u32 %v174, 4294901760
        %404 = vmatpush1.msra.mxu0 %v403
        %405 = vmatprep.subr.mxu0 0.0
        %406 = vmatpush1.msra.mxu0 0.0
        %407 = vmatprep.subr.mxu0 0.0
        %408 = vmatpush1.msra.mxu0 0.0
        %409 = vmatprep.subr.mxu0 0.0
        %410 = vmatpush1.msra.mxu0 0.0
        %411 = vmatprep.subr.mxu0 0.0
        %412 = vmatpush1.msra.mxu0 0.0
        %413 = vmatprep.subr.mxu0 0.0
        %414 = vmatpush1.msra.mxu0 0.0
        %415 = vmatprep.subr.mxu0 0.0
        %416 = vmatpush1.msra.mxu0 0.0
        %417 = vmatprep.subr.mxu0 0.0
        %418 = vmatpush1.msra.mxu0 0.0
        %419 = vmatprep.subr.mxu0 0.0
        %420 = vmatpush1.msra.mxu0 0.0
        %421 = vmatprep.subr.mxu0 0.0
        %422 = vmatpush1.msra.mxu0 0.0
        %423 = vmatprep.subr.mxu0 0.0
        %424 = vmatpush1.msra.mxu0 0.0
        %425 = vmatprep.subr.mxu0 0.0
        %426 = vmatpush1.msra.mxu0 0.0
        %427 = vmatprep.subr.mxu0 0.0
        %428 = vmatpush1.msra.mxu0 0.0
        %429 = vmatprep.subr.mxu0 0.0
        %430 = vmatpush1.msra.mxu0 0.0
        %431 = vmatprep.subr.mxu0 0.0
        %432 = vmatpush1.msra.mxu0 0.0
        %433 = vmatprep.subr.mxu0 0.0
        %434 = vmatpush1.msra.mxu0 0.0
        %435 = vmatprep.subr.mxu0 0.0
        %436 = vmatpush1.msra.mxu0 0.0
        %437 = vmatprep.subr.mxu0 0.0
        %438 = vmatpush1.msra.mxu0 0.0
        %439 = vmatprep.subr.mxu0 0.0
        %440 = vmatpush1.msra.mxu0 0.0
        %441 = vmatprep.subr.mxu0 0.0
        %442 = vmatpush1.msra.mxu0 0.0
        %443 = vmatprep.subr.mxu0 0.0
        %444 = vmatpush1.msra.mxu0 0.0
        %445 = vmatprep.subr.mxu0 0.0
        %446 = vmatpush1.msra.mxu0 0.0
        %447 = vmatprep.subr.mxu0 0.0
        %448 = vmatpush1.msra.mxu0 0.0
        %449 = vmatprep.subr.mxu0 0.0
        %450 = vmatpush1.msra.mxu0 0.0
        %451 = vmatprep.subr.mxu0 0.0
        %452 = vmatpush1.msra.mxu0 0.0
        %453 = vmatprep.subr.mxu0 0.0
        %454 = vmatpush1.msra.mxu0 0.0
        %455 = vmatprep.subr.mxu0 0.0
        %456 = vmatpush1.msra.mxu0 0.0
        %457 = vmatprep.subr.mxu0 0.0
        %458 = vmatpush1.msra.mxu0 0.0
        %459 = vmatprep.subr.mxu0 0.0
        %460 = vmatpush1.msra.mxu0 0.0
        %461 = vmatprep.subr.mxu0 0.0
        %462 = vmatpush1.msra.mxu0 0.0
        %463 = vmatprep.subr.mxu0 0.0
        %464 = vmatpush1.msra.mxu0 0.0
        %465 = vmatprep.subr.mxu0 0.0
        %466 = vmatpush1.msra.mxu0 0.0
        %467 = vmatprep.mubr.f32.mxu0 0.0
        %v468 = vand.u32 %v170, 4294901760
        %v469 = vsub.f32 %v170, %v468
        %v470 = vand.u32 %v469, 4294901760
        %471 = vmatmul.mubr.f32.gmra.mrb[0].mxu0 %v470
        %v472 = vpop.f32.mrb[0].mxu0
        %v473 = vadd.f32 %v399, %v472
        %v474 = vpop.f32.mrb[0].mxu0
        %475 = vdwg.mxu0
        %476 = vmatprep.subr.mxu0 0.0
        %v477 = vand.u32 %v174, 4294901760
        %v478 = vsub.f32 %v174, %v477
        %v479 = vand.u32 %v478, 4294901760
        %480 = vmatpush1.msra.mxu0 %v479
        %481 = vmatprep.subr.mxu0 0.0
        %482 = vmatpush1.msra.mxu0 0.0
        %483 = vmatprep.subr.mxu0 0.0
        %484 = vmatpush1.msra.mxu0 0.0
        %485 = vmatprep.subr.mxu0 0.0
        %486 = vmatpush1.msra.mxu0 0.0
        %487 = vmatprep.subr.mxu0 0.0
        %488 = vmatpush1.msra.mxu0 0.0
        %489 = vmatprep.subr.mxu0 0.0
        %490 = vmatpush1.msra.mxu0 0.0
        %491 = vmatprep.subr.mxu0 0.0
        %492 = vmatpush1.msra.mxu0 0.0
        %493 = vmatprep.subr.mxu0 0.0
        %494 = vmatpush1.msra.mxu0 0.0
        %495 = vmatprep.subr.mxu0 0.0
        %496 = vmatpush1.msra.mxu0 0.0
        %497 = vmatprep.subr.mxu0 0.0
        %498 = vmatpush1.msra.mxu0 0.0
        %499 = vmatprep.subr.mxu0 0.0
        %500 = vmatpush1.msra.mxu0 0.0
        %501 = vmatprep.subr.mxu0 0.0
        %502 = vmatpush1.msra.mxu0 0.0
        %503 = vmatprep.subr.mxu0 0.0
        %504 = vmatpush1.msra.mxu0 0.0
        %505 = vmatprep.subr.mxu0 0.0
        %506 = vmatpush1.msra.mxu0 0.0
        %507 = vmatprep.subr.mxu0 0.0
        %508 = vmatpush1.msra.mxu0 0.0
        %509 = vmatprep.subr.mxu0 0.0
        %510 = vmatpush1.msra.mxu0 0.0
        %511 = vmatprep.subr.mxu0 0.0
        %512 = vmatpush1.msra.mxu0 0.0
        %513 = vmatprep.subr.mxu0 0.0
        %514 = vmatpush1.msra.mxu0 0.0
        %515 = vmatprep.subr.mxu0 0.0
        %516 = vmatpush1.msra.mxu0 0.0
        %517 = vmatprep.subr.mxu0 0.0
        %518 = vmatpush1.msra.mxu0 0.0
        %519 = vmatprep.subr.mxu0 0.0
        %520 = vmatpush1.msra.mxu0 0.0
        %521 = vmatprep.subr.mxu0 0.0
        %522 = vmatpush1.msra.mxu0 0.0
        %523 = vmatprep.subr.mxu0 0.0
        %524 = vmatpush1.msra.mxu0 0.0
        %525 = vmatprep.subr.mxu0 0.0
        %526 = vmatpush1.msra.mxu0 0.0
        %527 = vmatprep.subr.mxu0 0.0
        %528 = vmatpush1.msra.mxu0 0.0
        %529 = vmatprep.subr.mxu0 0.0
        %530 = vmatpush1.msra.mxu0 0.0
        %531 = vmatprep.subr.mxu0 0.0
        %532 = vmatpush1.msra.mxu0 0.0
        %533 = vmatprep.subr.mxu0 0.0
        %534 = vmatpush1.msra.mxu0 0.0
        %535 = vmatprep.subr.mxu0 0.0
        %536 = vmatpush1.msra.mxu0 0.0
        %537 = vmatprep.subr.mxu0 0.0
        %538 = vmatpush1.msra.mxu0 0.0
        %539 = vmatprep.subr.mxu0 0.0
        %540 = vmatpush1.msra.mxu0 0.0
        %541 = vmatprep.subr.mxu0 0.0
        %542 = vmatpush1.msra.mxu0 0.0
        %543 = vmatprep.mubr.f32.mxu0 0.0
        %v544 = vand.u32 %v170, 4294901760
        %545 = vmatmul.mubr.f32.gmra.mrb[0].mxu0 %v544
        %v546 = vpop.f32.mrb[0].mxu0
        %v547 = vadd.f32 %v473, %v546
        %v548 = vpop.f32.mrb[0].mxu0
        %549 = vdwg.mxu0
        %550 = vmatprep.subr.mxu0 0.0
        %v551 = vand.u32 %v174, 4294901760
        %552 = vmatpush1.msra.mxu0 %v551
        %553 = vmatprep.subr.mxu0 0.0
        %554 = vmatpush1.msra.mxu0 0.0
        %555 = vmatprep.subr.mxu0 0.0
        %556 = vmatpush1.msra.mxu0 0.0
        %557 = vmatprep.subr.mxu0 0.0
        %558 = vmatpush1.msra.mxu0 0.0
        %559 = vmatprep.subr.mxu0 0.0
        %560 = vmatpush1.msra.mxu0 0.0
        %561 = vmatprep.subr.mxu0 0.0
        %562 = vmatpush1.msra.mxu0 0.0
        %563 = vmatprep.subr.mxu0 0.0
        %564 = vmatpush1.msra.mxu0 0.0
        %565 = vmatprep.subr.mxu0 0.0
        %566 = vmatpush1.msra.mxu0 0.0
        %567 = vmatprep.subr.mxu0 0.0
        %568 = vmatpush1.msra.mxu0 0.0
        %569 = vmatprep.subr.mxu0 0.0
        %570 = vmatpush1.msra.mxu0 0.0
        %571 = vmatprep.subr.mxu0 0.0
        %572 = vmatpush1.msra.mxu0 0.0
        %573 = vmatprep.subr.mxu0 0.0
        %574 = vmatpush1.msra.mxu0 0.0
        %575 = vmatprep.subr.mxu0 0.0
        %576 = vmatpush1.msra.mxu0 0.0
        %577 = vmatprep.subr.mxu0 0.0
        %578 = vmatpush1.msra.mxu0 0.0
        %579 = vmatprep.subr.mxu0 0.0
        %580 = vmatpush1.msra.mxu0 0.0
        %581 = vmatprep.subr.mxu0 0.0
        %582 = vmatpush1.msra.mxu0 0.0
        %583 = vmatprep.subr.mxu0 0.0
        %584 = vmatpush1.msra.mxu0 0.0
        %585 = vmatprep.subr.mxu0 0.0
        %586 = vmatpush1.msra.mxu0 0.0
        %587 = vmatprep.subr.mxu0 0.0
        %588 = vmatpush1.msra.mxu0 0.0
        %589 = vmatprep.subr.mxu0 0.0
        %590 = vmatpush1.msra.mxu0 0.0
        %591 = vmatprep.subr.mxu0 0.0
        %592 = vmatpush1.msra.mxu0 0.0
        %593 = vmatprep.subr.mxu0 0.0
        %594 = vmatpush1.msra.mxu0 0.0
        %595 = vmatprep.subr.mxu0 0.0
        %596 = vmatpush1.msra.mxu0 0.0
        %597 = vmatprep.subr.mxu0 0.0
        %598 = vmatpush1.msra.mxu0 0.0
        %599 = vmatprep.subr.mxu0 0.0
        %600 = vmatpush1.msra.mxu0 0.0
        %601 = vmatprep.subr.mxu0 0.0
        %602 = vmatpush1.msra.mxu0 0.0
        %603 = vmatprep.subr.mxu0 0.0
        %604 = vmatpush1.msra.mxu0 0.0
        %605 = vmatprep.subr.mxu0 0.0
        %606 = vmatpush1.msra.mxu0 0.0
        %607 = vmatprep.subr.mxu0 0.0
        %608 = vmatpush1.msra.mxu0 0.0
        %609 = vmatprep.subr.mxu0 0.0
        %610 = vmatpush1.msra.mxu0 0.0
        %611 = vmatprep.subr.mxu0 0.0
        %612 = vmatpush1.msra.mxu0 0.0
        %613 = vmatprep.subr.mxu0 0.0
        %614 = vmatpush1.msra.mxu0 0.0
        %615 = vmatprep.mubr.f32.mxu0 0.0
        %v616 = vand.u32 %v170, 4294901760
        %617 = vmatmul.mubr.f32.gmra.mrb[0].mxu0 %v616
        %v618 = vpop.f32.mrb[0].mxu0
        %v619 = vadd.f32 %v547, %v618
        %v620 = vpop.f32.mrb[0].mxu0
        %621 = vdwg.mxu0
        %v622 = vsel %vm169, %v158, 0
        %v625 = vsel %vm172, %v160, 0
        %627 = vmatprep.subr.mxu0 0.0
        %v628 = vand.u32 %v625, 4294901760
        %629 = vmatpush1.msra.mxu0 %v628
        %630 = vmatprep.subr.mxu0 0.0
        %631 = vmatpush1.msra.mxu0 0.0
        %632 = vmatprep.subr.mxu0 0.0
        %633 = vmatpush1.msra.mxu0 0.0
        %634 = vmatprep.subr.mxu0 0.0
        %635 = vmatpush1.msra.mxu0 0.0
        %636 = vmatprep.subr.mxu0 0.0
        %637 = vmatpush1.msra.mxu0 0.0
        %638 = vmatprep.subr.mxu0 0.0
        %639 = vmatpush1.msra.mxu0 0.0
        %640 = vmatprep.subr.mxu0 0.0
        %641 = vmatpush1.msra.mxu0 0.0
        %642 = vmatprep.subr.mxu0 0.0
        %643 = vmatpush1.msra.mxu0 0.0
        %644 = vmatprep.subr.mxu0 0.0
        %645 = vmatpush1.msra.mxu0 0.0
        %646 = vmatprep.subr.mxu0 0.0
        %647 = vmatpush1.msra.mxu0 0.0
        %648 = vmatprep.subr.mxu0 0.0
        %649 = vmatpush1.msra.mxu0 0.0
        %650 = vmatprep.subr.mxu0 0.0
        %651 = vmatpush1.msra.mxu0 0.0
        %652 = vmatprep.subr.mxu0 0.0
        %653 = vmatpush1.msra.mxu0 0.0
        %654 = vmatprep.subr.mxu0 0.0
        %655 = vmatpush1.msra.mxu0 0.0
        %656 = vmatprep.subr.mxu0 0.0
        %657 = vmatpush1.msra.mxu0 0.0
        %658 = vmatprep.subr.mxu0 0.0
        %659 = vmatpush1.msra.mxu0 0.0
        %660 = vmatprep.subr.mxu0 0.0
        %661 = vmatpush1.msra.mxu0 0.0
        %662 = vmatprep.subr.mxu0 0.0
        %663 = vmatpush1.msra.mxu0 0.0
        %664 = vmatprep.subr.mxu0 0.0
        %665 = vmatpush1.msra.mxu0 0.0
        %666 = vmatprep.subr.mxu0 0.0
        %667 = vmatpush1.msra.mxu0 0.0
        %668 = vmatprep.subr.mxu0 0.0
        %669 = vmatpush1.msra.mxu0 0.0
        %670 = vmatprep.subr.mxu0 0.0
        %671 = vmatpush1.msra.mxu0 0.0
        %672 = vmatprep.subr.mxu0 0.0
        %673 = vmatpush1.msra.mxu0 0.0
        %674 = vmatprep.subr.mxu0 0.0
        %675 = vmatpush1.msra.mxu0 0.0
        %676 = vmatprep.subr.mxu0 0.0
        %677 = vmatpush1.msra.mxu0 0.0
        %678 = vmatprep.subr.mxu0 0.0
        %679 = vmatpush1.msra.mxu0 0.0
        %680 = vmatprep.subr.mxu0 0.0
        %681 = vmatpush1.msra.mxu0 0.0
        %682 = vmatprep.subr.mxu0 0.0
        %683 = vmatpush1.msra.mxu0 0.0
        %684 = vmatprep.subr.mxu0 0.0
        %685 = vmatpush1.msra.mxu0 0.0
        %686 = vmatprep.subr.mxu0 0.0
        %687 = vmatpush1.msra.mxu0 0.0
        %688 = vmatprep.subr.mxu0 0.0
        %689 = vmatpush1.msra.mxu0 0.0
        %690 = vmatprep.subr.mxu0 0.0
        %691 = vmatpush1.msra.mxu0 0.0
        %692 = vmatprep.mubr.f32.mxu0 0.0
        %v693 = vand.u32 %v622, 4294901760
        %v694 = vsub.f32 %v622, %v693
        %v695 = vand.u32 %v694, 4294901760
        %v696 = vsub.f32 %v694, %v695
        %v697 = vand.u32 %v696, 4294901760
        %698 = vmatmul.mubr.f32.gmra.mrb[0].mxu0 %v697
        %v699 = vpop.f32.mrb[0].mxu0
        %v700 = vadd.f32 %v619, %v699
        %v701 = vpop.f32.mrb[0].mxu0
        %702 = vdwg.mxu0
        %703 = vmatprep.subr.mxu0 0.0
        %v704 = vand.u32 %v625, 4294901760
        %v705 = vsub.f32 %v625, %v704
        %v706 = vand.u32 %v705, 4294901760
        %v707 = vsub.f32 %v705, %v706
        %v708 = vand.u32 %v707, 4294901760
        %709 = vmatpush1.msra.mxu0 %v708
        %710 = vmatprep.subr.mxu0 0.0
        %711 = vmatpush1.msra.mxu0 0.0
        %712 = vmatprep.subr.mxu0 0.0
        %713 = vmatpush1.msra.mxu0 0.0
        %714 = vmatprep.subr.mxu0 0.0
        %715 = vmatpush1.msra.mxu0 0.0
        %716 = vmatprep.subr.mxu0 0.0
        %717 = vmatpush1.msra.mxu0 0.0
        %718 = vmatprep.subr.mxu0 0.0
        %719 = vmatpush1.msra.mxu0 0.0
        %720 = vmatprep.subr.mxu0 0.0
        %721 = vmatpush1.msra.mxu0 0.0
        %722 = vmatprep.subr.mxu0 0.0
        %723 = vmatpush1.msra.mxu0 0.0
        %724 = vmatprep.subr.mxu0 0.0
        %725 = vmatpush1.msra.mxu0 0.0
        %726 = vmatprep.subr.mxu0 0.0
        %727 = vmatpush1.msra.mxu0 0.0
        %728 = vmatprep.subr.mxu0 0.0
        %729 = vmatpush1.msra.mxu0 0.0
        %730 = vmatprep.subr.mxu0 0.0
        %731 = vmatpush1.msra.mxu0 0.0
        %732 = vmatprep.subr.mxu0 0.0
        %733 = vmatpush1.msra.mxu0 0.0
        %734 = vmatprep.subr.mxu0 0.0
        %735 = vmatpush1.msra.mxu0 0.0
        %736 = vmatprep.subr.mxu0 0.0
        %737 = vmatpush1.msra.mxu0 0.0
        %738 = vmatprep.subr.mxu0 0.0
        %739 = vmatpush1.msra.mxu0 0.0
        %740 = vmatprep.subr.mxu0 0.0
        %741 = vmatpush1.msra.mxu0 0.0
        %742 = vmatprep.subr.mxu0 0.0
        %743 = vmatpush1.msra.mxu0 0.0
        %744 = vmatprep.subr.mxu0 0.0
        %745 = vmatpush1.msra.mxu0 0.0
        %746 = vmatprep.subr.mxu0 0.0
        %747 = vmatpush1.msra.mxu0 0.0
        %748 = vmatprep.subr.mxu0 0.0
        %749 = vmatpush1.msra.mxu0 0.0
        %750 = vmatprep.subr.mxu0 0.0
        %751 = vmatpush1.msra.mxu0 0.0
        %752 = vmatprep.subr.mxu0 0.0
        %753 = vmatpush1.msra.mxu0 0.0
        %754 = vmatprep.subr.mxu0 0.0
        %755 = vmatpush1.msra.mxu0 0.0
        %756 = vmatprep.subr.mxu0 0.0
        %757 = vmatpush1.msra.mxu0 0.0
        %758 = vmatprep.subr.mxu0 0.0
        %759 = vmatpush1.msra.mxu0 0.0
        %760 = vmatprep.subr.mxu0 0.0
        %761 = vmatpush1.msra.mxu0 0.0
        %762 = vmatprep.subr.mxu0 0.0
        %763 = vmatpush1.msra.mxu0 0.0
        %764 = vmatprep.subr.mxu0 0.0
        %765 = vmatpush1.msra.mxu0 0.0
        %766 = vmatprep.subr.mxu0 0.0
        %767 = vmatpush1.msra.mxu0 0.0
        %768 = vmatprep.subr.mxu0 0.0
        %769 = vmatpush1.msra.mxu0 0.0
        %770 = vmatprep.subr.mxu0 0.0
        %771 = vmatpush1.msra.mxu0 0.0
        %772 = vmatprep.mubr.f32.mxu0 0.0
        %v773 = vand.u32 %v622, 4294901760
        %774 = vmatmul.mubr.f32.gmra.mrb[0].mxu0 %v773
        %v775 = vpop.f32.mrb[0].mxu0
        %v776 = vadd.f32 %v700, %v775
        %v777 = vpop.f32.mrb[0].mxu0
        %778 = vdwg.mxu0
        %779 = vmatprep.subr.mxu0 0.0
        %v780 = vand.u32 %v625, 4294901760
        %v781 = vsub.f32 %v625, %v780
        %782 = vmatpush1.msra.mxu0 %v781
        %783 = vmatprep.subr.mxu0 0.0
        %784 = vmatpush1.msra.mxu0 0.0
        %785 = vmatprep.subr.mxu0 0.0
        %786 = vmatpush1.msra.mxu0 0.0
        %787 = vmatprep.subr.mxu0 0.0
        %788 = vmatpush1.msra.mxu0 0.0
        %789 = vmatprep.subr.mxu0 0.0
        %790 = vmatpush1.msra.mxu0 0.0
        %791 = vmatprep.subr.mxu0 0.0
        %792 = vmatpush1.msra.mxu0 0.0
        %793 = vmatprep.subr.mxu0 0.0
        %794 = vmatpush1.msra.mxu0 0.0
        %795 = vmatprep.subr.mxu0 0.0
        %796 = vmatpush1.msra.mxu0 0.0
        %797 = vmatprep.subr.mxu0 0.0
        %798 = vmatpush1.msra.mxu0 0.0
        %799 = vmatprep.subr.mxu0 0.0
        %800 = vmatpush1.msra.mxu0 0.0
        %801 = vmatprep.subr.mxu0 0.0
        %802 = vmatpush1.msra.mxu0 0.0
        %803 = vmatprep.subr.mxu0 0.0
        %804 = vmatpush1.msra.mxu0 0.0
        %805 = vmatprep.subr.mxu0 0.0
        %806 = vmatpush1.msra.mxu0 0.0
        %807 = vmatprep.subr.mxu0 0.0
        %808 = vmatpush1.msra.mxu0 0.0
        %809 = vmatprep.subr.mxu0 0.0
        %810 = vmatpush1.msra.mxu0 0.0
        %811 = vmatprep.subr.mxu0 0.0
        %812 = vmatpush1.msra.mxu0 0.0
        %813 = vmatprep.subr.mxu0 0.0
        %814 = vmatpush1.msra.mxu0 0.0
        %815 = vmatprep.subr.mxu0 0.0
        %816 = vmatpush1.msra.mxu0 0.0
        %817 = vmatprep.subr.mxu0 0.0
        %818 = vmatpush1.msra.mxu0 0.0
        %819 = vmatprep.subr.mxu0 0.0
        %820 = vmatpush1.msra.mxu0 0.0
        %821 = vmatprep.subr.mxu0 0.0
        %822 = vmatpush1.msra.mxu0 0.0
        %823 = vmatprep.subr.mxu0 0.0
        %824 = vmatpush1.msra.mxu0 0.0
        %825 = vmatprep.subr.mxu0 0.0
        %826 = vmatpush1.msra.mxu0 0.0
        %827 = vmatprep.subr.mxu0 0.0
        %828 = vmatpush1.msra.mxu0 0.0
        %829 = vmatprep.subr.mxu0 0.0
        %830 = vmatpush1.msra.mxu0 0.0
        %831 = vmatprep.subr.mxu0 0.0
        %832 = vmatpush1.msra.mxu0 0.0
        %833 = vmatprep.subr.mxu0 0.0
        %834 = vmatpush1.msra.mxu0 0.0
        %835 = vmatprep.subr.mxu0 0.0
        %836 = vmatpush1.msra.mxu0 0.0
        %837 = vmatprep.subr.mxu0 0.0
        %838 = vmatpush1.msra.mxu0 0.0
        %839 = vmatprep.subr.mxu0 0.0
        %840 = vmatpush1.msra.mxu0 0.0
        %841 = vmatprep.subr.mxu0 0.0
        %842 = vmatpush1.msra.mxu0 0.0
        %843 = vmatprep.subr.mxu0 0.0
        %844 = vmatpush1.msra.mxu0 0.0
        %845 = vmatprep.mubr.f32.mxu0 0.0
        %v846 = vand.u32 %v622, 4294901760
        %v847 = vsub.f32 %v622, %v846
        %848 = vmatmul.mubr.f32.gmra.mrb[0].mxu0 %v847
        %v849 = vpop.f32.mrb[0].mxu0
        %v850 = vadd.f32 %v776, %v849
        %v851 = vpop.f32.mrb[0].mxu0
        %852 = vdwg.mxu0
        %853 = vmatprep.subr.mxu0 0.0
        %v854 = vand.u32 %v625, 4294901760
        %855 = vmatpush1.msra.mxu0 %v854
        %856 = vmatprep.subr.mxu0 0.0
        %857 = vmatpush1.msra.mxu0 0.0
        %858 = vmatprep.subr.mxu0 0.0
        %859 = vmatpush1.msra.mxu0 0.0
        %860 = vmatprep.subr.mxu0 0.0
        %861 = vmatpush1.msra.mxu0 0.0
        %862 = vmatprep.subr.mxu0 0.0
        %863 = vmatpush1.msra.mxu0 0.0
        %864 = vmatprep.subr.mxu0 0.0
        %865 = vmatpush1.msra.mxu0 0.0
        %866 = vmatprep.subr.mxu0 0.0
        %867 = vmatpush1.msra.mxu0 0.0
        %868 = vmatprep.subr.mxu0 0.0
        %869 = vmatpush1.msra.mxu0 0.0
        %870 = vmatprep.subr.mxu0 0.0
        %871 = vmatpush1.msra.mxu0 0.0
        %872 = vmatprep.subr.mxu0 0.0
        %873 = vmatpush1.msra.mxu0 0.0
        %874 = vmatprep.subr.mxu0 0.0
        %875 = vmatpush1.msra.mxu0 0.0
        %876 = vmatprep.subr.mxu0 0.0
        %877 = vmatpush1.msra.mxu0 0.0
        %878 = vmatprep.subr.mxu0 0.0
        %879 = vmatpush1.msra.mxu0 0.0
        %880 = vmatprep.subr.mxu0 0.0
        %881 = vmatpush1.msra.mxu0 0.0
        %882 = vmatprep.subr.mxu0 0.0
        %883 = vmatpush1.msra.mxu0 0.0
        %884 = vmatprep.subr.mxu0 0.0
        %885 = vmatpush1.msra.mxu0 0.0
        %886 = vmatprep.subr.mxu0 0.0
        %887 = vmatpush1.msra.mxu0 0.0
        %888 = vmatprep.subr.mxu0 0.0
        %889 = vmatpush1.msra.mxu0 0.0
        %890 = vmatprep.subr.mxu0 0.0
        %891 = vmatpush1.msra.mxu0 0.0
        %892 = vmatprep.subr.mxu0 0.0
        %893 = vmatpush1.msra.mxu0 0.0
        %894 = vmatprep.subr.mxu0 0.0
        %895 = vmatpush1.msra.mxu0 0.0
        %896 = vmatprep.subr.mxu0 0.0
        %897 = vmatpush1.msra.mxu0 0.0
        %898 = vmatprep.subr.mxu0 0.0
        %899 = vmatpush1.msra.mxu0 0.0
        %900 = vmatprep.subr.mxu0 0.0
        %901 = vmatpush1.msra.mxu0 0.0
        %902 = vmatprep.subr.mxu0 0.0
        %903 = vmatpush1.msra.mxu0 0.0
        %904 = vmatprep.subr.mxu0 0.0
        %905 = vmatpush1.msra.mxu0 0.0
        %906 = vmatprep.subr.mxu0 0.0
        %907 = vmatpush1.msra.mxu0 0.0
        %908 = vmatprep.subr.mxu0 0.0
        %909 = vmatpush1.msra.mxu0 0.0
        %910 = vmatprep.subr.mxu0 0.0
        %911 = vmatpush1.msra.mxu0 0.0
        %912 = vmatprep.subr.mxu0 0.0
        %913 = vmatpush1.msra.mxu0 0.0
        %914 = vmatprep.subr.mxu0 0.0
        %915 = vmatpush1.msra.mxu0 0.0
        %916 = vmatprep.subr.mxu0 0.0
        %917 = vmatpush1.msra.mxu0 0.0
        %918 = vmatprep.mubr.f32.mxu0 0.0
        %v919 = vand.u32 %v622, 4294901760
        %v920 = vsub.f32 %v622, %v919
        %v921 = vand.u32 %v920, 4294901760
        %922 = vmatmul.mubr.f32.gmra.mrb[0].mxu0 %v921
        %v923 = vpop.f32.mrb[0].mxu0
        %v924 = vadd.f32 %v850, %v923
        %v925 = vpop.f32.mrb[0].mxu0
        %926 = vdwg.mxu0
        %927 = vmatprep.subr.mxu0 0.0
        %v928 = vand.u32 %v625, 4294901760
        %v929 = vsub.f32 %v625, %v928
        %v930 = vand.u32 %v929, 4294901760
        %931 = vmatpush1.msra.mxu0 %v930
        %932 = vmatprep.subr.mxu0 0.0
        %933 = vmatpush1.msra.mxu0 0.0
        %934 = vmatprep.subr.mxu0 0.0
        %935 = vmatpush1.msra.mxu0 0.0
        %936 = vmatprep.subr.mxu0 0.0
        %937 = vmatpush1.msra.mxu0 0.0
        %938 = vmatprep.subr.mxu0 0.0
        %939 = vmatpush1.msra.mxu0 0.0
        %940 = vmatprep.subr.mxu0 0.0
        %941 = vmatpush1.msra.mxu0 0.0
        %942 = vmatprep.subr.mxu0 0.0
        %943 = vmatpush1.msra.mxu0 0.0
        %944 = vmatprep.subr.mxu0 0.0
        %945 = vmatpush1.msra.mxu0 0.0
        %946 = vmatprep.subr.mxu0 0.0
        %947 = vmatpush1.msra.mxu0 0.0
        %948 = vmatprep.subr.mxu0 0.0
        %949 = vmatpush1.msra.mxu0 0.0
        %950 = vmatprep.subr.mxu0 0.0
        %951 = vmatpush1.msra.mxu0 0.0
        %952 = vmatprep.subr.mxu0 0.0
        %953 = vmatpush1.msra.mxu0 0.0
        %954 = vmatprep.subr.mxu0 0.0
        %955 = vmatpush1.msra.mxu0 0.0
        %956 = vmatprep.subr.mxu0 0.0
        %957 = vmatpush1.msra.mxu0 0.0
        %958 = vmatprep.subr.mxu0 0.0
        %959 = vmatpush1.msra.mxu0 0.0
        %960 = vmatprep.subr.mxu0 0.0
        %961 = vmatpush1.msra.mxu0 0.0
        %962 = vmatprep.subr.mxu0 0.0
        %963 = vmatpush1.msra.mxu0 0.0
        %964 = vmatprep.subr.mxu0 0.0
        %965 = vmatpush1.msra.mxu0 0.0
        %966 = vmatprep.subr.mxu0 0.0
        %967 = vmatpush1.msra.mxu0 0.0
        %968 = vmatprep.subr.mxu0 0.0
        %969 = vmatpush1.msra.mxu0 0.0
        %970 = vmatprep.subr.mxu0 0.0
        %971 = vmatpush1.msra.mxu0 0.0
        %972 = vmatprep.subr.mxu0 0.0
        %973 = vmatpush1.msra.mxu0 0.0
        %974 = vmatprep.subr.mxu0 0.0
        %975 = vmatpush1.msra.mxu0 0.0
        %976 = vmatprep.subr.mxu0 0.0
        %977 = vmatpush1.msra.mxu0 0.0
        %978 = vmatprep.subr.mxu0 0.0
        %979 = vmatpush1.msra.mxu0 0.0
        %980 = vmatprep.subr.mxu0 0.0
        %981 = vmatpush1.msra.mxu0 0.0
        %982 = vmatprep.subr.mxu0 0.0
        %983 = vmatpush1.msra.mxu0 0.0
        %984 = vmatprep.subr.mxu0 0.0
        %985 = vmatpush1.msra.mxu0 0.0
        %986 = vmatprep.subr.mxu0 0.0
        %987 = vmatpush1.msra.mxu0 0.0
        %988 = vmatprep.subr.mxu0 0.0
        %989 = vmatpush1.msra.mxu0 0.0
        %990 = vmatprep.subr.mxu0 0.0
        %991 = vmatpush1.msra.mxu0 0.0
        %992 = vmatprep.subr.mxu0 0.0
        %993 = vmatpush1.msra.mxu0 0.0
        %994 = vmatprep.mubr.f32.mxu0 0.0
        %v995 = vand.u32 %v622, 4294901760
        %996 = vmatmul.mubr.f32.gmra.mrb[0].mxu0 %v995
        %v997 = vpop.f32.mrb[0].mxu0
        %v998 = vadd.f32 %v924, %v997
        %v999 = vpop.f32.mrb[0].mxu0
        %1000 = vdwg.mxu0
        %1001 = vmatprep.subr.mxu0 0.0
        %v1002 = vand.u32 %v625, 4294901760
        %1003 = vmatpush1.msra.mxu0 %v1002
        %1004 = vmatprep.subr.mxu0 0.0
        %1005 = vmatpush1.msra.mxu0 0.0
        %1006 = vmatprep.subr.mxu0 0.0
        %1007 = vmatpush1.msra.mxu0 0.0
        %1008 = vmatprep.subr.mxu0 0.0
        %1009 = vmatpush1.msra.mxu0 0.0
        %1010 = vmatprep.subr.mxu0 0.0
        %1011 = vmatpush1.msra.mxu0 0.0
        %1012 = vmatprep.subr.mxu0 0.0
        %1013 = vmatpush1.msra.mxu0 0.0
        %1014 = vmatprep.subr.mxu0 0.0
        %1015 = vmatpush1.msra.mxu0 0.0
        %1016 = vmatprep.subr.mxu0 0.0
        %1017 = vmatpush1.msra.mxu0 0.0
        %1018 = vmatprep.subr.mxu0 0.0
        %1019 = vmatpush1.msra.mxu0 0.0
        %1020 = vmatprep.subr.mxu0 0.0
        %1021 = vmatpush1.msra.mxu0 0.0
        %1022 = vmatprep.subr.mxu0 0.0
        %1023 = vmatpush1.msra.mxu0 0.0
        %1024 = vmatprep.subr.mxu0 0.0
        %1025 = vmatpush1.msra.mxu0 0.0
        %1026 = vmatprep.subr.mxu0 0.0
        %1027 = vmatpush1.msra.mxu0 0.0
        %1028 = vmatprep.subr.mxu0 0.0
        %1029 = vmatpush1.msra.mxu0 0.0
        %1030 = vmatprep.subr.mxu0 0.0
        %1031 = vmatpush1.msra.mxu0 0.0
        %1032 = vmatprep.subr.mxu0 0.0
        %1033 = vmatpush1.msra.mxu0 0.0
        %1034 = vmatprep.subr.mxu0 0.0
        %1035 = vmatpush1.msra.mxu0 0.0
        %1036 = vmatprep.subr.mxu0 0.0
        %1037 = vmatpush1.msra.mxu0 0.0
        %1038 = vmatprep.subr.mxu0 0.0
        %1039 = vmatpush1.msra.mxu0 0.0
        %1040 = vmatprep.subr.mxu0 0.0
        %1041 = vmatpush1.msra.mxu0 0.0
        %1042 = vmatprep.subr.mxu0 0.0
        %1043 = vmatpush1.msra.mxu0 0.0
        %1044 = vmatprep.subr.mxu0 0.0
        %1045 = vmatpush1.msra.mxu0 0.0
        %1046 = vmatprep.subr.mxu0 0.0
        %1047 = vmatpush1.msra.mxu0 0.0
        %1048 = vmatprep.subr.mxu0 0.0
        %1049 = vmatpush1.msra.mxu0 0.0
        %1050 = vmatprep.subr.mxu0 0.0
        %1051 = vmatpush1.msra.mxu0 0.0
        %1052 = vmatprep.subr.mxu0 0.0
        %1053 = vmatpush1.msra.mxu0 0.0
        %1054 = vmatprep.subr.mxu0 0.0
        %1055 = vmatpush1.msra.mxu0 0.0
        %1056 = vmatprep.subr.mxu0 0.0
        %1057 = vmatpush1.msra.mxu0 0.0
        %1058 = vmatprep.subr.mxu0 0.0
        %1059 = vmatpush1.msra.mxu0 0.0
        %1060 = vmatprep.subr.mxu0 0.0
        %1061 = vmatpush1.msra.mxu0 0.0
        %1062 = vmatprep.subr.mxu0 0.0
        %1063 = vmatpush1.msra.mxu0 0.0
        %1064 = vmatprep.subr.mxu0 0.0
        %1065 = vmatpush1.msra.mxu0 0.0
        %1066 = vmatprep.mubr.f32.mxu0 0.0
        %v1067 = vand.u32 %v622, 4294901760
        %1068 = vmatmul.mubr.f32.gmra.mrb[0].mxu0 %v1067
        %v1069 = vpop.f32.mrb[0].mxu0
        %v1070 = vadd.f32 %v998, %v1069
        %v1071 = vpop.f32.mrb[0].mxu0
        %1072 = vdwg.mxu0
        %s1073 = scalar_lea.vmem %s1, 8
        %v1074 = vld [vmem:[%s1073] sm:$0xf]
        %vm1075 = vcmask 1045504
        %v1076 = vrot.slane %v158, 2
        %v1077 = vrot.slane %v159, 2
        %v1078 = vsel %vm1075, %v1076, %v1077
        %v1079 = vsel %vm169, %v1078, 0
        %v1082 = vsel %vm172, %v1074, 0
        %1084 = vmatprep.subr.mxu0 0.0
        %v1085 = vand.u32 %v1082, 4294901760
        %1086 = vmatpush1.msra.mxu0 %v1085
        %1087 = vmatprep.subr.mxu0 0.0
        %1088 = vmatpush1.msra.mxu0 0.0
        %1089 = vmatprep.subr.mxu0 0.0
        %1090 = vmatpush1.msra.mxu0 0.0
        %1091 = vmatprep.subr.mxu0 0.0
        %1092 = vmatpush1.msra.mxu0 0.0
        %1093 = vmatprep.subr.mxu0 0.0
        %1094 = vmatpush1.msra.mxu0 0.0
        %1095 = vmatprep.subr.mxu0 0.0
        %1096 = vmatpush1.msra.mxu0 0.0
        %1097 = vmatprep.subr.mxu0 0.0
        %1098 = vmatpush1.msra.mxu0 0.0
        %1099 = vmatprep.subr.mxu0 0.0
        %1100 = vmatpush1.msra.mxu0 0.0
        %1101 = vmatprep.subr.mxu0 0.0
        %1102 = vmatpush1.msra.mxu0 0.0
        %1103 = vmatprep.subr.mxu0 0.0
        %1104 = vmatpush1.msra.mxu0 0.0
        %1105 = vmatprep.subr.mxu0 0.0
        %1106 = vmatpush1.msra.mxu0 0.0
        %1107 = vmatprep.subr.mxu0 0.0
        %1108 = vmatpush1.msra.mxu0 0.0
        %1109 = vmatprep.subr.mxu0 0.0
        %1110 = vmatpush1.msra.mxu0 0.0
        %1111 = vmatprep.subr.mxu0 0.0
        %1112 = vmatpush1.msra.mxu0 0.0
        %1113 = vmatprep.subr.mxu0 0.0
        %1114 = vmatpush1.msra.mxu0 0.0
        %1115 = vmatprep.subr.mxu0 0.0
        %1116 = vmatpush1.msra.mxu0 0.0
        %1117 = vmatprep.subr.mxu0 0.0
        %1118 = vmatpush1.msra.mxu0 0.0
        %1119 = vmatprep.subr.mxu0 0.0
        %1120 = vmatpush1.msra.mxu0 0.0
        %1121 = vmatprep.subr.mxu0 0.0
        %1122 = vmatpush1.msra.mxu0 0.0
        %1123 = vmatprep.subr.mxu0 0.0
        %1124 = vmatpush1.msra.mxu0 0.0
        %1125 = vmatprep.subr.mxu0 0.0
        %1126 = vmatpush1.msra.mxu0 0.0
        %1127 = vmatprep.subr.mxu0 0.0
        %1128 = vmatpush1.msra.mxu0 0.0
        %1129 = vmatprep.subr.mxu0 0.0
        %1130 = vmatpush1.msra.mxu0 0.0
        %1131 = vmatprep.subr.mxu0 0.0
        %1132 = vmatpush1.msra.mxu0 0.0
        %1133 = vmatprep.subr.mxu0 0.0
        %1134 = vmatpush1.msra.mxu0 0.0
        %1135 = vmatprep.subr.mxu0 0.0
        %1136 = vmatpush1.msra.mxu0 0.0
        %1137 = vmatprep.subr.mxu0 0.0
        %1138 = vmatpush1.msra.mxu0 0.0
        %1139 = vmatprep.subr.mxu0 0.0
        %1140 = vmatpush1.msra.mxu0 0.0
        %1141 = vmatprep.subr.mxu0 0.0
        %1142 = vmatpush1.msra.mxu0 0.0
        %1143 = vmatprep.subr.mxu0 0.0
        %1144 = vmatpush1.msra.mxu0 0.0
        %1145 = vmatprep.subr.mxu0 0.0
        %1146 = vmatpush1.msra.mxu0 0.0
        %1147 = vmatprep.subr.mxu0 0.0
        %1148 = vmatpush1.msra.mxu0 0.0
        %1149 = vmatprep.mubr.f32.mxu0 0.0
        %v1150 = vand.u32 %v1079, 4294901760
        %v1151 = vsub.f32 %v1079, %v1150
        %v1152 = vand.u32 %v1151, 4294901760
        %v1153 = vsub.f32 %v1151, %v1152
        %v1154 = vand.u32 %v1153, 4294901760
        %1155 = vmatmul.mubr.f32.gmra.mrb[0].mxu0 %v1154
        %v1156 = vpop.f32.mrb[0].mxu0
        %v1157 = vadd.f32 0.0, %v1156
        %v1158 = vpop.f32.mrb[0].mxu0
        %1159 = vdwg.mxu0
        %1160 = vmatprep.subr.mxu0 0.0
        %v1161 = vand.u32 %v1082, 4294901760
        %v1162 = vsub.f32 %v1082, %v1161
        %v1163 = vand.u32 %v1162, 4294901760
        %v1164 = vsub.f32 %v1162, %v1163
        %v1165 = vand.u32 %v1164, 4294901760
        %1166 = vmatpush1.msra.mxu0 %v1165
        %1167 = vmatprep.subr.mxu0 0.0
        %1168 = vmatpush1.msra.mxu0 0.0
        %1169 = vmatprep.subr.mxu0 0.0
        %1170 = vmatpush1.msra.mxu0 0.0
        %1171 = vmatprep.subr.mxu0 0.0
        %1172 = vmatpush1.msra.mxu0 0.0
        %1173 = vmatprep.subr.mxu0 0.0
        %1174 = vmatpush1.msra.mxu0 0.0
        %1175 = vmatprep.subr.mxu0 0.0
        %1176 = vmatpush1.msra.mxu0 0.0
        %1177 = vmatprep.subr.mxu0 0.0
        %1178 = vmatpush1.msra.mxu0 0.0
        %1179 = vmatprep.subr.mxu0 0.0
        %1180 = vmatpush1.msra.mxu0 0.0
        %1181 = vmatprep.subr.mxu0 0.0
        %1182 = vmatpush1.msra.mxu0 0.0
        %1183 = vmatprep.subr.mxu0 0.0
        %1184 = vmatpush1.msra.mxu0 0.0
        %1185 = vmatprep.subr.mxu0 0.0
        %1186 = vmatpush1.msra.mxu0 0.0
        %1187 = vmatprep.subr.mxu0 0.0
        %1188 = vmatpush1.msra.mxu0 0.0
        %1189 = vmatprep.subr.mxu0 0.0
        %1190 = vmatpush1.msra.mxu0 0.0
        %1191 = vmatprep.subr.mxu0 0.0
        %1192 = vmatpush1.msra.mxu0 0.0
        %1193 = vmatprep.subr.mxu0 0.0
        %1194 = vmatpush1.msra.mxu0 0.0
        %1195 = vmatprep.subr.mxu0 0.0
        %1196 = vmatpush1.msra.mxu0 0.0
        %1197 = vmatprep.subr.mxu0 0.0
        %1198 = vmatpush1.msra.mxu0 0.0
        %1199 = vmatprep.subr.mxu0 0.0
        %1200 = vmatpush1.msra.mxu0 0.0
        %1201 = vmatprep.subr.mxu0 0.0
        %1202 = vmatpush1.msra.mxu0 0.0
        %1203 = vmatprep.subr.mxu0 0.0
        %1204 = vmatpush1.msra.mxu0 0.0
        %1205 = vmatprep.subr.mxu0 0.0
        %1206 = vmatpush1.msra.mxu0 0.0
        %1207 = vmatprep.subr.mxu0 0.0
        %1208 = vmatpush1.msra.mxu0 0.0
        %1209 = vmatprep.subr.mxu0 0.0
        %1210 = vmatpush1.msra.mxu0 0.0
        %1211 = vmatprep.subr.mxu0 0.0
        %1212 = vmatpush1.msra.mxu0 0.0
        %1213 = vmatprep.subr.mxu0 0.0
        %1214 = vmatpush1.msra.mxu0 0.0
        %1215 = vmatprep.subr.mxu0 0.0
        %1216 = vmatpush1.msra.mxu0 0.0
        %1217 = vmatprep.subr.mxu0 0.0
        %1218 = vmatpush1.msra.mxu0 0.0
        %1219 = vmatprep.subr.mxu0 0.0
        %1220 = vmatpush1.msra.mxu0 0.0
        %1221 = vmatprep.subr.mxu0 0.0
        %1222 = vmatpush1.msra.mxu0 0.0
        %1223 = vmatprep.subr.mxu0 0.0
        %1224 = vmatpush1.msra.mxu0 0.0
        %1225 = vmatprep.subr.mxu0 0.0
        %1226 = vmatpush1.msra.mxu0 0.0
        %1227 = vmatprep.subr.mxu0 0.0
        %1228 = vmatpush1.msra.mxu0 0.0
        %1229 = vmatprep.mubr.f32.mxu0 0.0
        %v1230 = vand.u32 %v1079, 4294901760
        %1231 = vmatmul.mubr.f32.gmra.mrb[0].mxu0 %v1230
        %v1232 = vpop.f32.mrb[0].mxu0
        %v1233 = vadd.f32 %v1157, %v1232
        %v1234 = vpop.f32.mrb[0].mxu0
        %1235 = vdwg.mxu0
        %1236 = vmatprep.subr.mxu0 0.0
        %v1237 = vand.u32 %v1082, 4294901760
        %v1238 = vsub.f32 %v1082, %v1237
        %1239 = vmatpush1.msra.mxu0 %v1238
        %1240 = vmatprep.subr.mxu0 0.0
        %1241 = vmatpush1.msra.mxu0 0.0
        %1242 = vmatprep.subr.mxu0 0.0
        %1243 = vmatpush1.msra.mxu0 0.0
        %1244 = vmatprep.subr.mxu0 0.0
        %1245 = vmatpush1.msra.mxu0 0.0
        %1246 = vmatprep.subr.mxu0 0.0
        %1247 = vmatpush1.msra.mxu0 0.0
        %1248 = vmatprep.subr.mxu0 0.0
        %1249 = vmatpush1.msra.mxu0 0.0
        %1250 = vmatprep.subr.mxu0 0.0
        %1251 = vmatpush1.msra.mxu0 0.0
        %1252 = vmatprep.subr.mxu0 0.0
        %1253 = vmatpush1.msra.mxu0 0.0
        %1254 = vmatprep.subr.mxu0 0.0
        %1255 = vmatpush1.msra.mxu0 0.0
        %1256 = vmatprep.subr.mxu0 0.0
        %1257 = vmatpush1.msra.mxu0 0.0
        %1258 = vmatprep.subr.mxu0 0.0
        %1259 = vmatpush1.msra.mxu0 0.0
        %1260 = vmatprep.subr.mxu0 0.0
        %1261 = vmatpush1.msra.mxu0 0.0
        %1262 = vmatprep.subr.mxu0 0.0
        %1263 = vmatpush1.msra.mxu0 0.0
        %1264 = vmatprep.subr.mxu0 0.0
        %1265 = vmatpush1.msra.mxu0 0.0
        %1266 = vmatprep.subr.mxu0 0.0
        %1267 = vmatpush1.msra.mxu0 0.0
        %1268 = vmatprep.subr.mxu0 0.0
        %1269 = vmatpush1.msra.mxu0 0.0
        %1270 = vmatprep.subr.mxu0 0.0
        %1271 = vmatpush1.msra.mxu0 0.0
        %1272 = vmatprep.subr.mxu0 0.0
        %1273 = vmatpush1.msra.mxu0 0.0
        %1274 = vmatprep.subr.mxu0 0.0
        %1275 = vmatpush1.msra.mxu0 0.0
        %1276 = vmatprep.subr.mxu0 0.0
        %1277 = vmatpush1.msra.mxu0 0.0
        %1278 = vmatprep.subr.mxu0 0.0
        %1279 = vmatpush1.msra.mxu0 0.0
        %1280 = vmatprep.subr.mxu0 0.0
        %1281 = vmatpush1.msra.mxu0 0.0
        %1282 = vmatprep.subr.mxu0 0.0
        %1283 = vmatpush1.msra.mxu0 0.0
        %1284 = vmatprep.subr.mxu0 0.0
        %1285 = vmatpush1.msra.mxu0 0.0
        %1286 = vmatprep.subr.mxu0 0.0
        %1287 = vmatpush1.msra.mxu0 0.0
        %1288 = vmatprep.subr.mxu0 0.0
        %1289 = vmatpush1.msra.mxu0 0.0
        %1290 = vmatprep.subr.mxu0 0.0
        %1291 = vmatpush1.msra.mxu0 0.0
        %1292 = vmatprep.subr.mxu0 0.0
        %1293 = vmatpush1.msra.mxu0 0.0
        %1294 = vmatprep.subr.mxu0 0.0
        %1295 = vmatpush1.msra.mxu0 0.0
        %1296 = vmatprep.subr.mxu0 0.0
        %1297 = vmatpush1.msra.mxu0 0.0
        %1298 = vmatprep.subr.mxu0 0.0
        %1299 = vmatpush1.msra.mxu0 0.0
        %1300 = vmatprep.subr.mxu0 0.0
        %1301 = vmatpush1.msra.mxu0 0.0
        %1302 = vmatprep.mubr.f32.mxu0 0.0
        %v1303 = vand.u32 %v1079, 4294901760
        %v1304 = vsub.f32 %v1079, %v1303
        %1305 = vmatmul.mubr.f32.gmra.mrb[0].mxu0 %v1304
        %v1306 = vpop.f32.mrb[0].mxu0
        %v1307 = vadd.f32 %v1233, %v1306
        %v1308 = vpop.f32.mrb[0].mxu0
        %1309 = vdwg.mxu0
        %1310 = vmatprep.subr.mxu0 0.0
        %v1311 = vand.u32 %v1082, 4294901760
        %1312 = vmatpush1.msra.mxu0 %v1311
        %1313 = vmatprep.subr.mxu0 0.0
        %1314 = vmatpush1.msra.mxu0 0.0
        %1315 = vmatprep.subr.mxu0 0.0
        %1316 = vmatpush1.msra.mxu0 0.0
        %1317 = vmatprep.subr.mxu0 0.0
        %1318 = vmatpush1.msra.mxu0 0.0
        %1319 = vmatprep.subr.mxu0 0.0
        %1320 = vmatpush1.msra.mxu0 0.0
        %1321 = vmatprep.subr.mxu0 0.0
        %1322 = vmatpush1.msra.mxu0 0.0
        %1323 = vmatprep.subr.mxu0 0.0
        %1324 = vmatpush1.msra.mxu0 0.0
        %1325 = vmatprep.subr.mxu0 0.0
        %1326 = vmatpush1.msra.mxu0 0.0
        %1327 = vmatprep.subr.mxu0 0.0
        %1328 = vmatpush1.msra.mxu0 0.0
        %1329 = vmatprep.subr.mxu0 0.0
        %1330 = vmatpush1.msra.mxu0 0.0
        %1331 = vmatprep.subr.mxu0 0.0
        %1332 = vmatpush1.msra.mxu0 0.0
        %1333 = vmatprep.subr.mxu0 0.0
        %1334 = vmatpush1.msra.mxu0 0.0
        %1335 = vmatprep.subr.mxu0 0.0
        %1336 = vmatpush1.msra.mxu0 0.0
        %1337 = vmatprep.subr.mxu0 0.0
        %1338 = vmatpush1.msra.mxu0 0.0
        %1339 = vmatprep.subr.mxu0 0.0
        %1340 = vmatpush1.msra.mxu0 0.0
        %1341 = vmatprep.subr.mxu0 0.0
        %1342 = vmatpush1.msra.mxu0 0.0
        %1343 = vmatprep.subr.mxu0 0.0
        %1344 = vmatpush1.msra.mxu0 0.0
        %1345 = vmatprep.subr.mxu0 0.0
        %1346 = vmatpush1.msra.mxu0 0.0
        %1347 = vmatprep.subr.mxu0 0.0
        %1348 = vmatpush1.msra.mxu0 0.0
        %1349 = vmatprep.subr.mxu0 0.0
        %1350 = vmatpush1.msra.mxu0 0.0
        %1351 = vmatprep.subr.mxu0 0.0
        %1352 = vmatpush1.msra.mxu0 0.0
        %1353 = vmatprep.subr.mxu0 0.0
        %1354 = vmatpush1.msra.mxu0 0.0
        %1355 = vmatprep.subr.mxu0 0.0
        %1356 = vmatpush1.msra.mxu0 0.0
        %1357 = vmatprep.subr.mxu0 0.0
        %1358 = vmatpush1.msra.mxu0 0.0
        %1359 = vmatprep.subr.mxu0 0.0
        %1360 = vmatpush1.msra.mxu0 0.0
        %1361 = vmatprep.subr.mxu0 0.0
        %1362 = vmatpush1.msra.mxu0 0.0
        %1363 = vmatprep.subr.mxu0 0.0
        %1364 = vmatpush1.msra.mxu0 0.0
        %1365 = vmatprep.subr.mxu0 0.0
        %1366 = vmatpush1.msra.mxu0 0.0
        %1367 = vmatprep.subr.mxu0 0.0
        %1368 = vmatpush1.msra.mxu0 0.0
        %1369 = vmatprep.subr.mxu0 0.0
        %1370 = vmatpush1.msra.mxu0 0.0
        %1371 = vmatprep.subr.mxu0 0.0
        %1372 = vmatpush1.msra.mxu0 0.0
        %1373 = vmatprep.subr.mxu0 0.0
        %1374 = vmatpush1.msra.mxu0 0.0
        %1375 = vmatprep.mubr.f32.mxu0 0.0
        %v1376 = vand.u32 %v1079, 4294901760
        %v1377 = vsub.f32 %v1079, %v1376
        %v1378 = vand.u32 %v1377, 4294901760
        %1379 = vmatmul.mubr.f32.gmra.mrb[0].mxu0 %v1378
        %v1380 = vpop.f32.mrb[0].mxu0
        %v1381 = vadd.f32 %v1307, %v1380
        %v1382 = vpop.f32.mrb[0].mxu0
        %1383 = vdwg.mxu0
        %1384 = vmatprep.subr.mxu0 0.0
        %v1385 = vand.u32 %v1082, 4294901760
        %v1386 = vsub.f32 %v1082, %v1385
        %v1387 = vand.u32 %v1386, 4294901760
        %1388 = vmatpush1.msra.mxu0 %v1387
        %1389 = vmatprep.subr.mxu0 0.0
        %1390 = vmatpush1.msra.mxu0 0.0
        %1391 = vmatprep.subr.mxu0 0.0
        %1392 = vmatpush1.msra.mxu0 0.0
        %1393 = vmatprep.subr.mxu0 0.0
        %1394 = vmatpush1.msra.mxu0 0.0
        %1395 = vmatprep.subr.mxu0 0.0
        %1396 = vmatpush1.msra.mxu0 0.0
        %1397 = vmatprep.subr.mxu0 0.0
        %1398 = vmatpush1.msra.mxu0 0.0
        %1399 = vmatprep.subr.mxu0 0.0
        %1400 = vmatpush1.msra.mxu0 0.0
        %1401 = vmatprep.subr.mxu0 0.0
        %1402 = vmatpush1.msra.mxu0 0.0
        %1403 = vmatprep.subr.mxu0 0.0
        %1404 = vmatpush1.msra.mxu0 0.0
        %1405 = vmatprep.subr.mxu0 0.0
        %1406 = vmatpush1.msra.mxu0 0.0
        %1407 = vmatprep.subr.mxu0 0.0
        %1408 = vmatpush1.msra.mxu0 0.0
        %1409 = vmatprep.subr.mxu0 0.0
        %1410 = vmatpush1.msra.mxu0 0.0
        %1411 = vmatprep.subr.mxu0 0.0
        %1412 = vmatpush1.msra.mxu0 0.0
        %1413 = vmatprep.subr.mxu0 0.0
        %1414 = vmatpush1.msra.mxu0 0.0
        %1415 = vmatprep.subr.mxu0 0.0
        %1416 = vmatpush1.msra.mxu0 0.0
        %1417 = vmatprep.subr.mxu0 0.0
        %1418 = vmatpush1.msra.mxu0 0.0
        %1419 = vmatprep.subr.mxu0 0.0
        %1420 = vmatpush1.msra.mxu0 0.0
        %1421 = vmatprep.subr.mxu0 0.0
        %1422 = vmatpush1.msra.mxu0 0.0
        %1423 = vmatprep.subr.mxu0 0.0
        %1424 = vmatpush1.msra.mxu0 0.0
        %1425 = vmatprep.subr.mxu0 0.0
        %1426 = vmatpush1.msra.mxu0 0.0
        %1427 = vmatprep.subr.mxu0 0.0
        %1428 = vmatpush1.msra.mxu0 0.0
        %1429 = vmatprep.subr.mxu0 0.0
        %1430 = vmatpush1.msra.mxu0 0.0
        %1431 = vmatprep.subr.mxu0 0.0
        %1432 = vmatpush1.msra.mxu0 0.0
        %1433 = vmatprep.subr.mxu0 0.0
        %1434 = vmatpush1.msra.mxu0 0.0
        %1435 = vmatprep.subr.mxu0 0.0
        %1436 = vmatpush1.msra.mxu0 0.0
        %1437 = vmatprep.subr.mxu0 0.0
        %1438 = vmatpush1.msra.mxu0 0.0
        %1439 = vmatprep.subr.mxu0 0.0
        %1440 = vmatpush1.msra.mxu0 0.0
        %1441 = vmatprep.subr.mxu0 0.0
        %1442 = vmatpush1.msra.mxu0 0.0
        %1443 = vmatprep.subr.mxu0 0.0
        %1444 = vmatpush1.msra.mxu0 0.0
        %1445 = vmatprep.subr.mxu0 0.0
        %1446 = vmatpush1.msra.mxu0 0.0
        %1447 = vmatprep.subr.mxu0 0.0
        %1448 = vmatpush1.msra.mxu0 0.0
        %1449 = vmatprep.subr.mxu0 0.0
        %1450 = vmatpush1.msra.mxu0 0.0
        %1451 = vmatprep.mubr.f32.mxu0 0.0
        %v1452 = vand.u32 %v1079, 4294901760
        %1453 = vmatmul.mubr.f32.gmra.mrb[0].mxu0 %v1452
        %v1454 = vpop.f32.mrb[0].mxu0
        %v1455 = vadd.f32 %v1381, %v1454
        %v1456 = vpop.f32.mrb[0].mxu0
        %1457 = vdwg.mxu0
        %1458 = vmatprep.subr.mxu0 0.0
        %v1459 = vand.u32 %v1082, 4294901760
        %1460 = vmatpush1.msra.mxu0 %v1459
        %1461 = vmatprep.subr.mxu0 0.0
        %1462 = vmatpush1.msra.mxu0 0.0
        %1463 = vmatprep.subr.mxu0 0.0
        %1464 = vmatpush1.msra.mxu0 0.0
        %1465 = vmatprep.subr.mxu0 0.0
        %1466 = vmatpush1.msra.mxu0 0.0
        %1467 = vmatprep.subr.mxu0 0.0
        %1468 = vmatpush1.msra.mxu0 0.0
        %1469 = vmatprep.subr.mxu0 0.0
        %1470 = vmatpush1.msra.mxu0 0.0
        %1471 = vmatprep.subr.mxu0 0.0
        %1472 = vmatpush1.msra.mxu0 0.0
        %1473 = vmatprep.subr.mxu0 0.0
        %1474 = vmatpush1.msra.mxu0 0.0
        %1475 = vmatprep.subr.mxu0 0.0
        %1476 = vmatpush1.msra.mxu0 0.0
        %1477 = vmatprep.subr.mxu0 0.0
        %1478 = vmatpush1.msra.mxu0 0.0
        %1479 = vmatprep.subr.mxu0 0.0
        %1480 = vmatpush1.msra.mxu0 0.0
        %1481 = vmatprep.subr.mxu0 0.0
        %1482 = vmatpush1.msra.mxu0 0.0
        %1483 = vmatprep.subr.mxu0 0.0
        %1484 = vmatpush1.msra.mxu0 0.0
        %1485 = vmatprep.subr.mxu0 0.0
        %1486 = vmatpush1.msra.mxu0 0.0
        %1487 = vmatprep.subr.mxu0 0.0
        %1488 = vmatpush1.msra.mxu0 0.0
        %1489 = vmatprep.subr.mxu0 0.0
        %1490 = vmatpush1.msra.mxu0 0.0
        %1491 = vmatprep.subr.mxu0 0.0
        %1492 = vmatpush1.msra.mxu0 0.0
        %1493 = vmatprep.subr.mxu0 0.0
        %1494 = vmatpush1.msra.mxu0 0.0
        %1495 = vmatprep.subr.mxu0 0.0
        %1496 = vmatpush1.msra.mxu0 0.0
        %1497 = vmatprep.subr.mxu0 0.0
        %1498 = vmatpush1.msra.mxu0 0.0
        %1499 = vmatprep.subr.mxu0 0.0
        %1500 = vmatpush1.msra.mxu0 0.0
        %1501 = vmatprep.subr.mxu0 0.0
        %1502 = vmatpush1.msra.mxu0 0.0
        %1503 = vmatprep.subr.mxu0 0.0
        %1504 = vmatpush1.msra.mxu0 0.0
        %1505 = vmatprep.subr.mxu0 0.0
        %1506 = vmatpush1.msra.mxu0 0.0
        %1507 = vmatprep.subr.mxu0 0.0
        %1508 = vmatpush1.msra.mxu0 0.0
        %1509 = vmatprep.subr.mxu0 0.0
        %1510 = vmatpush1.msra.mxu0 0.0
        %1511 = vmatprep.subr.mxu0 0.0
        %1512 = vmatpush1.msra.mxu0 0.0
        %1513 = vmatprep.subr.mxu0 0.0
        %1514 = vmatpush1.msra.mxu0 0.0
        %1515 = vmatprep.subr.mxu0 0.0
        %1516 = vmatpush1.msra.mxu0 0.0
        %1517 = vmatprep.subr.mxu0 0.0
        %1518 = vmatpush1.msra.mxu0 0.0
        %1519 = vmatprep.subr.mxu0 0.0
        %1520 = vmatpush1.msra.mxu0 0.0
        %1521 = vmatprep.subr.mxu0 0.0
        %1522 = vmatpush1.msra.mxu0 0.0
        %1523 = vmatprep.mubr.f32.mxu0 0.0
        %v1524 = vand.u32 %v1079, 4294901760
        %1525 = vmatmul.mubr.f32.gmra.mrb[0].mxu0 %v1524
        %v1526 = vpop.f32.mrb[0].mxu0
        %v1527 = vadd.f32 %v1455, %v1526
        %v1528 = vpop.f32.mrb[0].mxu0
        %1529 = vdwg.mxu0
        %v1530 = vadd.f32 %v1070, %v1527
        %v1531 = vlaneseq
        %v1532 = vshrl.u32 %v1531, 7
        %v1533 = vstv %s156
        %v1534 = vadd.s32 %v1533, %v1532
        %vm1535 = vcmp.lt.s32.totalorder %v1534, 18
        %v1536 = vsel %vm1535, 1, 0
        %vm1537 = vcmp.eq.s32.totalorder %v1536, 1
        %v1538 = vsel %vm1537, %v1530, 0.0
        %vm1539 = vcmask 64512
        %v1540 = vsel %vm1539, %v1538, 0.0
        %v1541 = vrot.slane %v1540, 4
        %v1542 = vadd.f32 %v1540, %v1541
        %v1543 = vrot.slane %v1542, 2
        %v1544 = vadd.f32 %v1542, %v1543
        %v1545 = vrot.slane %v1544, 1
        %v1546 = vadd.f32 %v1544, %v1545
        %vm1547 = vcmask 57344
        %1548 = vst.msk [vmem:[%s150] sm:$0x1] %vm1547, %v1546
        %v1549 = vmul.f32 %v1538, %v1538
        %v1550 = vsel %vm1539, %v1549, 0.0
        %v1551 = vrot.slane %v1550, 4
        %v1552 = vadd.f32 %v1550, %v1551
        %v1553 = vrot.slane %v1552, 2
        %v1554 = vadd.f32 %v1552, %v1553
        %v1555 = vrot.slane %v1554, 1
        %v1556 = vadd.f32 %v1554, %v1555
        %1557 = vst.msk [vmem:[%s150 + $0x1] sm:$0x1] %vm1547, %v1556
        %s1558 = sand.u32 %s85, 1
        %s1559 = scalar_lea.sflag [#allocation3], %s1558
        %s1560 = sand.u32 %s85, 1
        %s1561 = smul.addr %s1560, 2
        %s1562 = scalar_lea.vmem [#allocation2], %s1561
        // Predicated region
        $region29: #{tpu_custom_call.1} parent=27 // pred_check
          %p1563 = pneg %p95
        $region30: #{tpu_custom_call.1} parent=27 // pred_check_branch
          %1565 = sbr.rel (%p1563) target = $region32
        $region31: #{tpu_custom_call.1} parent=27 // pred_region
          %s1567 = ssub.s32 32, 32
          %1568 = vsyncadd %s1559, %s1567
          %s1569 = smul.addr %s20, 3
          %s1570 = sadd.s32 %s21, %s1569
          %s1571 = smul.addr %s1570, 32
          %s1572 = scalar_lea.hbm %s2, %s1571
          %s1574 = sshll.u32 %s1562, 4
          %s1575 = int_to_ptr.vmem [resolvable:$true] %s1574
          %1577 = dma.vmem_to_hbm [thread:$0]  %s1575, 32, %s1572, %s1559
        $region32: #{tpu_custom_call.1} parent=27 // pred_fallthru
          _
      $region28: #{tpu_custom_call.1} parent=5 // pred_fallthru
        _
      %p1578 = scmp.le.s32.totalorder 2, %s11
      // Predicated region
      $region33: #{tpu_custom_call.1} parent=5 // pred_check
        %p1579 = pneg %p1578
      $region34: #{tpu_custom_call.1} parent=5 // pred_check_branch
        %1581 = sbr.rel (%p1579) target = $region36
      $region35: #{tpu_custom_call.1} parent=5 // pred_region
        %s1582 = ssub.s32 %s11, 2
        // Predicated region
        $region37: #{tpu_custom_call.1} parent=35 // pred_check
          %p1583 = pneg %p101
        $region38: #{tpu_custom_call.1} parent=35 // pred_check_branch
          %1585 = sbr.rel (%p1583) target = $region40
        $region39: #{tpu_custom_call.1} parent=35 // pred_region
          %s1586 = sand.u32 %s86, 1
          %s1587 = scalar_lea.sflag [#allocation3], %s1586
          %s1588 = sand.u32 %s86, 1
          %s1589 = smul.addr %s1588, 2
          %s1590 = scalar_lea.vmem [#allocation2], %s1589
          %1591 = dma.done %s1587, 32
        $region40: #{tpu_custom_call.1} parent=35 // pred_fallthru
          _
      $region36: #{tpu_custom_call.1} parent=5 // pred_fallthru
        _
    $region6: #{tpu_custom_call.1} parent=1 // loop_footer
      %s15 = sadd.s32 1, %s11
    $region7: #{tpu_custom_call.1} parent=1 // loop_footer_branch
      %10 = sbr.rel target = $region3
    $region8: #{tpu_custom_call.1} parent=1 // loop_exit
      _
    %1592 = vsyncpa [#allocation3], 1
    %s1593 = scalar_lea.sflag [#allocation3], 1
    %1594 = vsyncpa %s1593, 1

</llo_original>
